<compile_context>
chip_gen: v7x
topology: tpu7x:2x2x1
jax: 0.10.0
libtpu: 0.0.40
codegen_flags: <defaults>
</compile_context>

<pallas_src>
import functools

import jax
import jax.numpy as jnp
from jax.experimental import pallas as pl
from jax.experimental.pallas import tpu as pltpu


_VMEM = pl.BlockSpec(memory_space=pltpu.MemorySpace.VMEM)
_SMEM = pl.BlockSpec(memory_space=pltpu.MemorySpace.SMEM)

_TAPS = ((0, 0), (0, 1), (1, 0), (1, 1))   # 2x2 kernel taps, index = dh*2 + dw


def _adaptive_windows(in_size, out_size):
    # PyTorch AdaptiveMaxPool2d: start = floor(i*in/out), end = ceil((i+1)*in/out)
    return [(i * in_size // out_size, -(-((i + 1) * in_size) // out_size))
            for i in range(out_size)]


# ---------------- fused forward kernel ----------------
def make_fused_kernel(num_layers, hidden, pool_size, output_dim):
    P = pool_size
    H = hidden
    O = output_dim

    def kernel(*refs):
        x_ref, w1_ref, b1_ref, w2_ref, b2_ref = refs[:5]
        layer_refs = refs[5:5 + 3 * num_layers]
        wlin_ref = refs[5 + 3 * num_layers]
        blin_ref = refs[5 + 3 * num_layers + 1]
        o_ref = refs[5 + 3 * num_layers + 2]

        x = x_ref[...]                                   # (B, T, F) single channel
        B, T, F = x.shape
        C1 = w1_ref.shape[0]
        C2 = w2_ref.shape[0]
        Ho1, Wo1 = T - 1, F - 1
        Ho2, Wo2 = Ho1 - 1, Wo1 - 1

        # ---- conv1 (2x2 VALID, Cin=1) + ReLU: shift-and-add, scalar weights from SMEM
        xs4 = [x[:, dh:dh + Ho1, dw:dw + Wo1] for (dh, dw) in _TAPS]
        a1 = []
        for co in range(C1):
            acc = xs4[0] * w1_ref[co, 0]
            for k in range(1, 4):
                acc = acc + xs4[k] * w1_ref[co, k]
            a1.append(jnp.maximum(acc + b1_ref[0, co], 0.0))   # (B, Ho1, Wo1)

        # ---- conv2 (2x2 VALID) + ReLU
        a2 = []
        for co in range(C2):
            acc = None
            for ci in range(C1):
                aci = a1[ci]
                for k, (dh, dw) in enumerate(_TAPS):
                    term = aci[:, dh:dh + Ho2, dw:dw + Wo2] * w2_ref[co, ci * 4 + k]
                    acc = term if acc is None else acc + term
            a2.append(jnp.maximum(acc + b2_ref[0, co], 0.0))   # (B, Ho2, Wo2)

        # ---- adaptive max pool to (P, P); keep per-(channel, row) (B, P) slabs
        hw = _adaptive_windows(Ho2, P)
        ww = _adaptive_windows(Wo2, P)
        pooled_rows = []                                  # pooled_rows[c][h] -> (B, P)
        for ch in range(C2):
            per_h = []
            for (h0, h1) in hw:
                band = jnp.max(a2[ch][:, h0:h1, :], axis=1)            # (B, Wo2)
                cols = [jnp.max(band[:, w0:w1], axis=1, keepdims=True)
                        for (w0, w1) in ww]
                per_h.append(jnp.concatenate(cols, axis=1))            # (B, P)
            pooled_rows.append(per_h)

        # ---- torch .view(B, P, P*C) on the contiguous NCHW pooled tensor:
        # timestep t features = flat (c,h,w) indices [t*P*C, (t+1)*P*C), i.e.
        # rows r = t*C + k of the (C*P, P) per-batch matrix, (c, h) = (r//P, r%P).
        xs = []
        for t in range(P):
            pieces = []
            for k in range(C2):
                r = t * C2 + k
                pieces.append(pooled_rows[r // P][r % P])
            xs.append(jnp.concatenate(pieces, axis=1))                 # (B, P*C2)

        # ---- multi-layer LSTM with the input GEMM hoisted out of the time loop
        cur = xs
        for l in range(num_layers):
            wih = layer_refs[3 * l][...]                 # (D_l, 4H)
            whh = layer_refs[3 * l + 1][...]             # (H, 4H)
            bias = layer_refs[3 * l + 2][...]            # (1, 4H) = b_ih + b_hh
            x_full = jnp.concatenate(cur, axis=0)        # (P*B, D_l) time-major
            gx = jnp.dot(x_full, wih, preferred_element_type=jnp.float32) + bias
            h = None
            c = None
            nxt = []
            for t in range(P):
                g = gx[t * B:(t + 1) * B, :]
                if t > 0:                                # h == 0 at t == 0
                    g = g + jnp.dot(h, whh, preferred_element_type=jnp.float32)
                # full-width (B, 4H) nonlinearities (lane-dense), then lane-slice
                sig = 0.5 * (jnp.tanh(0.5 * g) + 1.0)    # sigmoid via EUP tanh
                tnh = jnp.tanh(g)
                i_g = sig[:, 0 * H:1 * H]
                f_g = sig[:, 1 * H:2 * H]
                o_g = sig[:, 3 * H:4 * H]
                g_g = tnh[:, 2 * H:3 * H]
                if t == 0:                               # c == 0 at t == 0
                    c = i_g * g_g
                else:
                    c = f_g * c + i_g * g_g
                h = o_g * jnp.tanh(c)
                nxt.append(h)
            cur = nxt
            # TODO(synk): nn.LSTM inter-layer dropout is train-only; omitted (eval semantics).

        # ---- final Linear, per timestep, lane-concatenated into one dense slab.
        # Row b, columns [t*O:(t+1)*O) = linear(h_t[b])  ->  free reshape to (B,P,O).
        wlin = wlin_ref[...]                              # (H, O)
        blin = blin_ref[...]                              # (1, O)
        ys = [jnp.dot(cur[t], wlin, preferred_element_type=jnp.float32) + blin
              for t in range(P)]                          # each (B, O)
        o_ref[...] = jnp.concatenate(ys, axis=1)          # single (B, P*O) store

    return kernel


# ---------------- parameter prep (one-time, kernel-ready layouts) ----------------
def prepare_params(params):
    c1w = params['conv1_w']
    c2w = params['conv2_w']
    assert c1w.shape[1] == 1, "forward() feeds a single channel via x.view(B,1,T,F)"
    prep = {
        'w1': c1w.reshape(c1w.shape[0], c1w.shape[1] * 4),          # (C1, 4)
        'b1': params['conv1_b'].reshape(1, -1),                      # (1, C1)
        'w2': c2w.reshape(c2w.shape[0], c2w.shape[1] * 4),          # (C2, C1*4)
        'b2': params['conv2_b'].reshape(1, -1),                      # (1, C2)
        'lstm': tuple((wih.T, whh.T, (bih + bhh).reshape(1, -1))
                      for (wih, whh, bih, bhh) in params['lstm']),
        'lin_w': params['lin_w'].T,                                  # (H, out)
        'lin_b': params['lin_b'].reshape(1, -1),                     # (1, out)
    }
    return prep


# ---------------- forward wrapper: one pallas_call, no activation glue ----------------
def cnn_lstm_forward(x, prep, *, pool_size, lstm_hidden, output_dim):
    B = x.shape[0]
    num_layers = len(prep['lstm'])

    args = [x, prep['w1'], prep['b1'], prep['w2'], prep['b2']]
    in_specs = [_VMEM, _SMEM, _SMEM, _SMEM, _SMEM]
    for (wih, whh, bias) in prep['lstm']:
        args.extend([wih, whh, bias])
        in_specs.extend([_VMEM, _VMEM, _VMEM])
    args.extend([prep['lin_w'], prep['lin_b']])
    in_specs.extend([_VMEM, _VMEM])

    out2d = pl.pallas_call(
        make_fused_kernel(num_layers, lstm_hidden, pool_size, output_dim),
        out_shape=jax.ShapeDtypeStruct((B, pool_size * output_dim), jnp.float32),
        in_specs=in_specs,
        out_specs=_VMEM,
    )(*args)
    # contiguous (metadata-only) reshape: row b, cols [t*O:(t+1)*O) -> out[b, t, :]
    return out2d.reshape(B, pool_size, output_dim)


# ---------------- deterministic parameter init (PyTorch conventions) ----------------
def init_params(key, input_channels, cnn_channels, lstm_hidden, lstm_layers,
                output_dim, pool_size):
    keys = jax.random.split(key, 6 + 4 * lstm_layers)
    ki = iter(keys)

    def unif(k, shape, fan_in):
        bound = 1.0 / (fan_in ** 0.5)
        return jax.random.uniform(k, shape, jnp.float32, -bound, bound)

    params = {}
    params['conv1_w'] = unif(next(ki), (cnn_channels, input_channels, 2, 2), input_channels * 4)
    params['conv1_b'] = unif(next(ki), (cnn_channels,), input_channels * 4)
    params['conv2_w'] = unif(next(ki), (cnn_channels, cnn_channels, 2, 2), cnn_channels * 4)
    params['conv2_b'] = unif(next(ki), (cnn_channels,), cnn_channels * 4)
    lstm = []
    in_size = pool_size * cnn_channels
    for l in range(lstm_layers):
        d = in_size if l == 0 else lstm_hidden
        wih = unif(next(ki), (4 * lstm_hidden, d), lstm_hidden)
        whh = unif(next(ki), (4 * lstm_hidden, lstm_hidden), lstm_hidden)
        bih = unif(next(ki), (4 * lstm_hidden,), lstm_hidden)
        bhh = unif(next(ki), (4 * lstm_hidden,), lstm_hidden)
        lstm.append((wih, whh, bih, bhh))
    params['lstm'] = lstm
    params['lin_w'] = unif(next(ki), (output_dim, lstm_hidden), lstm_hidden)
    params['lin_b'] = unif(next(ki), (output_dim,), lstm_hidden)
    return params


# ---------------- pure-JAX reference (numerical check) ----------------
def reference_forward(x, params, pool_size, lstm_layers):
    B, T, F = x.shape
    xi = x.reshape(B, 1, T, F)

    def conv(a, w, b):
        o = jax.lax.conv_general_dilated(a, w, (1, 1), 'VALID',
                                         dimension_numbers=('NCHW', 'OIHW', 'NCHW'))
        return jax.nn.relu(o + b[None, :, None, None])

    a = conv(conv(xi, params['conv1_w'], params['conv1_b']),
             params['conv2_w'], params['conv2_b'])
    Bc, C, Hh2, Ww2 = a.shape
    hw = _adaptive_windows(Hh2, pool_size)
    ww = _adaptive_windows(Ww2, pool_size)
    pooled = jnp.stack(
        [jnp.stack([jnp.max(a[:, :, h0:h1, w0:w1], axis=(2, 3)) for (w0, w1) in ww], axis=-1)
         for (h0, h1) in hw], axis=2)                    # (B, C, P, P)
    s = pooled.reshape(Bc, pool_size, pool_size * C)     # torch .view semantics
    for l in range(lstm_layers):
        wih, whh, bih, bhh = params['lstm'][l]
        Hh = whh.shape[1]
        h = jnp.zeros((Bc, Hh), jnp.float32)
        c = jnp.zeros((Bc, Hh), jnp.float32)
        outs = []
        for t in range(s.shape[1]):
            g = s[:, t, :] @ wih.T + h @ whh.T + bih + bhh
            i = jax.nn.sigmoid(g[:, :Hh]); f = jax.nn.sigmoid(g[:, Hh:2 * Hh])
            gg = jnp.tanh(g[:, 2 * Hh:3 * Hh]); o = jax.nn.sigmoid(g[:, 3 * Hh:])
            c = f * c + i * gg
            h = o * jnp.tanh(c)
            outs.append(h)
        s = jnp.stack(outs, axis=1)
    return s @ params['lin_w'].T + params['lin_b']


if __name__ == "__main__":
    # hyperparameters (small, consistent with the module's forward pass)
    input_channels = 1      # forward() forces one channel via x.view(B, 1, T, F)
    cnn_channels = 4
    lstm_hidden = 32
    lstm_layers = 2
    output_dim = 8
    pool_size = 4
    B, T, F = 2, 16, 16

    key = jax.random.PRNGKey(0)
    kx, kp = jax.random.split(key)
    x = jax.random.normal(kx, (B, T, F), jnp.float32)
    params = init_params(kp, input_channels, cnn_channels, lstm_hidden,
                         lstm_layers, output_dim, pool_size)
    prep = prepare_params(params)

    fwd = jax.jit(functools.partial(cnn_lstm_forward, pool_size=pool_size,
                                    lstm_hidden=lstm_hidden, output_dim=output_dim))
    out = jax.block_until_ready(fwd(x, prep))
    assert out.shape == (B, pool_size, output_dim), out.shape

    ref = jax.block_until_ready(reference_forward(x, params, pool_size, lstm_layers))
    assert float(jnp.max(jnp.abs(out - ref))) < 1e-4, float(jnp.max(jnp.abs(out - ref)))

    print("KERNEL_OK")
</pallas_src>

<mosaic_0001>
module attributes {stable_mosaic.version = 11 : i64} {
  func.func @kernel(%arg0: memref<2x16x16xf32, #tpu.memory_space<vmem>>, %arg1: memref<4x4xf32, #tpu.memory_space<smem>>, %arg2: memref<1x4xf32, #tpu.memory_space<smem>>, %arg3: memref<4x16xf32, #tpu.memory_space<smem>>, %arg4: memref<1x4xf32, #tpu.memory_space<smem>>, %arg5: memref<16x128xf32, #tpu.memory_space<vmem>>, %arg6: memref<32x128xf32, #tpu.memory_space<vmem>>, %arg7: memref<1x128xf32, #tpu.memory_space<vmem>>, %arg8: memref<32x128xf32, #tpu.memory_space<vmem>>, %arg9: memref<32x128xf32, #tpu.memory_space<vmem>>, %arg10: memref<1x128xf32, #tpu.memory_space<vmem>>, %arg11: memref<32x8xf32, #tpu.memory_space<vmem>>, %arg12: memref<1x8xf32, #tpu.memory_space<vmem>>, %arg13: memref<2x32xf32, #tpu.memory_space<vmem>>) attributes {dimension_semantics = [], scalar_prefetch = 0 : i64, scratch_operands = 0 : i64, tpu.core_type = #tpu.core_type<tc>} {
    %c0 = arith.constant 0 : index
    %c0_0 = arith.constant 0 : index
    %c0_1 = arith.constant 0 : index
    %0 = vector.load %arg0[%c0, %c0_0, %c0_1] : memref<2x16x16xf32, #tpu.memory_space<vmem>>, vector<2x16x16xf32>
    %1 = vector.extract_strided_slice %0 {offsets = [0, 0, 0], sizes = [2, 15, 15], strides = [1, 1, 1]} : vector<2x16x16xf32> to vector<2x15x15xf32>
    %2 = vector.extract_strided_slice %0 {offsets = [0, 0, 1], sizes = [2, 15, 15], strides = [1, 1, 1]} : vector<2x16x16xf32> to vector<2x15x15xf32>
    %3 = vector.extract_strided_slice %0 {offsets = [0, 1, 0], sizes = [2, 15, 15], strides = [1, 1, 1]} : vector<2x16x16xf32> to vector<2x15x15xf32>
    %4 = vector.extract_strided_slice %0 {offsets = [0, 1, 1], sizes = [2, 15, 15], strides = [1, 1, 1]} : vector<2x16x16xf32> to vector<2x15x15xf32>
    %c0_2 = arith.constant 0 : index
    %c0_3 = arith.constant 0 : index
    %5 = memref.load %arg1[%c0_2, %c0_3] : memref<4x4xf32, #tpu.memory_space<smem>>
    %6 = vector.broadcast %5 : f32 to vector<2x15x15xf32>
    %7 = arith.mulf %1, %6 : vector<2x15x15xf32>
    %c0_4 = arith.constant 0 : index
    %c1 = arith.constant 1 : index
    %8 = memref.load %arg1[%c0_4, %c1] : memref<4x4xf32, #tpu.memory_space<smem>>
    %9 = vector.broadcast %8 : f32 to vector<2x15x15xf32>
    %10 = arith.mulf %2, %9 : vector<2x15x15xf32>
    %11 = arith.addf %7, %10 : vector<2x15x15xf32>
    %c0_5 = arith.constant 0 : index
    %c2 = arith.constant 2 : index
    %12 = memref.load %arg1[%c0_5, %c2] : memref<4x4xf32, #tpu.memory_space<smem>>
    %13 = vector.broadcast %12 : f32 to vector<2x15x15xf32>
    %14 = arith.mulf %3, %13 : vector<2x15x15xf32>
    %15 = arith.addf %11, %14 : vector<2x15x15xf32>
    %c0_6 = arith.constant 0 : index
    %c3 = arith.constant 3 : index
    %16 = memref.load %arg1[%c0_6, %c3] : memref<4x4xf32, #tpu.memory_space<smem>>
    %17 = vector.broadcast %16 : f32 to vector<2x15x15xf32>
    %18 = arith.mulf %4, %17 : vector<2x15x15xf32>
    %19 = arith.addf %15, %18 : vector<2x15x15xf32>
    %c0_7 = arith.constant 0 : index
    %c0_8 = arith.constant 0 : index
    %20 = memref.load %arg2[%c0_7, %c0_8] : memref<1x4xf32, #tpu.memory_space<smem>>
    %21 = vector.broadcast %20 : f32 to vector<2x15x15xf32>
    %22 = arith.addf %19, %21 : vector<2x15x15xf32>
    %cst = arith.constant 0.000000e+00 : f32
    %23 = vector.broadcast %cst : f32 to vector<2x15x15xf32>
    %24 = arith.maximumf %22, %23 : vector<2x15x15xf32>
    %c1_9 = arith.constant 1 : index
    %c0_10 = arith.constant 0 : index
    %25 = memref.load %arg1[%c1_9, %c0_10] : memref<4x4xf32, #tpu.memory_space<smem>>
    %26 = vector.broadcast %25 : f32 to vector<2x15x15xf32>
    %27 = arith.mulf %1, %26 : vector<2x15x15xf32>
    %c1_11 = arith.constant 1 : index
    %c1_12 = arith.constant 1 : index
    %28 = memref.load %arg1[%c1_11, %c1_12] : memref<4x4xf32, #tpu.memory_space<smem>>
    %29 = vector.broadcast %28 : f32 to vector<2x15x15xf32>
    %30 = arith.mulf %2, %29 : vector<2x15x15xf32>
    %31 = arith.addf %27, %30 : vector<2x15x15xf32>
    %c1_13 = arith.constant 1 : index
    %c2_14 = arith.constant 2 : index
    %32 = memref.load %arg1[%c1_13, %c2_14] : memref<4x4xf32, #tpu.memory_space<smem>>
    %33 = vector.broadcast %32 : f32 to vector<2x15x15xf32>
    %34 = arith.mulf %3, %33 : vector<2x15x15xf32>
    %35 = arith.addf %31, %34 : vector<2x15x15xf32>
    %c1_15 = arith.constant 1 : index
    %c3_16 = arith.constant 3 : index
    %36 = memref.load %arg1[%c1_15, %c3_16] : memref<4x4xf32, #tpu.memory_space<smem>>
    %37 = vector.broadcast %36 : f32 to vector<2x15x15xf32>
    %38 = arith.mulf %4, %37 : vector<2x15x15xf32>
    %39 = arith.addf %35, %38 : vector<2x15x15xf32>
    %c0_17 = arith.constant 0 : index
    %c1_18 = arith.constant 1 : index
    %40 = memref.load %arg2[%c0_17, %c1_18] : memref<1x4xf32, #tpu.memory_space<smem>>
    %41 = vector.broadcast %40 : f32 to vector<2x15x15xf32>
    %42 = arith.addf %39, %41 : vector<2x15x15xf32>
    %cst_19 = arith.constant 0.000000e+00 : f32
    %43 = vector.broadcast %cst_19 : f32 to vector<2x15x15xf32>
    %44 = arith.maximumf %42, %43 : vector<2x15x15xf32>
    %c2_20 = arith.constant 2 : index
    %c0_21 = arith.constant 0 : index
    %45 = memref.load %arg1[%c2_20, %c0_21] : memref<4x4xf32, #tpu.memory_space<smem>>
    %46 = vector.broadcast %45 : f32 to vector<2x15x15xf32>
    %47 = arith.mulf %1, %46 : vector<2x15x15xf32>
    %c2_22 = arith.constant 2 : index
    %c1_23 = arith.constant 1 : index
    %48 = memref.load %arg1[%c2_22, %c1_23] : memref<4x4xf32, #tpu.memory_space<smem>>
    %49 = vector.broadcast %48 : f32 to vector<2x15x15xf32>
    %50 = arith.mulf %2, %49 : vector<2x15x15xf32>
    %51 = arith.addf %47, %50 : vector<2x15x15xf32>
    %c2_24 = arith.constant 2 : index
    %c2_25 = arith.constant 2 : index
    %52 = memref.load %arg1[%c2_24, %c2_25] : memref<4x4xf32, #tpu.memory_space<smem>>
    %53 = vector.broadcast %52 : f32 to vector<2x15x15xf32>
    %54 = arith.mulf %3, %53 : vector<2x15x15xf32>
    %55 = arith.addf %51, %54 : vector<2x15x15xf32>
    %c2_26 = arith.constant 2 : index
    %c3_27 = arith.constant 3 : index
    %56 = memref.load %arg1[%c2_26, %c3_27] : memref<4x4xf32, #tpu.memory_space<smem>>
    %57 = vector.broadcast %56 : f32 to vector<2x15x15xf32>
    %58 = arith.mulf %4, %57 : vector<2x15x15xf32>
    %59 = arith.addf %55, %58 : vector<2x15x15xf32>
    %c0_28 = arith.constant 0 : index
    %c2_29 = arith.constant 2 : index
    %60 = memref.load %arg2[%c0_28, %c2_29] : memref<1x4xf32, #tpu.memory_space<smem>>
    %61 = vector.broadcast %60 : f32 to vector<2x15x15xf32>
    %62 = arith.addf %59, %61 : vector<2x15x15xf32>
    %cst_30 = arith.constant 0.000000e+00 : f32
    %63 = vector.broadcast %cst_30 : f32 to vector<2x15x15xf32>
    %64 = arith.maximumf %62, %63 : vector<2x15x15xf32>
    %c3_31 = arith.constant 3 : index
    %c0_32 = arith.constant 0 : index
    %65 = memref.load %arg1[%c3_31, %c0_32] : memref<4x4xf32, #tpu.memory_space<smem>>
    %66 = vector.broadcast %65 : f32 to vector<2x15x15xf32>
    %67 = arith.mulf %1, %66 : vector<2x15x15xf32>
    %c3_33 = arith.constant 3 : index
    %c1_34 = arith.constant 1 : index
    %68 = memref.load %arg1[%c3_33, %c1_34] : memref<4x4xf32, #tpu.memory_space<smem>>
    %69 = vector.broadcast %68 : f32 to vector<2x15x15xf32>
    %70 = arith.mulf %2, %69 : vector<2x15x15xf32>
    %71 = arith.addf %67, %70 : vector<2x15x15xf32>
    %c3_35 = arith.constant 3 : index
    %c2_36 = arith.constant 2 : index
    %72 = memref.load %arg1[%c3_35, %c2_36] : memref<4x4xf32, #tpu.memory_space<smem>>
    %73 = vector.broadcast %72 : f32 to vector<2x15x15xf32>
    %74 = arith.mulf %3, %73 : vector<2x15x15xf32>
    %75 = arith.addf %71, %74 : vector<2x15x15xf32>
    %c3_37 = arith.constant 3 : index
    %c3_38 = arith.constant 3 : index
    %76 = memref.load %arg1[%c3_37, %c3_38] : memref<4x4xf32, #tpu.memory_space<smem>>
    %77 = vector.broadcast %76 : f32 to vector<2x15x15xf32>
    %78 = arith.mulf %4, %77 : vector<2x15x15xf32>
    %79 = arith.addf %75, %78 : vector<2x15x15xf32>
    %c0_39 = arith.constant 0 : index
    %c3_40 = arith.constant 3 : index
    %80 = memref.load %arg2[%c0_39, %c3_40] : memref<1x4xf32, #tpu.memory_space<smem>>
    %81 = vector.broadcast %80 : f32 to vector<2x15x15xf32>
    %82 = arith.addf %79, %81 : vector<2x15x15xf32>
    %cst_41 = arith.constant 0.000000e+00 : f32
    %83 = vector.broadcast %cst_41 : f32 to vector<2x15x15xf32>
    %84 = arith.maximumf %82, %83 : vector<2x15x15xf32>
    %85 = vector.extract_strided_slice %24 {offsets = [0, 0, 0], sizes = [2, 14, 14], strides = [1, 1, 1]} : vector<2x15x15xf32> to vector<2x14x14xf32>
    %c0_42 = arith.constant 0 : index
    %c0_43 = arith.constant 0 : index
    %86 = memref.load %arg3[%c0_42, %c0_43] : memref<4x16xf32, #tpu.memory_space<smem>>
    %87 = vector.broadcast %86 : f32 to vector<2x14x14xf32>
    %88 = arith.mulf %85, %87 : vector<2x14x14xf32>
    %89 = vector.extract_strided_slice %24 {offsets = [0, 0, 1], sizes = [2, 14, 14], strides = [1, 1, 1]} : vector<2x15x15xf32> to vector<2x14x14xf32>
    %c0_44 = arith.constant 0 : index
    %c1_45 = arith.constant 1 : index
    %90 = memref.load %arg3[%c0_44, %c1_45] : memref<4x16xf32, #tpu.memory_space<smem>>
    %91 = vector.broadcast %90 : f32 to vector<2x14x14xf32>
    %92 = arith.mulf %89, %91 : vector<2x14x14xf32>
    %93 = arith.addf %88, %92 : vector<2x14x14xf32>
    %94 = vector.extract_strided_slice %24 {offsets = [0, 1, 0], sizes = [2, 14, 14], strides = [1, 1, 1]} : vector<2x15x15xf32> to vector<2x14x14xf32>
    %c0_46 = arith.constant 0 : index
    %c2_47 = arith.constant 2 : index
    %95 = memref.load %arg3[%c0_46, %c2_47] : memref<4x16xf32, #tpu.memory_space<smem>>
    %96 = vector.broadcast %95 : f32 to vector<2x14x14xf32>
    %97 = arith.mulf %94, %96 : vector<2x14x14xf32>
    %98 = arith.addf %93, %97 : vector<2x14x14xf32>
    %99 = vector.extract_strided_slice %24 {offsets = [0, 1, 1], sizes = [2, 14, 14], strides = [1, 1, 1]} : vector<2x15x15xf32> to vector<2x14x14xf32>
    %c0_48 = arith.constant 0 : index
    %c3_49 = arith.constant 3 : index
    %100 = memref.load %arg3[%c0_48, %c3_49] : memref<4x16xf32, #tpu.memory_space<smem>>
    %101 = vector.broadcast %100 : f32 to vector<2x14x14xf32>
    %102 = arith.mulf %99, %101 : vector<2x14x14xf32>
    %103 = arith.addf %98, %102 : vector<2x14x14xf32>
    %104 = vector.extract_strided_slice %44 {offsets = [0, 0, 0], sizes = [2, 14, 14], strides = [1, 1, 1]} : vector<2x15x15xf32> to vector<2x14x14xf32>
    %c0_50 = arith.constant 0 : index
    %c4 = arith.constant 4 : index
    %105 = memref.load %arg3[%c0_50, %c4] : memref<4x16xf32, #tpu.memory_space<smem>>
    %106 = vector.broadcast %105 : f32 to vector<2x14x14xf32>
    %107 = arith.mulf %104, %106 : vector<2x14x14xf32>
    %108 = arith.addf %103, %107 : vector<2x14x14xf32>
    %109 = vector.extract_strided_slice %44 {offsets = [0, 0, 1], sizes = [2, 14, 14], strides = [1, 1, 1]} : vector<2x15x15xf32> to vector<2x14x14xf32>
    %c0_51 = arith.constant 0 : index
    %c5 = arith.constant 5 : index
    %110 = memref.load %arg3[%c0_51, %c5] : memref<4x16xf32, #tpu.memory_space<smem>>
    %111 = vector.broadcast %110 : f32 to vector<2x14x14xf32>
    %112 = arith.mulf %109, %111 : vector<2x14x14xf32>
    %113 = arith.addf %108, %112 : vector<2x14x14xf32>
    %114 = vector.extract_strided_slice %44 {offsets = [0, 1, 0], sizes = [2, 14, 14], strides = [1, 1, 1]} : vector<2x15x15xf32> to vector<2x14x14xf32>
    %c0_52 = arith.constant 0 : index
    %c6 = arith.constant 6 : index
    %115 = memref.load %arg3[%c0_52, %c6] : memref<4x16xf32, #tpu.memory_space<smem>>
    %116 = vector.broadcast %115 : f32 to vector<2x14x14xf32>
    %117 = arith.mulf %114, %116 : vector<2x14x14xf32>
    %118 = arith.addf %113, %117 : vector<2x14x14xf32>
    %119 = vector.extract_strided_slice %44 {offsets = [0, 1, 1], sizes = [2, 14, 14], strides = [1, 1, 1]} : vector<2x15x15xf32> to vector<2x14x14xf32>
    %c0_53 = arith.constant 0 : index
    %c7 = arith.constant 7 : index
    %120 = memref.load %arg3[%c0_53, %c7] : memref<4x16xf32, #tpu.memory_space<smem>>
    %121 = vector.broadcast %120 : f32 to vector<2x14x14xf32>
    %122 = arith.mulf %119, %121 : vector<2x14x14xf32>
    %123 = arith.addf %118, %122 : vector<2x14x14xf32>
    %124 = vector.extract_strided_slice %64 {offsets = [0, 0, 0], sizes = [2, 14, 14], strides = [1, 1, 1]} : vector<2x15x15xf32> to vector<2x14x14xf32>
    %c0_54 = arith.constant 0 : index
    %c8 = arith.constant 8 : index
    %125 = memref.load %arg3[%c0_54, %c8] : memref<4x16xf32, #tpu.memory_space<smem>>
    %126 = vector.broadcast %125 : f32 to vector<2x14x14xf32>
    %127 = arith.mulf %124, %126 : vector<2x14x14xf32>
    %128 = arith.addf %123, %127 : vector<2x14x14xf32>
    %129 = vector.extract_strided_slice %64 {offsets = [0, 0, 1], sizes = [2, 14, 14], strides = [1, 1, 1]} : vector<2x15x15xf32> to vector<2x14x14xf32>
    %c0_55 = arith.constant 0 : index
    %c9 = arith.constant 9 : index
    %130 = memref.load %arg3[%c0_55, %c9] : memref<4x16xf32, #tpu.memory_space<smem>>
    %131 = vector.broadcast %130 : f32 to vector<2x14x14xf32>
    %132 = arith.mulf %129, %131 : vector<2x14x14xf32>
    %133 = arith.addf %128, %132 : vector<2x14x14xf32>
    %134 = vector.extract_strided_slice %64 {offsets = [0, 1, 0], sizes = [2, 14, 14], strides = [1, 1, 1]} : vector<2x15x15xf32> to vector<2x14x14xf32>
    %c0_56 = arith.constant 0 : index
    %c10 = arith.constant 10 : index
    %135 = memref.load %arg3[%c0_56, %c10] : memref<4x16xf32, #tpu.memory_space<smem>>
    %136 = vector.broadcast %135 : f32 to vector<2x14x14xf32>
    %137 = arith.mulf %134, %136 : vector<2x14x14xf32>
    %138 = arith.addf %133, %137 : vector<2x14x14xf32>
    %139 = vector.extract_strided_slice %64 {offsets = [0, 1, 1], sizes = [2, 14, 14], strides = [1, 1, 1]} : vector<2x15x15xf32> to vector<2x14x14xf32>
    %c0_57 = arith.constant 0 : index
    %c11 = arith.constant 11 : index
    %140 = memref.load %arg3[%c0_57, %c11] : memref<4x16xf32, #tpu.memory_space<smem>>
    %141 = vector.broadcast %140 : f32 to vector<2x14x14xf32>
    %142 = arith.mulf %139, %141 : vector<2x14x14xf32>
    %143 = arith.addf %138, %142 : vector<2x14x14xf32>
    %144 = vector.extract_strided_slice %84 {offsets = [0, 0, 0], sizes = [2, 14, 14], strides = [1, 1, 1]} : vector<2x15x15xf32> to vector<2x14x14xf32>
    %c0_58 = arith.constant 0 : index
    %c12 = arith.constant 12 : index
    %145 = memref.load %arg3[%c0_58, %c12] : memref<4x16xf32, #tpu.memory_space<smem>>
    %146 = vector.broadcast %145 : f32 to vector<2x14x14xf32>
    %147 = arith.mulf %144, %146 : vector<2x14x14xf32>
    %148 = arith.addf %143, %147 : vector<2x14x14xf32>
    %149 = vector.extract_strided_slice %84 {offsets = [0, 0, 1], sizes = [2, 14, 14], strides = [1, 1, 1]} : vector<2x15x15xf32> to vector<2x14x14xf32>
    %c0_59 = arith.constant 0 : index
    %c13 = arith.constant 13 : index
    %150 = memref.load %arg3[%c0_59, %c13] : memref<4x16xf32, #tpu.memory_space<smem>>
    %151 = vector.broadcast %150 : f32 to vector<2x14x14xf32>
    %152 = arith.mulf %149, %151 : vector<2x14x14xf32>
    %153 = arith.addf %148, %152 : vector<2x14x14xf32>
    %154 = vector.extract_strided_slice %84 {offsets = [0, 1, 0], sizes = [2, 14, 14], strides = [1, 1, 1]} : vector<2x15x15xf32> to vector<2x14x14xf32>
    %c0_60 = arith.constant 0 : index
    %c14 = arith.constant 14 : index
    %155 = memref.load %arg3[%c0_60, %c14] : memref<4x16xf32, #tpu.memory_space<smem>>
    %156 = vector.broadcast %155 : f32 to vector<2x14x14xf32>
    %157 = arith.mulf %154, %156 : vector<2x14x14xf32>
    %158 = arith.addf %153, %157 : vector<2x14x14xf32>
    %159 = vector.extract_strided_slice %84 {offsets = [0, 1, 1], sizes = [2, 14, 14], strides = [1, 1, 1]} : vector<2x15x15xf32> to vector<2x14x14xf32>
    %c0_61 = arith.constant 0 : index
    %c15 = arith.constant 15 : index
    %160 = memref.load %arg3[%c0_61, %c15] : memref<4x16xf32, #tpu.memory_space<smem>>
    %161 = vector.broadcast %160 : f32 to vector<2x14x14xf32>
    %162 = arith.mulf %159, %161 : vector<2x14x14xf32>
    %163 = arith.addf %158, %162 : vector<2x14x14xf32>
    %c0_62 = arith.constant 0 : index
    %c0_63 = arith.constant 0 : index
    %164 = memref.load %arg4[%c0_62, %c0_63] : memref<1x4xf32, #tpu.memory_space<smem>>
    %165 = vector.broadcast %164 : f32 to vector<2x14x14xf32>
    %166 = arith.addf %163, %165 : vector<2x14x14xf32>
    %cst_64 = arith.constant 0.000000e+00 : f32
    %167 = vector.broadcast %cst_64 : f32 to vector<2x14x14xf32>
    %168 = arith.maximumf %166, %167 : vector<2x14x14xf32>
    %169 = vector.extract_strided_slice %24 {offsets = [0, 0, 0], sizes = [2, 14, 14], strides = [1, 1, 1]} : vector<2x15x15xf32> to vector<2x14x14xf32>
    %c1_65 = arith.constant 1 : index
    %c0_66 = arith.constant 0 : index
    %170 = memref.load %arg3[%c1_65, %c0_66] : memref<4x16xf32, #tpu.memory_space<smem>>
    %171 = vector.broadcast %170 : f32 to vector<2x14x14xf32>
    %172 = arith.mulf %169, %171 : vector<2x14x14xf32>
    %173 = vector.extract_strided_slice %24 {offsets = [0, 0, 1], sizes = [2, 14, 14], strides = [1, 1, 1]} : vector<2x15x15xf32> to vector<2x14x14xf32>
    %c1_67 = arith.constant 1 : index
    %c1_68 = arith.constant 1 : index
    %174 = memref.load %arg3[%c1_67, %c1_68] : memref<4x16xf32, #tpu.memory_space<smem>>
    %175 = vector.broadcast %174 : f32 to vector<2x14x14xf32>
    %176 = arith.mulf %173, %175 : vector<2x14x14xf32>
    %177 = arith.addf %172, %176 : vector<2x14x14xf32>
    %178 = vector.extract_strided_slice %24 {offsets = [0, 1, 0], sizes = [2, 14, 14], strides = [1, 1, 1]} : vector<2x15x15xf32> to vector<2x14x14xf32>
    %c1_69 = arith.constant 1 : index
    %c2_70 = arith.constant 2 : index
    %179 = memref.load %arg3[%c1_69, %c2_70] : memref<4x16xf32, #tpu.memory_space<smem>>
    %180 = vector.broadcast %179 : f32 to vector<2x14x14xf32>
    %181 = arith.mulf %178, %180 : vector<2x14x14xf32>
    %182 = arith.addf %177, %181 : vector<2x14x14xf32>
    %183 = vector.extract_strided_slice %24 {offsets = [0, 1, 1], sizes = [2, 14, 14], strides = [1, 1, 1]} : vector<2x15x15xf32> to vector<2x14x14xf32>
    %c1_71 = arith.constant 1 : index
    %c3_72 = arith.constant 3 : index
    %184 = memref.load %arg3[%c1_71, %c3_72] : memref<4x16xf32, #tpu.memory_space<smem>>
    %185 = vector.broadcast %184 : f32 to vector<2x14x14xf32>
    %186 = arith.mulf %183, %185 : vector<2x14x14xf32>
    %187 = arith.addf %182, %186 : vector<2x14x14xf32>
    %188 = vector.extract_strided_slice %44 {offsets = [0, 0, 0], sizes = [2, 14, 14], strides = [1, 1, 1]} : vector<2x15x15xf32> to vector<2x14x14xf32>
    %c1_73 = arith.constant 1 : index
    %c4_74 = arith.constant 4 : index
    %189 = memref.load %arg3[%c1_73, %c4_74] : memref<4x16xf32, #tpu.memory_space<smem>>
    %190 = vector.broadcast %189 : f32 to vector<2x14x14xf32>
    %191 = arith.mulf %188, %190 : vector<2x14x14xf32>
    %192 = arith.addf %187, %191 : vector<2x14x14xf32>
    %193 = vector.extract_strided_slice %44 {offsets = [0, 0, 1], sizes = [2, 14, 14], strides = [1, 1, 1]} : vector<2x15x15xf32> to vector<2x14x14xf32>
    %c1_75 = arith.constant 1 : index
    %c5_76 = arith.constant 5 : index
    %194 = memref.load %arg3[%c1_75, %c5_76] : memref<4x16xf32, #tpu.memory_space<smem>>
    %195 = vector.broadcast %194 : f32 to vector<2x14x14xf32>
    %196 = arith.mulf %193, %195 : vector<2x14x14xf32>
    %197 = arith.addf %192, %196 : vector<2x14x14xf32>
    %198 = vector.extract_strided_slice %44 {offsets = [0, 1, 0], sizes = [2, 14, 14], strides = [1, 1, 1]} : vector<2x15x15xf32> to vector<2x14x14xf32>
    %c1_77 = arith.constant 1 : index
    %c6_78 = arith.constant 6 : index
    %199 = memref.load %arg3[%c1_77, %c6_78] : memref<4x16xf32, #tpu.memory_space<smem>>
    %200 = vector.broadcast %199 : f32 to vector<2x14x14xf32>
    %201 = arith.mulf %198, %200 : vector<2x14x14xf32>
    %202 = arith.addf %197, %201 : vector<2x14x14xf32>
    %203 = vector.extract_strided_slice %44 {offsets = [0, 1, 1], sizes = [2, 14, 14], strides = [1, 1, 1]} : vector<2x15x15xf32> to vector<2x14x14xf32>
    %c1_79 = arith.constant 1 : index
    %c7_80 = arith.constant 7 : index
    %204 = memref.load %arg3[%c1_79, %c7_80] : memref<4x16xf32, #tpu.memory_space<smem>>
    %205 = vector.broadcast %204 : f32 to vector<2x14x14xf32>
    %206 = arith.mulf %203, %205 : vector<2x14x14xf32>
    %207 = arith.addf %202, %206 : vector<2x14x14xf32>
    %208 = vector.extract_strided_slice %64 {offsets = [0, 0, 0], sizes = [2, 14, 14], strides = [1, 1, 1]} : vector<2x15x15xf32> to vector<2x14x14xf32>
    %c1_81 = arith.constant 1 : index
    %c8_82 = arith.constant 8 : index
    %209 = memref.load %arg3[%c1_81, %c8_82] : memref<4x16xf32, #tpu.memory_space<smem>>
    %210 = vector.broadcast %209 : f32 to vector<2x14x14xf32>
    %211 = arith.mulf %208, %210 : vector<2x14x14xf32>
    %212 = arith.addf %207, %211 : vector<2x14x14xf32>
    %213 = vector.extract_strided_slice %64 {offsets = [0, 0, 1], sizes = [2, 14, 14], strides = [1, 1, 1]} : vector<2x15x15xf32> to vector<2x14x14xf32>
    %c1_83 = arith.constant 1 : index
    %c9_84 = arith.constant 9 : index
    %214 = memref.load %arg3[%c1_83, %c9_84] : memref<4x16xf32, #tpu.memory_space<smem>>
    %215 = vector.broadcast %214 : f32 to vector<2x14x14xf32>
    %216 = arith.mulf %213, %215 : vector<2x14x14xf32>
    %217 = arith.addf %212, %216 : vector<2x14x14xf32>
    %218 = vector.extract_strided_slice %64 {offsets = [0, 1, 0], sizes = [2, 14, 14], strides = [1, 1, 1]} : vector<2x15x15xf32> to vector<2x14x14xf32>
    %c1_85 = arith.constant 1 : index
    %c10_86 = arith.constant 10 : index
    %219 = memref.load %arg3[%c1_85, %c10_86] : memref<4x16xf32, #tpu.memory_space<smem>>
    %220 = vector.broadcast %219 : f32 to vector<2x14x14xf32>
    %221 = arith.mulf %218, %220 : vector<2x14x14xf32>
    %222 = arith.addf %217, %221 : vector<2x14x14xf32>
    %223 = vector.extract_strided_slice %64 {offsets = [0, 1, 1], sizes = [2, 14, 14], strides = [1, 1, 1]} : vector<2x15x15xf32> to vector<2x14x14xf32>
    %c1_87 = arith.constant 1 : index
    %c11_88 = arith.constant 11 : index
    %224 = memref.load %arg3[%c1_87, %c11_88] : memref<4x16xf32, #tpu.memory_space<smem>>
    %225 = vector.broadcast %224 : f32 to vector<2x14x14xf32>
    %226 = arith.mulf %223, %225 : vector<2x14x14xf32>
    %227 = arith.addf %222, %226 : vector<2x14x14xf32>
    %228 = vector.extract_strided_slice %84 {offsets = [0, 0, 0], sizes = [2, 14, 14], strides = [1, 1, 1]} : vector<2x15x15xf32> to vector<2x14x14xf32>
    %c1_89 = arith.constant 1 : index
    %c12_90 = arith.constant 12 : index
    %229 = memref.load %arg3[%c1_89, %c12_90] : memref<4x16xf32, #tpu.memory_space<smem>>
    %230 = vector.broadcast %229 : f32 to vector<2x14x14xf32>
    %231 = arith.mulf %228, %230 : vector<2x14x14xf32>
    %232 = arith.addf %227, %231 : vector<2x14x14xf32>
    %233 = vector.extract_strided_slice %84 {offsets = [0, 0, 1], sizes = [2, 14, 14], strides = [1, 1, 1]} : vector<2x15x15xf32> to vector<2x14x14xf32>
    %c1_91 = arith.constant 1 : index
    %c13_92 = arith.constant 13 : index
    %234 = memref.load %arg3[%c1_91, %c13_92] : memref<4x16xf32, #tpu.memory_space<smem>>
    %235 = vector.broadcast %234 : f32 to vector<2x14x14xf32>
    %236 = arith.mulf %233, %235 : vector<2x14x14xf32>
    %237 = arith.addf %232, %236 : vector<2x14x14xf32>
    %238 = vector.extract_strided_slice %84 {offsets = [0, 1, 0], sizes = [2, 14, 14], strides = [1, 1, 1]} : vector<2x15x15xf32> to vector<2x14x14xf32>
    %c1_93 = arith.constant 1 : index
    %c14_94 = arith.constant 14 : index
    %239 = memref.load %arg3[%c1_93, %c14_94] : memref<4x16xf32, #tpu.memory_space<smem>>
    %240 = vector.broadcast %239 : f32 to vector<2x14x14xf32>
    %241 = arith.mulf %238, %240 : vector<2x14x14xf32>
    %242 = arith.addf %237, %241 : vector<2x14x14xf32>
    %243 = vector.extract_strided_slice %84 {offsets = [0, 1, 1], sizes = [2, 14, 14], strides = [1, 1, 1]} : vector<2x15x15xf32> to vector<2x14x14xf32>
    %c1_95 = arith.constant 1 : index
    %c15_96 = arith.constant 15 : index
    %244 = memref.load %arg3[%c1_95, %c15_96] : memref<4x16xf32, #tpu.memory_space<smem>>
    %245 = vector.broadcast %244 : f32 to vector<2x14x14xf32>
    %246 = arith.mulf %243, %245 : vector<2x14x14xf32>
    %247 = arith.addf %242, %246 : vector<2x14x14xf32>
    %c0_97 = arith.constant 0 : index
    %c1_98 = arith.constant 1 : index
    %248 = memref.load %arg4[%c0_97, %c1_98] : memref<1x4xf32, #tpu.memory_space<smem>>
    %249 = vector.broadcast %248 : f32 to vector<2x14x14xf32>
    %250 = arith.addf %247, %249 : vector<2x14x14xf32>
    %cst_99 = arith.constant 0.000000e+00 : f32
    %251 = vector.broadcast %cst_99 : f32 to vector<2x14x14xf32>
    %252 = arith.maximumf %250, %251 : vector<2x14x14xf32>
    %253 = vector.extract_strided_slice %24 {offsets = [0, 0, 0], sizes = [2, 14, 14], strides = [1, 1, 1]} : vector<2x15x15xf32> to vector<2x14x14xf32>
    %c2_100 = arith.constant 2 : index
    %c0_101 = arith.constant 0 : index
    %254 = memref.load %arg3[%c2_100, %c0_101] : memref<4x16xf32, #tpu.memory_space<smem>>
    %255 = vector.broadcast %254 : f32 to vector<2x14x14xf32>
    %256 = arith.mulf %253, %255 : vector<2x14x14xf32>
    %257 = vector.extract_strided_slice %24 {offsets = [0, 0, 1], sizes = [2, 14, 14], strides = [1, 1, 1]} : vector<2x15x15xf32> to vector<2x14x14xf32>
    %c2_102 = arith.constant 2 : index
    %c1_103 = arith.constant 1 : index
    %258 = memref.load %arg3[%c2_102, %c1_103] : memref<4x16xf32, #tpu.memory_space<smem>>
    %259 = vector.broadcast %258 : f32 to vector<2x14x14xf32>
    %260 = arith.mulf %257, %259 : vector<2x14x14xf32>
    %261 = arith.addf %256, %260 : vector<2x14x14xf32>
    %262 = vector.extract_strided_slice %24 {offsets = [0, 1, 0], sizes = [2, 14, 14], strides = [1, 1, 1]} : vector<2x15x15xf32> to vector<2x14x14xf32>
    %c2_104 = arith.constant 2 : index
    %c2_105 = arith.constant 2 : index
    %263 = memref.load %arg3[%c2_104, %c2_105] : memref<4x16xf32, #tpu.memory_space<smem>>
    %264 = vector.broadcast %263 : f32 to vector<2x14x14xf32>
    %265 = arith.mulf %262, %264 : vector<2x14x14xf32>
    %266 = arith.addf %261, %265 : vector<2x14x14xf32>
    %267 = vector.extract_strided_slice %24 {offsets = [0, 1, 1], sizes = [2, 14, 14], strides = [1, 1, 1]} : vector<2x15x15xf32> to vector<2x14x14xf32>
    %c2_106 = arith.constant 2 : index
    %c3_107 = arith.constant 3 : index
    %268 = memref.load %arg3[%c2_106, %c3_107] : memref<4x16xf32, #tpu.memory_space<smem>>
    %269 = vector.broadcast %268 : f32 to vector<2x14x14xf32>
    %270 = arith.mulf %267, %269 : vector<2x14x14xf32>
    %271 = arith.addf %266, %270 : vector<2x14x14xf32>
    %272 = vector.extract_strided_slice %44 {offsets = [0, 0, 0], sizes = [2, 14, 14], strides = [1, 1, 1]} : vector<2x15x15xf32> to vector<2x14x14xf32>
    %c2_108 = arith.constant 2 : index
    %c4_109 = arith.constant 4 : index
    %273 = memref.load %arg3[%c2_108, %c4_109] : memref<4x16xf32, #tpu.memory_space<smem>>
    %274 = vector.broadcast %273 : f32 to vector<2x14x14xf32>
    %275 = arith.mulf %272, %274 : vector<2x14x14xf32>
    %276 = arith.addf %271, %275 : vector<2x14x14xf32>
    %277 = vector.extract_strided_slice %44 {offsets = [0, 0, 1], sizes = [2, 14, 14], strides = [1, 1, 1]} : vector<2x15x15xf32> to vector<2x14x14xf32>
    %c2_110 = arith.constant 2 : index
    %c5_111 = arith.constant 5 : index
    %278 = memref.load %arg3[%c2_110, %c5_111] : memref<4x16xf32, #tpu.memory_space<smem>>
    %279 = vector.broadcast %278 : f32 to vector<2x14x14xf32>
    %280 = arith.mulf %277, %279 : vector<2x14x14xf32>
    %281 = arith.addf %276, %280 : vector<2x14x14xf32>
    %282 = vector.extract_strided_slice %44 {offsets = [0, 1, 0], sizes = [2, 14, 14], strides = [1, 1, 1]} : vector<2x15x15xf32> to vector<2x14x14xf32>
    %c2_112 = arith.constant 2 : index
    %c6_113 = arith.constant 6 : index
    %283 = memref.load %arg3[%c2_112, %c6_113] : memref<4x16xf32, #tpu.memory_space<smem>>
    %284 = vector.broadcast %283 : f32 to vector<2x14x14xf32>
    %285 = arith.mulf %282, %284 : vector<2x14x14xf32>
    %286 = arith.addf %281, %285 : vector<2x14x14xf32>
    %287 = vector.extract_strided_slice %44 {offsets = [0, 1, 1], sizes = [2, 14, 14], strides = [1, 1, 1]} : vector<2x15x15xf32> to vector<2x14x14xf32>
    %c2_114 = arith.constant 2 : index
    %c7_115 = arith.constant 7 : index
    %288 = memref.load %arg3[%c2_114, %c7_115] : memref<4x16xf32, #tpu.memory_space<smem>>
    %289 = vector.broadcast %288 : f32 to vector<2x14x14xf32>
    %290 = arith.mulf %287, %289 : vector<2x14x14xf32>
    %291 = arith.addf %286, %290 : vector<2x14x14xf32>
    %292 = vector.extract_strided_slice %64 {offsets = [0, 0, 0], sizes = [2, 14, 14], strides = [1, 1, 1]} : vector<2x15x15xf32> to vector<2x14x14xf32>
    %c2_116 = arith.constant 2 : index
    %c8_117 = arith.constant 8 : index
    %293 = memref.load %arg3[%c2_116, %c8_117] : memref<4x16xf32, #tpu.memory_space<smem>>
    %294 = vector.broadcast %293 : f32 to vector<2x14x14xf32>
    %295 = arith.mulf %292, %294 : vector<2x14x14xf32>
    %296 = arith.addf %291, %295 : vector<2x14x14xf32>
    %297 = vector.extract_strided_slice %64 {offsets = [0, 0, 1], sizes = [2, 14, 14], strides = [1, 1, 1]} : vector<2x15x15xf32> to vector<2x14x14xf32>
    %c2_118 = arith.constant 2 : index
    %c9_119 = arith.constant 9 : index
    %298 = memref.load %arg3[%c2_118, %c9_119] : memref<4x16xf32, #tpu.memory_space<smem>>
    %299 = vector.broadcast %298 : f32 to vector<2x14x14xf32>
    %300 = arith.mulf %297, %299 : vector<2x14x14xf32>
    %301 = arith.addf %296, %300 : vector<2x14x14xf32>
    %302 = vector.extract_strided_slice %64 {offsets = [0, 1, 0], sizes = [2, 14, 14], strides = [1, 1, 1]} : vector<2x15x15xf32> to vector<2x14x14xf32>
    %c2_120 = arith.constant 2 : index
    %c10_121 = arith.constant 10 : index
    %303 = memref.load %arg3[%c2_120, %c10_121] : memref<4x16xf32, #tpu.memory_space<smem>>
    %304 = vector.broadcast %303 : f32 to vector<2x14x14xf32>
    %305 = arith.mulf %302, %304 : vector<2x14x14xf32>
    %306 = arith.addf %301, %305 : vector<2x14x14xf32>
    %307 = vector.extract_strided_slice %64 {offsets = [0, 1, 1], sizes = [2, 14, 14], strides = [1, 1, 1]} : vector<2x15x15xf32> to vector<2x14x14xf32>
    %c2_122 = arith.constant 2 : index
    %c11_123 = arith.constant 11 : index
    %308 = memref.load %arg3[%c2_122, %c11_123] : memref<4x16xf32, #tpu.memory_space<smem>>
    %309 = vector.broadcast %308 : f32 to vector<2x14x14xf32>
    %310 = arith.mulf %307, %309 : vector<2x14x14xf32>
    %311 = arith.addf %306, %310 : vector<2x14x14xf32>
    %312 = vector.extract_strided_slice %84 {offsets = [0, 0, 0], sizes = [2, 14, 14], strides = [1, 1, 1]} : vector<2x15x15xf32> to vector<2x14x14xf32>
    %c2_124 = arith.constant 2 : index
    %c12_125 = arith.constant 12 : index
    %313 = memref.load %arg3[%c2_124, %c12_125] : memref<4x16xf32, #tpu.memory_space<smem>>
    %314 = vector.broadcast %313 : f32 to vector<2x14x14xf32>
    %315 = arith.mulf %312, %314 : vector<2x14x14xf32>
    %316 = arith.addf %311, %315 : vector<2x14x14xf32>
    %317 = vector.extract_strided_slice %84 {offsets = [0, 0, 1], sizes = [2, 14, 14], strides = [1, 1, 1]} : vector<2x15x15xf32> to vector<2x14x14xf32>
    %c2_126 = arith.constant 2 : index
    %c13_127 = arith.constant 13 : index
    %318 = memref.load %arg3[%c2_126, %c13_127] : memref<4x16xf32, #tpu.memory_space<smem>>
    %319 = vector.broadcast %318 : f32 to vector<2x14x14xf32>
    %320 = arith.mulf %317, %319 : vector<2x14x14xf32>
    %321 = arith.addf %316, %320 : vector<2x14x14xf32>
    %322 = vector.extract_strided_slice %84 {offsets = [0, 1, 0], sizes = [2, 14, 14], strides = [1, 1, 1]} : vector<2x15x15xf32> to vector<2x14x14xf32>
    %c2_128 = arith.constant 2 : index
    %c14_129 = arith.constant 14 : index
    %323 = memref.load %arg3[%c2_128, %c14_129] : memref<4x16xf32, #tpu.memory_space<smem>>
    %324 = vector.broadcast %323 : f32 to vector<2x14x14xf32>
    %325 = arith.mulf %322, %324 : vector<2x14x14xf32>
    %326 = arith.addf %321, %325 : vector<2x14x14xf32>
    %327 = vector.extract_strided_slice %84 {offsets = [0, 1, 1], sizes = [2, 14, 14], strides = [1, 1, 1]} : vector<2x15x15xf32> to vector<2x14x14xf32>
    %c2_130 = arith.constant 2 : index
    %c15_131 = arith.constant 15 : index
    %328 = memref.load %arg3[%c2_130, %c15_131] : memref<4x16xf32, #tpu.memory_space<smem>>
    %329 = vector.broadcast %328 : f32 to vector<2x14x14xf32>
    %330 = arith.mulf %327, %329 : vector<2x14x14xf32>
    %331 = arith.addf %326, %330 : vector<2x14x14xf32>
    %c0_132 = arith.constant 0 : index
    %c2_133 = arith.constant 2 : index
    %332 = memref.load %arg4[%c0_132, %c2_133] : memref<1x4xf32, #tpu.memory_space<smem>>
    %333 = vector.broadcast %332 : f32 to vector<2x14x14xf32>
    %334 = arith.addf %331, %333 : vector<2x14x14xf32>
    %cst_134 = arith.constant 0.000000e+00 : f32
    %335 = vector.broadcast %cst_134 : f32 to vector<2x14x14xf32>
    %336 = arith.maximumf %334, %335 : vector<2x14x14xf32>
    %337 = vector.extract_strided_slice %24 {offsets = [0, 0, 0], sizes = [2, 14, 14], strides = [1, 1, 1]} : vector<2x15x15xf32> to vector<2x14x14xf32>
    %c3_135 = arith.constant 3 : index
    %c0_136 = arith.constant 0 : index
    %338 = memref.load %arg3[%c3_135, %c0_136] : memref<4x16xf32, #tpu.memory_space<smem>>
    %339 = vector.broadcast %338 : f32 to vector<2x14x14xf32>
    %340 = arith.mulf %337, %339 : vector<2x14x14xf32>
    %341 = vector.extract_strided_slice %24 {offsets = [0, 0, 1], sizes = [2, 14, 14], strides = [1, 1, 1]} : vector<2x15x15xf32> to vector<2x14x14xf32>
    %c3_137 = arith.constant 3 : index
    %c1_138 = arith.constant 1 : index
    %342 = memref.load %arg3[%c3_137, %c1_138] : memref<4x16xf32, #tpu.memory_space<smem>>
    %343 = vector.broadcast %342 : f32 to vector<2x14x14xf32>
    %344 = arith.mulf %341, %343 : vector<2x14x14xf32>
    %345 = arith.addf %340, %344 : vector<2x14x14xf32>
    %346 = vector.extract_strided_slice %24 {offsets = [0, 1, 0], sizes = [2, 14, 14], strides = [1, 1, 1]} : vector<2x15x15xf32> to vector<2x14x14xf32>
    %c3_139 = arith.constant 3 : index
    %c2_140 = arith.constant 2 : index
    %347 = memref.load %arg3[%c3_139, %c2_140] : memref<4x16xf32, #tpu.memory_space<smem>>
    %348 = vector.broadcast %347 : f32 to vector<2x14x14xf32>
    %349 = arith.mulf %346, %348 : vector<2x14x14xf32>
    %350 = arith.addf %345, %349 : vector<2x14x14xf32>
    %351 = vector.extract_strided_slice %24 {offsets = [0, 1, 1], sizes = [2, 14, 14], strides = [1, 1, 1]} : vector<2x15x15xf32> to vector<2x14x14xf32>
    %c3_141 = arith.constant 3 : index
    %c3_142 = arith.constant 3 : index
    %352 = memref.load %arg3[%c3_141, %c3_142] : memref<4x16xf32, #tpu.memory_space<smem>>
    %353 = vector.broadcast %352 : f32 to vector<2x14x14xf32>
    %354 = arith.mulf %351, %353 : vector<2x14x14xf32>
    %355 = arith.addf %350, %354 : vector<2x14x14xf32>
    %356 = vector.extract_strided_slice %44 {offsets = [0, 0, 0], sizes = [2, 14, 14], strides = [1, 1, 1]} : vector<2x15x15xf32> to vector<2x14x14xf32>
    %c3_143 = arith.constant 3 : index
    %c4_144 = arith.constant 4 : index
    %357 = memref.load %arg3[%c3_143, %c4_144] : memref<4x16xf32, #tpu.memory_space<smem>>
    %358 = vector.broadcast %357 : f32 to vector<2x14x14xf32>
    %359 = arith.mulf %356, %358 : vector<2x14x14xf32>
    %360 = arith.addf %355, %359 : vector<2x14x14xf32>
    %361 = vector.extract_strided_slice %44 {offsets = [0, 0, 1], sizes = [2, 14, 14], strides = [1, 1, 1]} : vector<2x15x15xf32> to vector<2x14x14xf32>
    %c3_145 = arith.constant 3 : index
    %c5_146 = arith.constant 5 : index
    %362 = memref.load %arg3[%c3_145, %c5_146] : memref<4x16xf32, #tpu.memory_space<smem>>
    %363 = vector.broadcast %362 : f32 to vector<2x14x14xf32>
    %364 = arith.mulf %361, %363 : vector<2x14x14xf32>
    %365 = arith.addf %360, %364 : vector<2x14x14xf32>
    %366 = vector.extract_strided_slice %44 {offsets = [0, 1, 0], sizes = [2, 14, 14], strides = [1, 1, 1]} : vector<2x15x15xf32> to vector<2x14x14xf32>
    %c3_147 = arith.constant 3 : index
    %c6_148 = arith.constant 6 : index
    %367 = memref.load %arg3[%c3_147, %c6_148] : memref<4x16xf32, #tpu.memory_space<smem>>
    %368 = vector.broadcast %367 : f32 to vector<2x14x14xf32>
    %369 = arith.mulf %366, %368 : vector<2x14x14xf32>
    %370 = arith.addf %365, %369 : vector<2x14x14xf32>
    %371 = vector.extract_strided_slice %44 {offsets = [0, 1, 1], sizes = [2, 14, 14], strides = [1, 1, 1]} : vector<2x15x15xf32> to vector<2x14x14xf32>
    %c3_149 = arith.constant 3 : index
    %c7_150 = arith.constant 7 : index
    %372 = memref.load %arg3[%c3_149, %c7_150] : memref<4x16xf32, #tpu.memory_space<smem>>
    %373 = vector.broadcast %372 : f32 to vector<2x14x14xf32>
    %374 = arith.mulf %371, %373 : vector<2x14x14xf32>
    %375 = arith.addf %370, %374 : vector<2x14x14xf32>
    %376 = vector.extract_strided_slice %64 {offsets = [0, 0, 0], sizes = [2, 14, 14], strides = [1, 1, 1]} : vector<2x15x15xf32> to vector<2x14x14xf32>
    %c3_151 = arith.constant 3 : index
    %c8_152 = arith.constant 8 : index
    %377 = memref.load %arg3[%c3_151, %c8_152] : memref<4x16xf32, #tpu.memory_space<smem>>
    %378 = vector.broadcast %377 : f32 to vector<2x14x14xf32>
    %379 = arith.mulf %376, %378 : vector<2x14x14xf32>
    %380 = arith.addf %375, %379 : vector<2x14x14xf32>
    %381 = vector.extract_strided_slice %64 {offsets = [0, 0, 1], sizes = [2, 14, 14], strides = [1, 1, 1]} : vector<2x15x15xf32> to vector<2x14x14xf32>
    %c3_153 = arith.constant 3 : index
    %c9_154 = arith.constant 9 : index
    %382 = memref.load %arg3[%c3_153, %c9_154] : memref<4x16xf32, #tpu.memory_space<smem>>
    %383 = vector.broadcast %382 : f32 to vector<2x14x14xf32>
    %384 = arith.mulf %381, %383 : vector<2x14x14xf32>
    %385 = arith.addf %380, %384 : vector<2x14x14xf32>
    %386 = vector.extract_strided_slice %64 {offsets = [0, 1, 0], sizes = [2, 14, 14], strides = [1, 1, 1]} : vector<2x15x15xf32> to vector<2x14x14xf32>
    %c3_155 = arith.constant 3 : index
    %c10_156 = arith.constant 10 : index
    %387 = memref.load %arg3[%c3_155, %c10_156] : memref<4x16xf32, #tpu.memory_space<smem>>
    %388 = vector.broadcast %387 : f32 to vector<2x14x14xf32>
    %389 = arith.mulf %386, %388 : vector<2x14x14xf32>
    %390 = arith.addf %385, %389 : vector<2x14x14xf32>
    %391 = vector.extract_strided_slice %64 {offsets = [0, 1, 1], sizes = [2, 14, 14], strides = [1, 1, 1]} : vector<2x15x15xf32> to vector<2x14x14xf32>
    %c3_157 = arith.constant 3 : index
    %c11_158 = arith.constant 11 : index
    %392 = memref.load %arg3[%c3_157, %c11_158] : memref<4x16xf32, #tpu.memory_space<smem>>
    %393 = vector.broadcast %392 : f32 to vector<2x14x14xf32>
    %394 = arith.mulf %391, %393 : vector<2x14x14xf32>
    %395 = arith.addf %390, %394 : vector<2x14x14xf32>
    %396 = vector.extract_strided_slice %84 {offsets = [0, 0, 0], sizes = [2, 14, 14], strides = [1, 1, 1]} : vector<2x15x15xf32> to vector<2x14x14xf32>
    %c3_159 = arith.constant 3 : index
    %c12_160 = arith.constant 12 : index
    %397 = memref.load %arg3[%c3_159, %c12_160] : memref<4x16xf32, #tpu.memory_space<smem>>
    %398 = vector.broadcast %397 : f32 to vector<2x14x14xf32>
    %399 = arith.mulf %396, %398 : vector<2x14x14xf32>
    %400 = arith.addf %395, %399 : vector<2x14x14xf32>
    %401 = vector.extract_strided_slice %84 {offsets = [0, 0, 1], sizes = [2, 14, 14], strides = [1, 1, 1]} : vector<2x15x15xf32> to vector<2x14x14xf32>
    %c3_161 = arith.constant 3 : index
    %c13_162 = arith.constant 13 : index
    %402 = memref.load %arg3[%c3_161, %c13_162] : memref<4x16xf32, #tpu.memory_space<smem>>
    %403 = vector.broadcast %402 : f32 to vector<2x14x14xf32>
    %404 = arith.mulf %401, %403 : vector<2x14x14xf32>
    %405 = arith.addf %400, %404 : vector<2x14x14xf32>
    %406 = vector.extract_strided_slice %84 {offsets = [0, 1, 0], sizes = [2, 14, 14], strides = [1, 1, 1]} : vector<2x15x15xf32> to vector<2x14x14xf32>
    %c3_163 = arith.constant 3 : index
    %c14_164 = arith.constant 14 : index
    %407 = memref.load %arg3[%c3_163, %c14_164] : memref<4x16xf32, #tpu.memory_space<smem>>
    %408 = vector.broadcast %407 : f32 to vector<2x14x14xf32>
    %409 = arith.mulf %406, %408 : vector<2x14x14xf32>
    %410 = arith.addf %405, %409 : vector<2x14x14xf32>
    %411 = vector.extract_strided_slice %84 {offsets = [0, 1, 1], sizes = [2, 14, 14], strides = [1, 1, 1]} : vector<2x15x15xf32> to vector<2x14x14xf32>
    %c3_165 = arith.constant 3 : index
    %c15_166 = arith.constant 15 : index
    %412 = memref.load %arg3[%c3_165, %c15_166] : memref<4x16xf32, #tpu.memory_space<smem>>
    %413 = vector.broadcast %412 : f32 to vector<2x14x14xf32>
    %414 = arith.mulf %411, %413 : vector<2x14x14xf32>
    %415 = arith.addf %410, %414 : vector<2x14x14xf32>
    %c0_167 = arith.constant 0 : index
    %c3_168 = arith.constant 3 : index
    %416 = memref.load %arg4[%c0_167, %c3_168] : memref<1x4xf32, #tpu.memory_space<smem>>
    %417 = vector.broadcast %416 : f32 to vector<2x14x14xf32>
    %418 = arith.addf %415, %417 : vector<2x14x14xf32>
    %cst_169 = arith.constant 0.000000e+00 : f32
    %419 = vector.broadcast %cst_169 : f32 to vector<2x14x14xf32>
    %420 = arith.maximumf %418, %419 : vector<2x14x14xf32>
    %421 = vector.extract_strided_slice %168 {offsets = [0, 0, 0], sizes = [2, 4, 14], strides = [1, 1, 1]} : vector<2x14x14xf32> to vector<2x4x14xf32>
    %cst_170 = arith.constant dense<0xFF800000> : vector<2x14xf32>
    %422 = vector.multi_reduction <maximumf>, %421, %cst_170 [1] : vector<2x4x14xf32> to vector<2x14xf32>
    %423 = vector.extract_strided_slice %422 {offsets = [0, 0], sizes = [2, 4], strides = [1, 1]} : vector<2x14xf32> to vector<2x4xf32>
    %cst_171 = arith.constant dense<0xFF800000> : vector<2xf32>
    %424 = vector.multi_reduction <maximumf>, %423, %cst_171 [1] : vector<2x4xf32> to vector<2xf32>
    %425 = vector.shape_cast %424 : vector<2xf32> to vector<2x1xf32>
    %426 = vector.extract_strided_slice %422 {offsets = [0, 3], sizes = [2, 4], strides = [1, 1]} : vector<2x14xf32> to vector<2x4xf32>
    %cst_172 = arith.constant dense<0xFF800000> : vector<2xf32>
    %427 = vector.multi_reduction <maximumf>, %426, %cst_172 [1] : vector<2x4xf32> to vector<2xf32>
    %428 = vector.shape_cast %427 : vector<2xf32> to vector<2x1xf32>
    %429 = vector.extract_strided_slice %422 {offsets = [0, 7], sizes = [2, 4], strides = [1, 1]} : vector<2x14xf32> to vector<2x4xf32>
    %cst_173 = arith.constant dense<0xFF800000> : vector<2xf32>
    %430 = vector.multi_reduction <maximumf>, %429, %cst_173 [1] : vector<2x4xf32> to vector<2xf32>
    %431 = vector.shape_cast %430 : vector<2xf32> to vector<2x1xf32>
    %432 = vector.extract_strided_slice %422 {offsets = [0, 10], sizes = [2, 4], strides = [1, 1]} : vector<2x14xf32> to vector<2x4xf32>
    %cst_174 = arith.constant dense<0xFF800000> : vector<2xf32>
    %433 = vector.multi_reduction <maximumf>, %432, %cst_174 [1] : vector<2x4xf32> to vector<2xf32>
    %434 = vector.shape_cast %433 : vector<2xf32> to vector<2x1xf32>
    %435 = tpu.concatenate %425, %428, %431, %434 in 1 : vector<2x1xf32>, vector<2x1xf32>, vector<2x1xf32>, vector<2x1xf32> -> vector<2x4xf32>
    %436 = vector.extract_strided_slice %168 {offsets = [0, 3, 0], sizes = [2, 4, 14], strides = [1, 1, 1]} : vector<2x14x14xf32> to vector<2x4x14xf32>
    %cst_175 = arith.constant dense<0xFF800000> : vector<2x14xf32>
    %437 = vector.multi_reduction <maximumf>, %436, %cst_175 [1] : vector<2x4x14xf32> to vector<2x14xf32>
    %438 = vector.extract_strided_slice %437 {offsets = [0, 0], sizes = [2, 4], strides = [1, 1]} : vector<2x14xf32> to vector<2x4xf32>
    %cst_176 = arith.constant dense<0xFF800000> : vector<2xf32>
    %439 = vector.multi_reduction <maximumf>, %438, %cst_176 [1] : vector<2x4xf32> to vector<2xf32>
    %440 = vector.shape_cast %439 : vector<2xf32> to vector<2x1xf32>
    %441 = vector.extract_strided_slice %437 {offsets = [0, 3], sizes = [2, 4], strides = [1, 1]} : vector<2x14xf32> to vector<2x4xf32>
    %cst_177 = arith.constant dense<0xFF800000> : vector<2xf32>
    %442 = vector.multi_reduction <maximumf>, %441, %cst_177 [1] : vector<2x4xf32> to vector<2xf32>
    %443 = vector.shape_cast %442 : vector<2xf32> to vector<2x1xf32>
    %444 = vector.extract_strided_slice %437 {offsets = [0, 7], sizes = [2, 4], strides = [1, 1]} : vector<2x14xf32> to vector<2x4xf32>
    %cst_178 = arith.constant dense<0xFF800000> : vector<2xf32>
    %445 = vector.multi_reduction <maximumf>, %444, %cst_178 [1] : vector<2x4xf32> to vector<2xf32>
    %446 = vector.shape_cast %445 : vector<2xf32> to vector<2x1xf32>
    %447 = vector.extract_strided_slice %437 {offsets = [0, 10], sizes = [2, 4], strides = [1, 1]} : vector<2x14xf32> to vector<2x4xf32>
    %cst_179 = arith.constant dense<0xFF800000> : vector<2xf32>
    %448 = vector.multi_reduction <maximumf>, %447, %cst_179 [1] : vector<2x4xf32> to vector<2xf32>
    %449 = vector.shape_cast %448 : vector<2xf32> to vector<2x1xf32>
    %450 = tpu.concatenate %440, %443, %446, %449 in 1 : vector<2x1xf32>, vector<2x1xf32>, vector<2x1xf32>, vector<2x1xf32> -> vector<2x4xf32>
    %451 = vector.extract_strided_slice %168 {offsets = [0, 7, 0], sizes = [2, 4, 14], strides = [1, 1, 1]} : vector<2x14x14xf32> to vector<2x4x14xf32>
    %cst_180 = arith.constant dense<0xFF800000> : vector<2x14xf32>
    %452 = vector.multi_reduction <maximumf>, %451, %cst_180 [1] : vector<2x4x14xf32> to vector<2x14xf32>
    %453 = vector.extract_strided_slice %452 {offsets = [0, 0], sizes = [2, 4], strides = [1, 1]} : vector<2x14xf32> to vector<2x4xf32>
    %cst_181 = arith.constant dense<0xFF800000> : vector<2xf32>
    %454 = vector.multi_reduction <maximumf>, %453, %cst_181 [1] : vector<2x4xf32> to vector<2xf32>
    %455 = vector.shape_cast %454 : vector<2xf32> to vector<2x1xf32>
    %456 = vector.extract_strided_slice %452 {offsets = [0, 3], sizes = [2, 4], strides = [1, 1]} : vector<2x14xf32> to vector<2x4xf32>
    %cst_182 = arith.constant dense<0xFF800000> : vector<2xf32>
    %457 = vector.multi_reduction <maximumf>, %456, %cst_182 [1] : vector<2x4xf32> to vector<2xf32>
    %458 = vector.shape_cast %457 : vector<2xf32> to vector<2x1xf32>
    %459 = vector.extract_strided_slice %452 {offsets = [0, 7], sizes = [2, 4], strides = [1, 1]} : vector<2x14xf32> to vector<2x4xf32>
    %cst_183 = arith.constant dense<0xFF800000> : vector<2xf32>
    %460 = vector.multi_reduction <maximumf>, %459, %cst_183 [1] : vector<2x4xf32> to vector<2xf32>
    %461 = vector.shape_cast %460 : vector<2xf32> to vector<2x1xf32>
    %462 = vector.extract_strided_slice %452 {offsets = [0, 10], sizes = [2, 4], strides = [1, 1]} : vector<2x14xf32> to vector<2x4xf32>
    %cst_184 = arith.constant dense<0xFF800000> : vector<2xf32>
    %463 = vector.multi_reduction <maximumf>, %462, %cst_184 [1] : vector<2x4xf32> to vector<2xf32>
    %464 = vector.shape_cast %463 : vector<2xf32> to vector<2x1xf32>
    %465 = tpu.concatenate %455, %458, %461, %464 in 1 : vector<2x1xf32>, vector<2x1xf32>, vector<2x1xf32>, vector<2x1xf32> -> vector<2x4xf32>
    %466 = vector.extract_strided_slice %168 {offsets = [0, 10, 0], sizes = [2, 4, 14], strides = [1, 1, 1]} : vector<2x14x14xf32> to vector<2x4x14xf32>
    %cst_185 = arith.constant dense<0xFF800000> : vector<2x14xf32>
    %467 = vector.multi_reduction <maximumf>, %466, %cst_185 [1] : vector<2x4x14xf32> to vector<2x14xf32>
    %468 = vector.extract_strided_slice %467 {offsets = [0, 0], sizes = [2, 4], strides = [1, 1]} : vector<2x14xf32> to vector<2x4xf32>
    %cst_186 = arith.constant dense<0xFF800000> : vector<2xf32>
    %469 = vector.multi_reduction <maximumf>, %468, %cst_186 [1] : vector<2x4xf32> to vector<2xf32>
    %470 = vector.shape_cast %469 : vector<2xf32> to vector<2x1xf32>
    %471 = vector.extract_strided_slice %467 {offsets = [0, 3], sizes = [2, 4], strides = [1, 1]} : vector<2x14xf32> to vector<2x4xf32>
    %cst_187 = arith.constant dense<0xFF800000> : vector<2xf32>
    %472 = vector.multi_reduction <maximumf>, %471, %cst_187 [1] : vector<2x4xf32> to vector<2xf32>
    %473 = vector.shape_cast %472 : vector<2xf32> to vector<2x1xf32>
    %474 = vector.extract_strided_slice %467 {offsets = [0, 7], sizes = [2, 4], strides = [1, 1]} : vector<2x14xf32> to vector<2x4xf32>
    %cst_188 = arith.constant dense<0xFF800000> : vector<2xf32>
    %475 = vector.multi_reduction <maximumf>, %474, %cst_188 [1] : vector<2x4xf32> to vector<2xf32>
    %476 = vector.shape_cast %475 : vector<2xf32> to vector<2x1xf32>
    %477 = vector.extract_strided_slice %467 {offsets = [0, 10], sizes = [2, 4], strides = [1, 1]} : vector<2x14xf32> to vector<2x4xf32>
    %cst_189 = arith.constant dense<0xFF800000> : vector<2xf32>
    %478 = vector.multi_reduction <maximumf>, %477, %cst_189 [1] : vector<2x4xf32> to vector<2xf32>
    %479 = vector.shape_cast %478 : vector<2xf32> to vector<2x1xf32>
    %480 = tpu.concatenate %470, %473, %476, %479 in 1 : vector<2x1xf32>, vector<2x1xf32>, vector<2x1xf32>, vector<2x1xf32> -> vector<2x4xf32>
    %481 = vector.extract_strided_slice %252 {offsets = [0, 0, 0], sizes = [2, 4, 14], strides = [1, 1, 1]} : vector<2x14x14xf32> to vector<2x4x14xf32>
    %cst_190 = arith.constant dense<0xFF800000> : vector<2x14xf32>
    %482 = vector.multi_reduction <maximumf>, %481, %cst_190 [1] : vector<2x4x14xf32> to vector<2x14xf32>
    %483 = vector.extract_strided_slice %482 {offsets = [0, 0], sizes = [2, 4], strides = [1, 1]} : vector<2x14xf32> to vector<2x4xf32>
    %cst_191 = arith.constant dense<0xFF800000> : vector<2xf32>
    %484 = vector.multi_reduction <maximumf>, %483, %cst_191 [1] : vector<2x4xf32> to vector<2xf32>
    %485 = vector.shape_cast %484 : vector<2xf32> to vector<2x1xf32>
    %486 = vector.extract_strided_slice %482 {offsets = [0, 3], sizes = [2, 4], strides = [1, 1]} : vector<2x14xf32> to vector<2x4xf32>
    %cst_192 = arith.constant dense<0xFF800000> : vector<2xf32>
    %487 = vector.multi_reduction <maximumf>, %486, %cst_192 [1] : vector<2x4xf32> to vector<2xf32>
    %488 = vector.shape_cast %487 : vector<2xf32> to vector<2x1xf32>
    %489 = vector.extract_strided_slice %482 {offsets = [0, 7], sizes = [2, 4], strides = [1, 1]} : vector<2x14xf32> to vector<2x4xf32>
    %cst_193 = arith.constant dense<0xFF800000> : vector<2xf32>
    %490 = vector.multi_reduction <maximumf>, %489, %cst_193 [1] : vector<2x4xf32> to vector<2xf32>
    %491 = vector.shape_cast %490 : vector<2xf32> to vector<2x1xf32>
    %492 = vector.extract_strided_slice %482 {offsets = [0, 10], sizes = [2, 4], strides = [1, 1]} : vector<2x14xf32> to vector<2x4xf32>
    %cst_194 = arith.constant dense<0xFF800000> : vector<2xf32>
    %493 = vector.multi_reduction <maximumf>, %492, %cst_194 [1] : vector<2x4xf32> to vector<2xf32>
    %494 = vector.shape_cast %493 : vector<2xf32> to vector<2x1xf32>
    %495 = tpu.concatenate %485, %488, %491, %494 in 1 : vector<2x1xf32>, vector<2x1xf32>, vector<2x1xf32>, vector<2x1xf32> -> vector<2x4xf32>
    %496 = vector.extract_strided_slice %252 {offsets = [0, 3, 0], sizes = [2, 4, 14], strides = [1, 1, 1]} : vector<2x14x14xf32> to vector<2x4x14xf32>
    %cst_195 = arith.constant dense<0xFF800000> : vector<2x14xf32>
    %497 = vector.multi_reduction <maximumf>, %496, %cst_195 [1] : vector<2x4x14xf32> to vector<2x14xf32>
    %498 = vector.extract_strided_slice %497 {offsets = [0, 0], sizes = [2, 4], strides = [1, 1]} : vector<2x14xf32> to vector<2x4xf32>
    %cst_196 = arith.constant dense<0xFF800000> : vector<2xf32>
    %499 = vector.multi_reduction <maximumf>, %498, %cst_196 [1] : vector<2x4xf32> to vector<2xf32>
    %500 = vector.shape_cast %499 : vector<2xf32> to vector<2x1xf32>
    %501 = vector.extract_strided_slice %497 {offsets = [0, 3], sizes = [2, 4], strides = [1, 1]} : vector<2x14xf32> to vector<2x4xf32>
    %cst_197 = arith.constant dense<0xFF800000> : vector<2xf32>
    %502 = vector.multi_reduction <maximumf>, %501, %cst_197 [1] : vector<2x4xf32> to vector<2xf32>
    %503 = vector.shape_cast %502 : vector<2xf32> to vector<2x1xf32>
    %504 = vector.extract_strided_slice %497 {offsets = [0, 7], sizes = [2, 4], strides = [1, 1]} : vector<2x14xf32> to vector<2x4xf32>
    %cst_198 = arith.constant dense<0xFF800000> : vector<2xf32>
    %505 = vector.multi_reduction <maximumf>, %504, %cst_198 [1] : vector<2x4xf32> to vector<2xf32>
    %506 = vector.shape_cast %505 : vector<2xf32> to vector<2x1xf32>
    %507 = vector.extract_strided_slice %497 {offsets = [0, 10], sizes = [2, 4], strides = [1, 1]} : vector<2x14xf32> to vector<2x4xf32>
    %cst_199 = arith.constant dense<0xFF800000> : vector<2xf32>
    %508 = vector.multi_reduction <maximumf>, %507, %cst_199 [1] : vector<2x4xf32> to vector<2xf32>
    %509 = vector.shape_cast %508 : vector<2xf32> to vector<2x1xf32>
    %510 = tpu.concatenate %500, %503, %506, %509 in 1 : vector<2x1xf32>, vector<2x1xf32>, vector<2x1xf32>, vector<2x1xf32> -> vector<2x4xf32>
    %511 = vector.extract_strided_slice %252 {offsets = [0, 7, 0], sizes = [2, 4, 14], strides = [1, 1, 1]} : vector<2x14x14xf32> to vector<2x4x14xf32>
    %cst_200 = arith.constant dense<0xFF800000> : vector<2x14xf32>
    %512 = vector.multi_reduction <maximumf>, %511, %cst_200 [1] : vector<2x4x14xf32> to vector<2x14xf32>
    %513 = vector.extract_strided_slice %512 {offsets = [0, 0], sizes = [2, 4], strides = [1, 1]} : vector<2x14xf32> to vector<2x4xf32>
    %cst_201 = arith.constant dense<0xFF800000> : vector<2xf32>
    %514 = vector.multi_reduction <maximumf>, %513, %cst_201 [1] : vector<2x4xf32> to vector<2xf32>
    %515 = vector.shape_cast %514 : vector<2xf32> to vector<2x1xf32>
    %516 = vector.extract_strided_slice %512 {offsets = [0, 3], sizes = [2, 4], strides = [1, 1]} : vector<2x14xf32> to vector<2x4xf32>
    %cst_202 = arith.constant dense<0xFF800000> : vector<2xf32>
    %517 = vector.multi_reduction <maximumf>, %516, %cst_202 [1] : vector<2x4xf32> to vector<2xf32>
    %518 = vector.shape_cast %517 : vector<2xf32> to vector<2x1xf32>
    %519 = vector.extract_strided_slice %512 {offsets = [0, 7], sizes = [2, 4], strides = [1, 1]} : vector<2x14xf32> to vector<2x4xf32>
    %cst_203 = arith.constant dense<0xFF800000> : vector<2xf32>
    %520 = vector.multi_reduction <maximumf>, %519, %cst_203 [1] : vector<2x4xf32> to vector<2xf32>
    %521 = vector.shape_cast %520 : vector<2xf32> to vector<2x1xf32>
    %522 = vector.extract_strided_slice %512 {offsets = [0, 10], sizes = [2, 4], strides = [1, 1]} : vector<2x14xf32> to vector<2x4xf32>
    %cst_204 = arith.constant dense<0xFF800000> : vector<2xf32>
    %523 = vector.multi_reduction <maximumf>, %522, %cst_204 [1] : vector<2x4xf32> to vector<2xf32>
    %524 = vector.shape_cast %523 : vector<2xf32> to vector<2x1xf32>
    %525 = tpu.concatenate %515, %518, %521, %524 in 1 : vector<2x1xf32>, vector<2x1xf32>, vector<2x1xf32>, vector<2x1xf32> -> vector<2x4xf32>
    %526 = vector.extract_strided_slice %252 {offsets = [0, 10, 0], sizes = [2, 4, 14], strides = [1, 1, 1]} : vector<2x14x14xf32> to vector<2x4x14xf32>
    %cst_205 = arith.constant dense<0xFF800000> : vector<2x14xf32>
    %527 = vector.multi_reduction <maximumf>, %526, %cst_205 [1] : vector<2x4x14xf32> to vector<2x14xf32>
    %528 = vector.extract_strided_slice %527 {offsets = [0, 0], sizes = [2, 4], strides = [1, 1]} : vector<2x14xf32> to vector<2x4xf32>
    %cst_206 = arith.constant dense<0xFF800000> : vector<2xf32>
    %529 = vector.multi_reduction <maximumf>, %528, %cst_206 [1] : vector<2x4xf32> to vector<2xf32>
    %530 = vector.shape_cast %529 : vector<2xf32> to vector<2x1xf32>
    %531 = vector.extract_strided_slice %527 {offsets = [0, 3], sizes = [2, 4], strides = [1, 1]} : vector<2x14xf32> to vector<2x4xf32>
    %cst_207 = arith.constant dense<0xFF800000> : vector<2xf32>
    %532 = vector.multi_reduction <maximumf>, %531, %cst_207 [1] : vector<2x4xf32> to vector<2xf32>
    %533 = vector.shape_cast %532 : vector<2xf32> to vector<2x1xf32>
    %534 = vector.extract_strided_slice %527 {offsets = [0, 7], sizes = [2, 4], strides = [1, 1]} : vector<2x14xf32> to vector<2x4xf32>
    %cst_208 = arith.constant dense<0xFF800000> : vector<2xf32>
    %535 = vector.multi_reduction <maximumf>, %534, %cst_208 [1] : vector<2x4xf32> to vector<2xf32>
    %536 = vector.shape_cast %535 : vector<2xf32> to vector<2x1xf32>
    %537 = vector.extract_strided_slice %527 {offsets = [0, 10], sizes = [2, 4], strides = [1, 1]} : vector<2x14xf32> to vector<2x4xf32>
    %cst_209 = arith.constant dense<0xFF800000> : vector<2xf32>
    %538 = vector.multi_reduction <maximumf>, %537, %cst_209 [1] : vector<2x4xf32> to vector<2xf32>
    %539 = vector.shape_cast %538 : vector<2xf32> to vector<2x1xf32>
    %540 = tpu.concatenate %530, %533, %536, %539 in 1 : vector<2x1xf32>, vector<2x1xf32>, vector<2x1xf32>, vector<2x1xf32> -> vector<2x4xf32>
    %541 = vector.extract_strided_slice %336 {offsets = [0, 0, 0], sizes = [2, 4, 14], strides = [1, 1, 1]} : vector<2x14x14xf32> to vector<2x4x14xf32>
    %cst_210 = arith.constant dense<0xFF800000> : vector<2x14xf32>
    %542 = vector.multi_reduction <maximumf>, %541, %cst_210 [1] : vector<2x4x14xf32> to vector<2x14xf32>
    %543 = vector.extract_strided_slice %542 {offsets = [0, 0], sizes = [2, 4], strides = [1, 1]} : vector<2x14xf32> to vector<2x4xf32>
    %cst_211 = arith.constant dense<0xFF800000> : vector<2xf32>
    %544 = vector.multi_reduction <maximumf>, %543, %cst_211 [1] : vector<2x4xf32> to vector<2xf32>
    %545 = vector.shape_cast %544 : vector<2xf32> to vector<2x1xf32>
    %546 = vector.extract_strided_slice %542 {offsets = [0, 3], sizes = [2, 4], strides = [1, 1]} : vector<2x14xf32> to vector<2x4xf32>
    %cst_212 = arith.constant dense<0xFF800000> : vector<2xf32>
    %547 = vector.multi_reduction <maximumf>, %546, %cst_212 [1] : vector<2x4xf32> to vector<2xf32>
    %548 = vector.shape_cast %547 : vector<2xf32> to vector<2x1xf32>
    %549 = vector.extract_strided_slice %542 {offsets = [0, 7], sizes = [2, 4], strides = [1, 1]} : vector<2x14xf32> to vector<2x4xf32>
    %cst_213 = arith.constant dense<0xFF800000> : vector<2xf32>
    %550 = vector.multi_reduction <maximumf>, %549, %cst_213 [1] : vector<2x4xf32> to vector<2xf32>
    %551 = vector.shape_cast %550 : vector<2xf32> to vector<2x1xf32>
    %552 = vector.extract_strided_slice %542 {offsets = [0, 10], sizes = [2, 4], strides = [1, 1]} : vector<2x14xf32> to vector<2x4xf32>
    %cst_214 = arith.constant dense<0xFF800000> : vector<2xf32>
    %553 = vector.multi_reduction <maximumf>, %552, %cst_214 [1] : vector<2x4xf32> to vector<2xf32>
    %554 = vector.shape_cast %553 : vector<2xf32> to vector<2x1xf32>
    %555 = tpu.concatenate %545, %548, %551, %554 in 1 : vector<2x1xf32>, vector<2x1xf32>, vector<2x1xf32>, vector<2x1xf32> -> vector<2x4xf32>
    %556 = vector.extract_strided_slice %336 {offsets = [0, 3, 0], sizes = [2, 4, 14], strides = [1, 1, 1]} : vector<2x14x14xf32> to vector<2x4x14xf32>
    %cst_215 = arith.constant dense<0xFF800000> : vector<2x14xf32>
    %557 = vector.multi_reduction <maximumf>, %556, %cst_215 [1] : vector<2x4x14xf32> to vector<2x14xf32>
    %558 = vector.extract_strided_slice %557 {offsets = [0, 0], sizes = [2, 4], strides = [1, 1]} : vector<2x14xf32> to vector<2x4xf32>
    %cst_216 = arith.constant dense<0xFF800000> : vector<2xf32>
    %559 = vector.multi_reduction <maximumf>, %558, %cst_216 [1] : vector<2x4xf32> to vector<2xf32>
    %560 = vector.shape_cast %559 : vector<2xf32> to vector<2x1xf32>
    %561 = vector.extract_strided_slice %557 {offsets = [0, 3], sizes = [2, 4], strides = [1, 1]} : vector<2x14xf32> to vector<2x4xf32>
    %cst_217 = arith.constant dense<0xFF800000> : vector<2xf32>
    %562 = vector.multi_reduction <maximumf>, %561, %cst_217 [1] : vector<2x4xf32> to vector<2xf32>
    %563 = vector.shape_cast %562 : vector<2xf32> to vector<2x1xf32>
    %564 = vector.extract_strided_slice %557 {offsets = [0, 7], sizes = [2, 4], strides = [1, 1]} : vector<2x14xf32> to vector<2x4xf32>
    %cst_218 = arith.constant dense<0xFF800000> : vector<2xf32>
    %565 = vector.multi_reduction <maximumf>, %564, %cst_218 [1] : vector<2x4xf32> to vector<2xf32>
    %566 = vector.shape_cast %565 : vector<2xf32> to vector<2x1xf32>
    %567 = vector.extract_strided_slice %557 {offsets = [0, 10], sizes = [2, 4], strides = [1, 1]} : vector<2x14xf32> to vector<2x4xf32>
    %cst_219 = arith.constant dense<0xFF800000> : vector<2xf32>
    %568 = vector.multi_reduction <maximumf>, %567, %cst_219 [1] : vector<2x4xf32> to vector<2xf32>
    %569 = vector.shape_cast %568 : vector<2xf32> to vector<2x1xf32>
    %570 = tpu.concatenate %560, %563, %566, %569 in 1 : vector<2x1xf32>, vector<2x1xf32>, vector<2x1xf32>, vector<2x1xf32> -> vector<2x4xf32>
    %571 = vector.extract_strided_slice %336 {offsets = [0, 7, 0], sizes = [2, 4, 14], strides = [1, 1, 1]} : vector<2x14x14xf32> to vector<2x4x14xf32>
    %cst_220 = arith.constant dense<0xFF800000> : vector<2x14xf32>
    %572 = vector.multi_reduction <maximumf>, %571, %cst_220 [1] : vector<2x4x14xf32> to vector<2x14xf32>
    %573 = vector.extract_strided_slice %572 {offsets = [0, 0], sizes = [2, 4], strides = [1, 1]} : vector<2x14xf32> to vector<2x4xf32>
    %cst_221 = arith.constant dense<0xFF800000> : vector<2xf32>
    %574 = vector.multi_reduction <maximumf>, %573, %cst_221 [1] : vector<2x4xf32> to vector<2xf32>
    %575 = vector.shape_cast %574 : vector<2xf32> to vector<2x1xf32>
    %576 = vector.extract_strided_slice %572 {offsets = [0, 3], sizes = [2, 4], strides = [1, 1]} : vector<2x14xf32> to vector<2x4xf32>
    %cst_222 = arith.constant dense<0xFF800000> : vector<2xf32>
    %577 = vector.multi_reduction <maximumf>, %576, %cst_222 [1] : vector<2x4xf32> to vector<2xf32>
    %578 = vector.shape_cast %577 : vector<2xf32> to vector<2x1xf32>
    %579 = vector.extract_strided_slice %572 {offsets = [0, 7], sizes = [2, 4], strides = [1, 1]} : vector<2x14xf32> to vector<2x4xf32>
    %cst_223 = arith.constant dense<0xFF800000> : vector<2xf32>
    %580 = vector.multi_reduction <maximumf>, %579, %cst_223 [1] : vector<2x4xf32> to vector<2xf32>
    %581 = vector.shape_cast %580 : vector<2xf32> to vector<2x1xf32>
    %582 = vector.extract_strided_slice %572 {offsets = [0, 10], sizes = [2, 4], strides = [1, 1]} : vector<2x14xf32> to vector<2x4xf32>
    %cst_224 = arith.constant dense<0xFF800000> : vector<2xf32>
    %583 = vector.multi_reduction <maximumf>, %582, %cst_224 [1] : vector<2x4xf32> to vector<2xf32>
    %584 = vector.shape_cast %583 : vector<2xf32> to vector<2x1xf32>
    %585 = tpu.concatenate %575, %578, %581, %584 in 1 : vector<2x1xf32>, vector<2x1xf32>, vector<2x1xf32>, vector<2x1xf32> -> vector<2x4xf32>
    %586 = vector.extract_strided_slice %336 {offsets = [0, 10, 0], sizes = [2, 4, 14], strides = [1, 1, 1]} : vector<2x14x14xf32> to vector<2x4x14xf32>
    %cst_225 = arith.constant dense<0xFF800000> : vector<2x14xf32>
    %587 = vector.multi_reduction <maximumf>, %586, %cst_225 [1] : vector<2x4x14xf32> to vector<2x14xf32>
    %588 = vector.extract_strided_slice %587 {offsets = [0, 0], sizes = [2, 4], strides = [1, 1]} : vector<2x14xf32> to vector<2x4xf32>
    %cst_226 = arith.constant dense<0xFF800000> : vector<2xf32>
    %589 = vector.multi_reduction <maximumf>, %588, %cst_226 [1] : vector<2x4xf32> to vector<2xf32>
    %590 = vector.shape_cast %589 : vector<2xf32> to vector<2x1xf32>
    %591 = vector.extract_strided_slice %587 {offsets = [0, 3], sizes = [2, 4], strides = [1, 1]} : vector<2x14xf32> to vector<2x4xf32>
    %cst_227 = arith.constant dense<0xFF800000> : vector<2xf32>
    %592 = vector.multi_reduction <maximumf>, %591, %cst_227 [1] : vector<2x4xf32> to vector<2xf32>
    %593 = vector.shape_cast %592 : vector<2xf32> to vector<2x1xf32>
    %594 = vector.extract_strided_slice %587 {offsets = [0, 7], sizes = [2, 4], strides = [1, 1]} : vector<2x14xf32> to vector<2x4xf32>
    %cst_228 = arith.constant dense<0xFF800000> : vector<2xf32>
    %595 = vector.multi_reduction <maximumf>, %594, %cst_228 [1] : vector<2x4xf32> to vector<2xf32>
    %596 = vector.shape_cast %595 : vector<2xf32> to vector<2x1xf32>
    %597 = vector.extract_strided_slice %587 {offsets = [0, 10], sizes = [2, 4], strides = [1, 1]} : vector<2x14xf32> to vector<2x4xf32>
    %cst_229 = arith.constant dense<0xFF800000> : vector<2xf32>
    %598 = vector.multi_reduction <maximumf>, %597, %cst_229 [1] : vector<2x4xf32> to vector<2xf32>
    %599 = vector.shape_cast %598 : vector<2xf32> to vector<2x1xf32>
    %600 = tpu.concatenate %590, %593, %596, %599 in 1 : vector<2x1xf32>, vector<2x1xf32>, vector<2x1xf32>, vector<2x1xf32> -> vector<2x4xf32>
    %601 = vector.extract_strided_slice %420 {offsets = [0, 0, 0], sizes = [2, 4, 14], strides = [1, 1, 1]} : vector<2x14x14xf32> to vector<2x4x14xf32>
    %cst_230 = arith.constant dense<0xFF800000> : vector<2x14xf32>
    %602 = vector.multi_reduction <maximumf>, %601, %cst_230 [1] : vector<2x4x14xf32> to vector<2x14xf32>
    %603 = vector.extract_strided_slice %602 {offsets = [0, 0], sizes = [2, 4], strides = [1, 1]} : vector<2x14xf32> to vector<2x4xf32>
    %cst_231 = arith.constant dense<0xFF800000> : vector<2xf32>
    %604 = vector.multi_reduction <maximumf>, %603, %cst_231 [1] : vector<2x4xf32> to vector<2xf32>
    %605 = vector.shape_cast %604 : vector<2xf32> to vector<2x1xf32>
    %606 = vector.extract_strided_slice %602 {offsets = [0, 3], sizes = [2, 4], strides = [1, 1]} : vector<2x14xf32> to vector<2x4xf32>
    %cst_232 = arith.constant dense<0xFF800000> : vector<2xf32>
    %607 = vector.multi_reduction <maximumf>, %606, %cst_232 [1] : vector<2x4xf32> to vector<2xf32>
    %608 = vector.shape_cast %607 : vector<2xf32> to vector<2x1xf32>
    %609 = vector.extract_strided_slice %602 {offsets = [0, 7], sizes = [2, 4], strides = [1, 1]} : vector<2x14xf32> to vector<2x4xf32>
    %cst_233 = arith.constant dense<0xFF800000> : vector<2xf32>
    %610 = vector.multi_reduction <maximumf>, %609, %cst_233 [1] : vector<2x4xf32> to vector<2xf32>
    %611 = vector.shape_cast %610 : vector<2xf32> to vector<2x1xf32>
    %612 = vector.extract_strided_slice %602 {offsets = [0, 10], sizes = [2, 4], strides = [1, 1]} : vector<2x14xf32> to vector<2x4xf32>
    %cst_234 = arith.constant dense<0xFF800000> : vector<2xf32>
    %613 = vector.multi_reduction <maximumf>, %612, %cst_234 [1] : vector<2x4xf32> to vector<2xf32>
    %614 = vector.shape_cast %613 : vector<2xf32> to vector<2x1xf32>
    %615 = tpu.concatenate %605, %608, %611, %614 in 1 : vector<2x1xf32>, vector<2x1xf32>, vector<2x1xf32>, vector<2x1xf32> -> vector<2x4xf32>
    %616 = vector.extract_strided_slice %420 {offsets = [0, 3, 0], sizes = [2, 4, 14], strides = [1, 1, 1]} : vector<2x14x14xf32> to vector<2x4x14xf32>
    %cst_235 = arith.constant dense<0xFF800000> : vector<2x14xf32>
    %617 = vector.multi_reduction <maximumf>, %616, %cst_235 [1] : vector<2x4x14xf32> to vector<2x14xf32>
    %618 = vector.extract_strided_slice %617 {offsets = [0, 0], sizes = [2, 4], strides = [1, 1]} : vector<2x14xf32> to vector<2x4xf32>
    %cst_236 = arith.constant dense<0xFF800000> : vector<2xf32>
    %619 = vector.multi_reduction <maximumf>, %618, %cst_236 [1] : vector<2x4xf32> to vector<2xf32>
    %620 = vector.shape_cast %619 : vector<2xf32> to vector<2x1xf32>
    %621 = vector.extract_strided_slice %617 {offsets = [0, 3], sizes = [2, 4], strides = [1, 1]} : vector<2x14xf32> to vector<2x4xf32>
    %cst_237 = arith.constant dense<0xFF800000> : vector<2xf32>
    %622 = vector.multi_reduction <maximumf>, %621, %cst_237 [1] : vector<2x4xf32> to vector<2xf32>
    %623 = vector.shape_cast %622 : vector<2xf32> to vector<2x1xf32>
    %624 = vector.extract_strided_slice %617 {offsets = [0, 7], sizes = [2, 4], strides = [1, 1]} : vector<2x14xf32> to vector<2x4xf32>
    %cst_238 = arith.constant dense<0xFF800000> : vector<2xf32>
    %625 = vector.multi_reduction <maximumf>, %624, %cst_238 [1] : vector<2x4xf32> to vector<2xf32>
    %626 = vector.shape_cast %625 : vector<2xf32> to vector<2x1xf32>
    %627 = vector.extract_strided_slice %617 {offsets = [0, 10], sizes = [2, 4], strides = [1, 1]} : vector<2x14xf32> to vector<2x4xf32>
    %cst_239 = arith.constant dense<0xFF800000> : vector<2xf32>
    %628 = vector.multi_reduction <maximumf>, %627, %cst_239 [1] : vector<2x4xf32> to vector<2xf32>
    %629 = vector.shape_cast %628 : vector<2xf32> to vector<2x1xf32>
    %630 = tpu.concatenate %620, %623, %626, %629 in 1 : vector<2x1xf32>, vector<2x1xf32>, vector<2x1xf32>, vector<2x1xf32> -> vector<2x4xf32>
    %631 = vector.extract_strided_slice %420 {offsets = [0, 7, 0], sizes = [2, 4, 14], strides = [1, 1, 1]} : vector<2x14x14xf32> to vector<2x4x14xf32>
    %cst_240 = arith.constant dense<0xFF800000> : vector<2x14xf32>
    %632 = vector.multi_reduction <maximumf>, %631, %cst_240 [1] : vector<2x4x14xf32> to vector<2x14xf32>
    %633 = vector.extract_strided_slice %632 {offsets = [0, 0], sizes = [2, 4], strides = [1, 1]} : vector<2x14xf32> to vector<2x4xf32>
    %cst_241 = arith.constant dense<0xFF800000> : vector<2xf32>
    %634 = vector.multi_reduction <maximumf>, %633, %cst_241 [1] : vector<2x4xf32> to vector<2xf32>
    %635 = vector.shape_cast %634 : vector<2xf32> to vector<2x1xf32>
    %636 = vector.extract_strided_slice %632 {offsets = [0, 3], sizes = [2, 4], strides = [1, 1]} : vector<2x14xf32> to vector<2x4xf32>
    %cst_242 = arith.constant dense<0xFF800000> : vector<2xf32>
    %637 = vector.multi_reduction <maximumf>, %636, %cst_242 [1] : vector<2x4xf32> to vector<2xf32>
    %638 = vector.shape_cast %637 : vector<2xf32> to vector<2x1xf32>
    %639 = vector.extract_strided_slice %632 {offsets = [0, 7], sizes = [2, 4], strides = [1, 1]} : vector<2x14xf32> to vector<2x4xf32>
    %cst_243 = arith.constant dense<0xFF800000> : vector<2xf32>
    %640 = vector.multi_reduction <maximumf>, %639, %cst_243 [1] : vector<2x4xf32> to vector<2xf32>
    %641 = vector.shape_cast %640 : vector<2xf32> to vector<2x1xf32>
    %642 = vector.extract_strided_slice %632 {offsets = [0, 10], sizes = [2, 4], strides = [1, 1]} : vector<2x14xf32> to vector<2x4xf32>
    %cst_244 = arith.constant dense<0xFF800000> : vector<2xf32>
    %643 = vector.multi_reduction <maximumf>, %642, %cst_244 [1] : vector<2x4xf32> to vector<2xf32>
    %644 = vector.shape_cast %643 : vector<2xf32> to vector<2x1xf32>
    %645 = tpu.concatenate %635, %638, %641, %644 in 1 : vector<2x1xf32>, vector<2x1xf32>, vector<2x1xf32>, vector<2x1xf32> -> vector<2x4xf32>
    %646 = vector.extract_strided_slice %420 {offsets = [0, 10, 0], sizes = [2, 4, 14], strides = [1, 1, 1]} : vector<2x14x14xf32> to vector<2x4x14xf32>
    %cst_245 = arith.constant dense<0xFF800000> : vector<2x14xf32>
    %647 = vector.multi_reduction <maximumf>, %646, %cst_245 [1] : vector<2x4x14xf32> to vector<2x14xf32>
    %648 = vector.extract_strided_slice %647 {offsets = [0, 0], sizes = [2, 4], strides = [1, 1]} : vector<2x14xf32> to vector<2x4xf32>
    %cst_246 = arith.constant dense<0xFF800000> : vector<2xf32>
    %649 = vector.multi_reduction <maximumf>, %648, %cst_246 [1] : vector<2x4xf32> to vector<2xf32>
    %650 = vector.shape_cast %649 : vector<2xf32> to vector<2x1xf32>
    %651 = vector.extract_strided_slice %647 {offsets = [0, 3], sizes = [2, 4], strides = [1, 1]} : vector<2x14xf32> to vector<2x4xf32>
    %cst_247 = arith.constant dense<0xFF800000> : vector<2xf32>
    %652 = vector.multi_reduction <maximumf>, %651, %cst_247 [1] : vector<2x4xf32> to vector<2xf32>
    %653 = vector.shape_cast %652 : vector<2xf32> to vector<2x1xf32>
    %654 = vector.extract_strided_slice %647 {offsets = [0, 7], sizes = [2, 4], strides = [1, 1]} : vector<2x14xf32> to vector<2x4xf32>
    %cst_248 = arith.constant dense<0xFF800000> : vector<2xf32>
    %655 = vector.multi_reduction <maximumf>, %654, %cst_248 [1] : vector<2x4xf32> to vector<2xf32>
    %656 = vector.shape_cast %655 : vector<2xf32> to vector<2x1xf32>
    %657 = vector.extract_strided_slice %647 {offsets = [0, 10], sizes = [2, 4], strides = [1, 1]} : vector<2x14xf32> to vector<2x4xf32>
    %cst_249 = arith.constant dense<0xFF800000> : vector<2xf32>
    %658 = vector.multi_reduction <maximumf>, %657, %cst_249 [1] : vector<2x4xf32> to vector<2xf32>
    %659 = vector.shape_cast %658 : vector<2xf32> to vector<2x1xf32>
    %660 = tpu.concatenate %650, %653, %656, %659 in 1 : vector<2x1xf32>, vector<2x1xf32>, vector<2x1xf32>, vector<2x1xf32> -> vector<2x4xf32>
    %661 = tpu.concatenate %435, %450, %465, %480 in 1 : vector<2x4xf32>, vector<2x4xf32>, vector<2x4xf32>, vector<2x4xf32> -> vector<2x16xf32>
    %662 = tpu.concatenate %495, %510, %525, %540 in 1 : vector<2x4xf32>, vector<2x4xf32>, vector<2x4xf32>, vector<2x4xf32> -> vector<2x16xf32>
    %663 = tpu.concatenate %555, %570, %585, %600 in 1 : vector<2x4xf32>, vector<2x4xf32>, vector<2x4xf32>, vector<2x4xf32> -> vector<2x16xf32>
    %664 = tpu.concatenate %615, %630, %645, %660 in 1 : vector<2x4xf32>, vector<2x4xf32>, vector<2x4xf32>, vector<2x4xf32> -> vector<2x16xf32>
    %c0_250 = arith.constant 0 : index
    %c0_251 = arith.constant 0 : index
    %665 = vector.load %arg5[%c0_250, %c0_251] : memref<16x128xf32, #tpu.memory_space<vmem>>, vector<16x128xf32>
    %c0_252 = arith.constant 0 : index
    %c0_253 = arith.constant 0 : index
    %666 = vector.load %arg6[%c0_252, %c0_253] : memref<32x128xf32, #tpu.memory_space<vmem>>, vector<32x128xf32>
    %c0_254 = arith.constant 0 : index
    %c0_255 = arith.constant 0 : index
    %667 = vector.load %arg7[%c0_254, %c0_255] : memref<1x128xf32, #tpu.memory_space<vmem>>, vector<1x128xf32>
    %668 = tpu.concatenate %661, %662, %663, %664 in 0 : vector<2x16xf32>, vector<2x16xf32>, vector<2x16xf32>, vector<2x16xf32> -> vector<8x16xf32>
    %cst_256 = arith.constant dense<0.000000e+00> : vector<8x128xf32>
    %669 = tpu.matmul %668, %665, %cst_256 {dimension_numbers = #tpu.dot_dimension_numbers<[1], [0], [0], [1], [0, 0, 1, 1], [], []>} : vector<8x16xf32>, vector<16x128xf32>, vector<8x128xf32> -> vector<8x128xf32>
    %670 = vector.broadcast %667 : vector<1x128xf32> to vector<8x128xf32>
    %671 = arith.addf %669, %670 : vector<8x128xf32>
    %672 = vector.extract_strided_slice %671 {offsets = [0, 0], sizes = [2, 128], strides = [1, 1]} : vector<8x128xf32> to vector<2x128xf32>
    %cst_257 = arith.constant 5.000000e-01 : f32
    %673 = vector.broadcast %cst_257 : f32 to vector<2x128xf32>
    %674 = arith.mulf %673, %672 : vector<2x128xf32>
    %675 = math.tanh %674 : vector<2x128xf32>
    %cst_258 = arith.constant 1.000000e+00 : f32
    %676 = vector.broadcast %cst_258 : f32 to vector<2x128xf32>
    %677 = arith.addf %675, %676 : vector<2x128xf32>
    %cst_259 = arith.constant 5.000000e-01 : f32
    %678 = vector.broadcast %cst_259 : f32 to vector<2x128xf32>
    %679 = arith.mulf %678, %677 : vector<2x128xf32>
    %680 = math.tanh %672 : vector<2x128xf32>
    %681 = vector.extract_strided_slice %679 {offsets = [0, 0], sizes = [2, 32], strides = [1, 1]} : vector<2x128xf32> to vector<2x32xf32>
    %682 = vector.extract_strided_slice %679 {offsets = [0, 96], sizes = [2, 32], strides = [1, 1]} : vector<2x128xf32> to vector<2x32xf32>
    %683 = vector.extract_strided_slice %680 {offsets = [0, 64], sizes = [2, 32], strides = [1, 1]} : vector<2x128xf32> to vector<2x32xf32>
    %684 = arith.mulf %681, %683 : vector<2x32xf32>
    %685 = math.tanh %684 : vector<2x32xf32>
    %686 = arith.mulf %682, %685 : vector<2x32xf32>
    %687 = vector.extract_strided_slice %671 {offsets = [2, 0], sizes = [2, 128], strides = [1, 1]} : vector<8x128xf32> to vector<2x128xf32>
    %cst_260 = arith.constant dense<0.000000e+00> : vector<2x128xf32>
    %688 = tpu.matmul %686, %666, %cst_260 {dimension_numbers = #tpu.dot_dimension_numbers<[1], [0], [0], [1], [0, 0, 1, 1], [], []>} : vector<2x32xf32>, vector<32x128xf32>, vector<2x128xf32> -> vector<2x128xf32>
    %689 = arith.addf %687, %688 : vector<2x128xf32>
    %cst_261 = arith.constant 5.000000e-01 : f32
    %690 = vector.broadcast %cst_261 : f32 to vector<2x128xf32>
    %691 = arith.mulf %690, %689 : vector<2x128xf32>
    %692 = math.tanh %691 : vector<2x128xf32>
    %cst_262 = arith.constant 1.000000e+00 : f32
    %693 = vector.broadcast %cst_262 : f32 to vector<2x128xf32>
    %694 = arith.addf %692, %693 : vector<2x128xf32>
    %cst_263 = arith.constant 5.000000e-01 : f32
    %695 = vector.broadcast %cst_263 : f32 to vector<2x128xf32>
    %696 = arith.mulf %695, %694 : vector<2x128xf32>
    %697 = math.tanh %689 : vector<2x128xf32>
    %698 = vector.extract_strided_slice %696 {offsets = [0, 0], sizes = [2, 32], strides = [1, 1]} : vector<2x128xf32> to vector<2x32xf32>
    %699 = vector.extract_strided_slice %696 {offsets = [0, 32], sizes = [2, 32], strides = [1, 1]} : vector<2x128xf32> to vector<2x32xf32>
    %700 = vector.extract_strided_slice %696 {offsets = [0, 96], sizes = [2, 32], strides = [1, 1]} : vector<2x128xf32> to vector<2x32xf32>
    %701 = vector.extract_strided_slice %697 {offsets = [0, 64], sizes = [2, 32], strides = [1, 1]} : vector<2x128xf32> to vector<2x32xf32>
    %702 = arith.mulf %699, %684 : vector<2x32xf32>
    %703 = arith.mulf %698, %701 : vector<2x32xf32>
    %704 = arith.addf %702, %703 : vector<2x32xf32>
    %705 = math.tanh %704 : vector<2x32xf32>
    %706 = arith.mulf %700, %705 : vector<2x32xf32>
    %707 = vector.extract_strided_slice %671 {offsets = [4, 0], sizes = [2, 128], strides = [1, 1]} : vector<8x128xf32> to vector<2x128xf32>
    %cst_264 = arith.constant dense<0.000000e+00> : vector<2x128xf32>
    %708 = tpu.matmul %706, %666, %cst_264 {dimension_numbers = #tpu.dot_dimension_numbers<[1], [0], [0], [1], [0, 0, 1, 1], [], []>} : vector<2x32xf32>, vector<32x128xf32>, vector<2x128xf32> -> vector<2x128xf32>
    %709 = arith.addf %707, %708 : vector<2x128xf32>
    %cst_265 = arith.constant 5.000000e-01 : f32
    %710 = vector.broadcast %cst_265 : f32 to vector<2x128xf32>
    %711 = arith.mulf %710, %709 : vector<2x128xf32>
    %712 = math.tanh %711 : vector<2x128xf32>
    %cst_266 = arith.constant 1.000000e+00 : f32
    %713 = vector.broadcast %cst_266 : f32 to vector<2x128xf32>
    %714 = arith.addf %712, %713 : vector<2x128xf32>
    %cst_267 = arith.constant 5.000000e-01 : f32
    %715 = vector.broadcast %cst_267 : f32 to vector<2x128xf32>
    %716 = arith.mulf %715, %714 : vector<2x128xf32>
    %717 = math.tanh %709 : vector<2x128xf32>
    %718 = vector.extract_strided_slice %716 {offsets = [0, 0], sizes = [2, 32], strides = [1, 1]} : vector<2x128xf32> to vector<2x32xf32>
    %719 = vector.extract_strided_slice %716 {offsets = [0, 32], sizes = [2, 32], strides = [1, 1]} : vector<2x128xf32> to vector<2x32xf32>
    %720 = vector.extract_strided_slice %716 {offsets = [0, 96], sizes = [2, 32], strides = [1, 1]} : vector<2x128xf32> to vector<2x32xf32>
    %721 = vector.extract_strided_slice %717 {offsets = [0, 64], sizes = [2, 32], strides = [1, 1]} : vector<2x128xf32> to vector<2x32xf32>
    %722 = arith.mulf %719, %704 : vector<2x32xf32>
    %723 = arith.mulf %718, %721 : vector<2x32xf32>
    %724 = arith.addf %722, %723 : vector<2x32xf32>
    %725 = math.tanh %724 : vector<2x32xf32>
    %726 = arith.mulf %720, %725 : vector<2x32xf32>
    %727 = vector.extract_strided_slice %671 {offsets = [6, 0], sizes = [2, 128], strides = [1, 1]} : vector<8x128xf32> to vector<2x128xf32>
    %cst_268 = arith.constant dense<0.000000e+00> : vector<2x128xf32>
    %728 = tpu.matmul %726, %666, %cst_268 {dimension_numbers = #tpu.dot_dimension_numbers<[1], [0], [0], [1], [0, 0, 1, 1], [], []>} : vector<2x32xf32>, vector<32x128xf32>, vector<2x128xf32> -> vector<2x128xf32>
    %729 = arith.addf %727, %728 : vector<2x128xf32>
    %cst_269 = arith.constant 5.000000e-01 : f32
    %730 = vector.broadcast %cst_269 : f32 to vector<2x128xf32>
    %731 = arith.mulf %730, %729 : vector<2x128xf32>
    %732 = math.tanh %731 : vector<2x128xf32>
    %cst_270 = arith.constant 1.000000e+00 : f32
    %733 = vector.broadcast %cst_270 : f32 to vector<2x128xf32>
    %734 = arith.addf %732, %733 : vector<2x128xf32>
    %cst_271 = arith.constant 5.000000e-01 : f32
    %735 = vector.broadcast %cst_271 : f32 to vector<2x128xf32>
    %736 = arith.mulf %735, %734 : vector<2x128xf32>
    %737 = math.tanh %729 : vector<2x128xf32>
    %738 = vector.extract_strided_slice %736 {offsets = [0, 0], sizes = [2, 32], strides = [1, 1]} : vector<2x128xf32> to vector<2x32xf32>
    %739 = vector.extract_strided_slice %736 {offsets = [0, 32], sizes = [2, 32], strides = [1, 1]} : vector<2x128xf32> to vector<2x32xf32>
    %740 = vector.extract_strided_slice %736 {offsets = [0, 96], sizes = [2, 32], strides = [1, 1]} : vector<2x128xf32> to vector<2x32xf32>
    %741 = vector.extract_strided_slice %737 {offsets = [0, 64], sizes = [2, 32], strides = [1, 1]} : vector<2x128xf32> to vector<2x32xf32>
    %742 = arith.mulf %739, %724 : vector<2x32xf32>
    %743 = arith.mulf %738, %741 : vector<2x32xf32>
    %744 = arith.addf %742, %743 : vector<2x32xf32>
    %745 = math.tanh %744 : vector<2x32xf32>
    %746 = arith.mulf %740, %745 : vector<2x32xf32>
    %c0_272 = arith.constant 0 : index
    %c0_273 = arith.constant 0 : index
    %747 = vector.load %arg8[%c0_272, %c0_273] : memref<32x128xf32, #tpu.memory_space<vmem>>, vector<32x128xf32>
    %c0_274 = arith.constant 0 : index
    %c0_275 = arith.constant 0 : index
    %748 = vector.load %arg9[%c0_274, %c0_275] : memref<32x128xf32, #tpu.memory_space<vmem>>, vector<32x128xf32>
    %c0_276 = arith.constant 0 : index
    %c0_277 = arith.constant 0 : index
    %749 = vector.load %arg10[%c0_276, %c0_277] : memref<1x128xf32, #tpu.memory_space<vmem>>, vector<1x128xf32>
    %750 = tpu.concatenate %686, %706, %726, %746 in 0 : vector<2x32xf32>, vector<2x32xf32>, vector<2x32xf32>, vector<2x32xf32> -> vector<8x32xf32>
    %cst_278 = arith.constant dense<0.000000e+00> : vector<8x128xf32>
    %751 = tpu.matmul %750, %747, %cst_278 {dimension_numbers = #tpu.dot_dimension_numbers<[1], [0], [0], [1], [0, 0, 1, 1], [], []>} : vector<8x32xf32>, vector<32x128xf32>, vector<8x128xf32> -> vector<8x128xf32>
    %752 = vector.broadcast %749 : vector<1x128xf32> to vector<8x128xf32>
    %753 = arith.addf %751, %752 : vector<8x128xf32>
    %754 = vector.extract_strided_slice %753 {offsets = [0, 0], sizes = [2, 128], strides = [1, 1]} : vector<8x128xf32> to vector<2x128xf32>
    %cst_279 = arith.constant 5.000000e-01 : f32
    %755 = vector.broadcast %cst_279 : f32 to vector<2x128xf32>
    %756 = arith.mulf %755, %754 : vector<2x128xf32>
    %757 = math.tanh %756 : vector<2x128xf32>
    %cst_280 = arith.constant 1.000000e+00 : f32
    %758 = vector.broadcast %cst_280 : f32 to vector<2x128xf32>
    %759 = arith.addf %757, %758 : vector<2x128xf32>
    %cst_281 = arith.constant 5.000000e-01 : f32
    %760 = vector.broadcast %cst_281 : f32 to vector<2x128xf32>
    %761 = arith.mulf %760, %759 : vector<2x128xf32>
    %762 = math.tanh %754 : vector<2x128xf32>
    %763 = vector.extract_strided_slice %761 {offsets = [0, 0], sizes = [2, 32], strides = [1, 1]} : vector<2x128xf32> to vector<2x32xf32>
    %764 = vector.extract_strided_slice %761 {offsets = [0, 96], sizes = [2, 32], strides = [1, 1]} : vector<2x128xf32> to vector<2x32xf32>
    %765 = vector.extract_strided_slice %762 {offsets = [0, 64], sizes = [2, 32], strides = [1, 1]} : vector<2x128xf32> to vector<2x32xf32>
    %766 = arith.mulf %763, %765 : vector<2x32xf32>
    %767 = math.tanh %766 : vector<2x32xf32>
    %768 = arith.mulf %764, %767 : vector<2x32xf32>
    %769 = vector.extract_strided_slice %753 {offsets = [2, 0], sizes = [2, 128], strides = [1, 1]} : vector<8x128xf32> to vector<2x128xf32>
    %cst_282 = arith.constant dense<0.000000e+00> : vector<2x128xf32>
    %770 = tpu.matmul %768, %748, %cst_282 {dimension_numbers = #tpu.dot_dimension_numbers<[1], [0], [0], [1], [0, 0, 1, 1], [], []>} : vector<2x32xf32>, vector<32x128xf32>, vector<2x128xf32> -> vector<2x128xf32>
    %771 = arith.addf %769, %770 : vector<2x128xf32>
    %cst_283 = arith.constant 5.000000e-01 : f32
    %772 = vector.broadcast %cst_283 : f32 to vector<2x128xf32>
    %773 = arith.mulf %772, %771 : vector<2x128xf32>
    %774 = math.tanh %773 : vector<2x128xf32>
    %cst_284 = arith.constant 1.000000e+00 : f32
    %775 = vector.broadcast %cst_284 : f32 to vector<2x128xf32>
    %776 = arith.addf %774, %775 : vector<2x128xf32>
    %cst_285 = arith.constant 5.000000e-01 : f32
    %777 = vector.broadcast %cst_285 : f32 to vector<2x128xf32>
    %778 = arith.mulf %777, %776 : vector<2x128xf32>
    %779 = math.tanh %771 : vector<2x128xf32>
    %780 = vector.extract_strided_slice %778 {offsets = [0, 0], sizes = [2, 32], strides = [1, 1]} : vector<2x128xf32> to vector<2x32xf32>
    %781 = vector.extract_strided_slice %778 {offsets = [0, 32], sizes = [2, 32], strides = [1, 1]} : vector<2x128xf32> to vector<2x32xf32>
    %782 = vector.extract_strided_slice %778 {offsets = [0, 96], sizes = [2, 32], strides = [1, 1]} : vector<2x128xf32> to vector<2x32xf32>
    %783 = vector.extract_strided_slice %779 {offsets = [0, 64], sizes = [2, 32], strides = [1, 1]} : vector<2x128xf32> to vector<2x32xf32>
    %784 = arith.mulf %781, %766 : vector<2x32xf32>
    %785 = arith.mulf %780, %783 : vector<2x32xf32>
    %786 = arith.addf %784, %785 : vector<2x32xf32>
    %787 = math.tanh %786 : vector<2x32xf32>
    %788 = arith.mulf %782, %787 : vector<2x32xf32>
    %789 = vector.extract_strided_slice %753 {offsets = [4, 0], sizes = [2, 128], strides = [1, 1]} : vector<8x128xf32> to vector<2x128xf32>
    %cst_286 = arith.constant dense<0.000000e+00> : vector<2x128xf32>
    %790 = tpu.matmul %788, %748, %cst_286 {dimension_numbers = #tpu.dot_dimension_numbers<[1], [0], [0], [1], [0, 0, 1, 1], [], []>} : vector<2x32xf32>, vector<32x128xf32>, vector<2x128xf32> -> vector<2x128xf32>
    %791 = arith.addf %789, %790 : vector<2x128xf32>
    %cst_287 = arith.constant 5.000000e-01 : f32
    %792 = vector.broadcast %cst_287 : f32 to vector<2x128xf32>
    %793 = arith.mulf %792, %791 : vector<2x128xf32>
    %794 = math.tanh %793 : vector<2x128xf32>
    %cst_288 = arith.constant 1.000000e+00 : f32
    %795 = vector.broadcast %cst_288 : f32 to vector<2x128xf32>
    %796 = arith.addf %794, %795 : vector<2x128xf32>
    %cst_289 = arith.constant 5.000000e-01 : f32
    %797 = vector.broadcast %cst_289 : f32 to vector<2x128xf32>
    %798 = arith.mulf %797, %796 : vector<2x128xf32>
    %799 = math.tanh %791 : vector<2x128xf32>
    %800 = vector.extract_strided_slice %798 {offsets = [0, 0], sizes = [2, 32], strides = [1, 1]} : vector<2x128xf32> to vector<2x32xf32>
    %801 = vector.extract_strided_slice %798 {offsets = [0, 32], sizes = [2, 32], strides = [1, 1]} : vector<2x128xf32> to vector<2x32xf32>
    %802 = vector.extract_strided_slice %798 {offsets = [0, 96], sizes = [2, 32], strides = [1, 1]} : vector<2x128xf32> to vector<2x32xf32>
    %803 = vector.extract_strided_slice %799 {offsets = [0, 64], sizes = [2, 32], strides = [1, 1]} : vector<2x128xf32> to vector<2x32xf32>
    %804 = arith.mulf %801, %786 : vector<2x32xf32>
    %805 = arith.mulf %800, %803 : vector<2x32xf32>
    %806 = arith.addf %804, %805 : vector<2x32xf32>
    %807 = math.tanh %806 : vector<2x32xf32>
    %808 = arith.mulf %802, %807 : vector<2x32xf32>
    %809 = vector.extract_strided_slice %753 {offsets = [6, 0], sizes = [2, 128], strides = [1, 1]} : vector<8x128xf32> to vector<2x128xf32>
    %cst_290 = arith.constant dense<0.000000e+00> : vector<2x128xf32>
    %810 = tpu.matmul %808, %748, %cst_290 {dimension_numbers = #tpu.dot_dimension_numbers<[1], [0], [0], [1], [0, 0, 1, 1], [], []>} : vector<2x32xf32>, vector<32x128xf32>, vector<2x128xf32> -> vector<2x128xf32>
    %811 = arith.addf %809, %810 : vector<2x128xf32>
    %cst_291 = arith.constant 5.000000e-01 : f32
    %812 = vector.broadcast %cst_291 : f32 to vector<2x128xf32>
    %813 = arith.mulf %812, %811 : vector<2x128xf32>
    %814 = math.tanh %813 : vector<2x128xf32>
    %cst_292 = arith.constant 1.000000e+00 : f32
    %815 = vector.broadcast %cst_292 : f32 to vector<2x128xf32>
    %816 = arith.addf %814, %815 : vector<2x128xf32>
    %cst_293 = arith.constant 5.000000e-01 : f32
    %817 = vector.broadcast %cst_293 : f32 to vector<2x128xf32>
    %818 = arith.mulf %817, %816 : vector<2x128xf32>
    %819 = math.tanh %811 : vector<2x128xf32>
    %820 = vector.extract_strided_slice %818 {offsets = [0, 0], sizes = [2, 32], strides = [1, 1]} : vector<2x128xf32> to vector<2x32xf32>
    %821 = vector.extract_strided_slice %818 {offsets = [0, 32], sizes = [2, 32], strides = [1, 1]} : vector<2x128xf32> to vector<2x32xf32>
    %822 = vector.extract_strided_slice %818 {offsets = [0, 96], sizes = [2, 32], strides = [1, 1]} : vector<2x128xf32> to vector<2x32xf32>
    %823 = vector.extract_strided_slice %819 {offsets = [0, 64], sizes = [2, 32], strides = [1, 1]} : vector<2x128xf32> to vector<2x32xf32>
    %824 = arith.mulf %821, %806 : vector<2x32xf32>
    %825 = arith.mulf %820, %823 : vector<2x32xf32>
    %826 = arith.addf %824, %825 : vector<2x32xf32>
    %827 = math.tanh %826 : vector<2x32xf32>
    %828 = arith.mulf %822, %827 : vector<2x32xf32>
    %c0_294 = arith.constant 0 : index
    %c0_295 = arith.constant 0 : index
    %829 = vector.load %arg11[%c0_294, %c0_295] : memref<32x8xf32, #tpu.memory_space<vmem>>, vector<32x8xf32>
    %c0_296 = arith.constant 0 : index
    %c0_297 = arith.constant 0 : index
    %830 = vector.load %arg12[%c0_296, %c0_297] : memref<1x8xf32, #tpu.memory_space<vmem>>, vector<1x8xf32>
    %cst_298 = arith.constant dense<0.000000e+00> : vector<2x8xf32>
    %831 = tpu.matmul %768, %829, %cst_298 {dimension_numbers = #tpu.dot_dimension_numbers<[1], [0], [0], [1], [0, 0, 1, 1], [], []>} : vector<2x32xf32>, vector<32x8xf32>, vector<2x8xf32> -> vector<2x8xf32>
    %832 = vector.broadcast %830 : vector<1x8xf32> to vector<2x8xf32>
    %833 = arith.addf %831, %832 : vector<2x8xf32>
    %cst_299 = arith.constant dense<0.000000e+00> : vector<2x8xf32>
    %834 = tpu.matmul %788, %829, %cst_299 {dimension_numbers = #tpu.dot_dimension_numbers<[1], [0], [0], [1], [0, 0, 1, 1], [], []>} : vector<2x32xf32>, vector<32x8xf32>, vector<2x8xf32> -> vector<2x8xf32>
    %835 = vector.broadcast %830 : vector<1x8xf32> to vector<2x8xf32>
    %836 = arith.addf %834, %835 : vector<2x8xf32>
    %cst_300 = arith.constant dense<0.000000e+00> : vector<2x8xf32>
    %837 = tpu.matmul %808, %829, %cst_300 {dimension_numbers = #tpu.dot_dimension_numbers<[1], [0], [0], [1], [0, 0, 1, 1], [], []>} : vector<2x32xf32>, vector<32x8xf32>, vector<2x8xf32> -> vector<2x8xf32>
    %838 = vector.broadcast %830 : vector<1x8xf32> to vector<2x8xf32>
    %839 = arith.addf %837, %838 : vector<2x8xf32>
    %cst_301 = arith.constant dense<0.000000e+00> : vector<2x8xf32>
    %840 = tpu.matmul %828, %829, %cst_301 {dimension_numbers = #tpu.dot_dimension_numbers<[1], [0], [0], [1], [0, 0, 1, 1], [], []>} : vector<2x32xf32>, vector<32x8xf32>, vector<2x8xf32> -> vector<2x8xf32>
    %841 = vector.broadcast %830 : vector<1x8xf32> to vector<2x8xf32>
    %842 = arith.addf %840, %841 : vector<2x8xf32>
    %843 = tpu.concatenate %833, %836, %839, %842 in 1 : vector<2x8xf32>, vector<2x8xf32>, vector<2x8xf32>, vector<2x8xf32> -> vector<2x32xf32>
    %c0_302 = arith.constant 0 : index
    %c0_303 = arith.constant 0 : index
    %844 = vector.load %arg13[%c0_302, %c0_303] : memref<2x32xf32, #tpu.memory_space<vmem>>, vector<2x32xf32>
    tpu.vector_store %arg13[%c0_302, %c0_303], %843 {strides = array<i32>} : memref<2x32xf32, #tpu.memory_space<vmem>>, vector<2x32xf32>,
    return
  }
}

</mosaic_0001>

<llo_original>
// kernel: cnn_lstm_forward.1
$region0: #{cnn_lstm_forward.1}
  #allocation0 [shape = 'u32[]', space=smem, size = 0x4, offset = 0x4, fixed_abs, tag = 'smem constant byte address 0x4 - core index']
  #allocation1 [shape = 'u32[144,128]{1,0:T(1,128)}', space=vmem, size = 0x12000, scoped, tag = 'internal scratch']
  %s0 = inlined_call_operand.vmem [shape: f32[2,16,16], index: 0, kind: input, shape index: {}]
  %s1 = inlined_call_operand.vmem [shape: f32[4,4], index: 1, kind: input, shape index: {}]
  %s2 = inlined_call_operand.vmem [shape: f32[1,4], index: 2, kind: input, shape index: {}]
  %s3 = inlined_call_operand.vmem [shape: f32[4,16], index: 3, kind: input, shape index: {}]
  %s4 = inlined_call_operand.vmem [shape: f32[1,4], index: 4, kind: input, shape index: {}]
  %s5 = inlined_call_operand.hbm [shape: f32[16,128], index: 5, kind: input, shape index: {}]
  %s6 = inlined_call_operand.hbm [shape: f32[32,128], index: 6, kind: input, shape index: {}]
  %s7 = inlined_call_operand.hbm [shape: f32[1,128], index: 7, kind: input, shape index: {}]
  %s8 = inlined_call_operand.vmem [shape: f32[32,128], index: 8, kind: input, shape index: {}]
  %s9 = inlined_call_operand.hbm [shape: f32[32,128], index: 9, kind: input, shape index: {}]
  %s10 = inlined_call_operand.vmem [shape: f32[1,128], index: 10, kind: input, shape index: {}]
  %s11 = inlined_call_operand.vmem [shape: f32[32,8], index: 11, kind: input, shape index: {}]
  %s12 = inlined_call_operand.hbm [shape: f32[1,8], index: 12, kind: input, shape index: {}]
  %s13 = inlined_call_operand.vmem [shape: f32[2,32], index: 13, kind: output, shape index: {}]
  %s14 = sld [smem:[#allocation0]]
  $region98: #{cnn_lstm_forward.1} parent=0
    _
  %s16 = ssub.s32 1, %s14
  %s17 = scalar_select 0, %s16, %s14
  $region1: #{cnn_lstm_forward.1} parent=0
    #allocation2 [shape = 'u8[2048]{0}', space=smem, size = 0x800, scoped, tag = 'input window, operand 1, single buffered']
    #allocation3 [shape = 's32[1]{0}', space=sflag, size = 0x4, scoped, tag = 'scoped memory for cnn_lstm_forward.1']
    #allocation4 [shape = 's32[1]{0}', space=sflag, size = 0x4, scoped, tag = 'scoped memory for cnn_lstm_forward.1']
    #allocation5 [shape = 'u8[512]{0}', space=smem, size = 0x200, scoped, tag = 'input window, operand 2, single buffered']
    #allocation6 [shape = 's32[1]{0}', space=sflag, size = 0x4, scoped, tag = 'scoped memory for cnn_lstm_forward.1']
    #allocation7 [shape = 'u8[2048]{0}', space=smem, size = 0x800, scoped, tag = 'input window, operand 3, single buffered']
    #allocation8 [shape = 'u8[512]{0}', space=smem, size = 0x200, scoped, tag = 'input window, operand 4, single buffered']
    #allocation9 [shape = 's32[1]{0}', space=sflag, size = 0x4, scoped, tag = 'scoped memory for cnn_lstm_forward.1']
    #allocation10 [shape = 'u8[8192]{0}', space=vmem, size = 0x2000, scoped, tag = 'input window, operand 5, single buffered']
    #allocation11 [shape = 'u8[16384]{0}', space=vmem, size = 0x4000, scoped, tag = 'input window, operand 6, single buffered']
    #allocation12 [shape = 's32[1]{0}', space=sflag, size = 0x4, scoped, tag = 'scoped memory for cnn_lstm_forward.1']
    #allocation13 [shape = 'u8[512]{0}', space=vmem, size = 0x400, scoped, tag = 'input window, operand 7, single buffered']
    #allocation14 [shape = 'u8[16384]{0}', space=vmem, size = 0x4000, scoped, tag = 'input window, operand 9, single buffered']
    #allocation15 [shape = 's32[1]{0}', space=sflag, size = 0x4, scoped, tag = 'scoped memory for cnn_lstm_forward.1']
    #allocation16 [shape = 'u8[512]{0}', space=vmem, size = 0x400, scoped, tag = 'input window, operand 12, single buffered']
    %18 = vsyncpa [#allocation4], 0
    %19 = vsyncpa [#allocation6], 0
    %20 = vsyncpa [#allocation9], 0
    %21 = vsyncpa [#allocation3], 0
    %22 = vsyncpa [#allocation12], 0
    %23 = vsyncpa [#allocation15], 0
    // Predicated region
    $region2: #{cnn_lstm_forward.1} parent=1 // pred_check
      _
    $region3: #{cnn_lstm_forward.1} parent=1 // pred_check_branch
      %25 = sbr.rel (0) target = $region5
    $region4: #{cnn_lstm_forward.1} parent=1 // pred_region
      _
    $region5: #{cnn_lstm_forward.1} parent=1 // pred_fallthru
      _
    // Predicated region
    $region6: #{cnn_lstm_forward.1} parent=1 // pred_check
      _
    $region7: #{cnn_lstm_forward.1} parent=1 // pred_check_branch
      %27 = sbr.rel (0) target = $region9
    $region8: #{cnn_lstm_forward.1} parent=1 // pred_region
      %s29 = ssub.s32 64, 64
      %30 = vsyncadd [#allocation4], %s29
      %s32 = sshll.u32 %s1, 4
      %s33 = int_to_ptr.vmem [resolvable:$true] %s32
      %35 = dma.vmem_to_smem %s33, 64, [#allocation2], [#allocation4]
    $region9: #{cnn_lstm_forward.1} parent=1 // pred_fallthru
      _
    // Predicated region
    $region10: #{cnn_lstm_forward.1} parent=1 // pred_check
      _
    $region11: #{cnn_lstm_forward.1} parent=1 // pred_check_branch
      %37 = sbr.rel (0) target = $region13
    $region12: #{cnn_lstm_forward.1} parent=1 // pred_region
      %s39 = ssub.s32 16, 16
      %40 = vsyncadd [#allocation6], %s39
      %s42 = sshll.u32 %s2, 4
      %s43 = int_to_ptr.vmem [resolvable:$true] %s42
      %45 = dma.vmem_to_smem %s43, 16, [#allocation5], [#allocation6]
    $region13: #{cnn_lstm_forward.1} parent=1 // pred_fallthru
      _
    // Predicated region
    $region14: #{cnn_lstm_forward.1} parent=1 // pred_check
      _
    $region15: #{cnn_lstm_forward.1} parent=1 // pred_check_branch
      %47 = sbr.rel (0) target = $region17
    $region16: #{cnn_lstm_forward.1} parent=1 // pred_region
      %s49 = ssub.s32 64, 64
      %50 = vsyncadd [#allocation6], %s49
      %s52 = sshll.u32 %s3, 4
      %s53 = int_to_ptr.vmem [resolvable:$true] %s52
      %55 = dma.vmem_to_smem %s53, 64, [#allocation7], [#allocation6]
    $region17: #{cnn_lstm_forward.1} parent=1 // pred_fallthru
      _
    // Predicated region
    $region18: #{cnn_lstm_forward.1} parent=1 // pred_check
      _
    $region19: #{cnn_lstm_forward.1} parent=1 // pred_check_branch
      %57 = sbr.rel (0) target = $region21
    $region20: #{cnn_lstm_forward.1} parent=1 // pred_region
      %s59 = ssub.s32 16, 16
      %60 = vsyncadd [#allocation9], %s59
      %s62 = sshll.u32 %s4, 4
      %s63 = int_to_ptr.vmem [resolvable:$true] %s62
      %65 = dma.vmem_to_smem %s63, 16, [#allocation8], [#allocation9]
    $region21: #{cnn_lstm_forward.1} parent=1 // pred_fallthru
      _
    // Predicated region
    $region22: #{cnn_lstm_forward.1} parent=1 // pred_check
      _
    $region23: #{cnn_lstm_forward.1} parent=1 // pred_check_branch
      %67 = sbr.rel (0) target = $region25
    $region24: #{cnn_lstm_forward.1} parent=1 // pred_region
      %s69 = ssub.s32 256, 256
      %70 = vsyncadd [#allocation3], %s69
      %s71 = sshll.u32 [#allocation10], 4
      %s72 = int_to_ptr.vmem [resolvable:$true] %s71
      %77 = dma.hbm_to_vmem [thread:$0]  %s5, 256, %s72, [#allocation3], 128, 128, 8
    $region25: #{cnn_lstm_forward.1} parent=1 // pred_fallthru
      _
    // Predicated region
    $region26: #{cnn_lstm_forward.1} parent=1 // pred_check
      _
    $region27: #{cnn_lstm_forward.1} parent=1 // pred_check_branch
      %79 = sbr.rel (0) target = $region29
    $region28: #{cnn_lstm_forward.1} parent=1 // pred_region
      %s81 = ssub.s32 512, 512
      %82 = vsyncadd [#allocation12], %s81
      %s83 = sshll.u32 [#allocation11], 4
      %s84 = int_to_ptr.vmem [resolvable:$true] %s83
      %89 = dma.hbm_to_vmem [thread:$0]  %s6, 512, %s84, [#allocation12], 128, 128, 8
    $region29: #{cnn_lstm_forward.1} parent=1 // pred_fallthru
      _
    // Predicated region
    $region30: #{cnn_lstm_forward.1} parent=1 // pred_check
      _
    $region31: #{cnn_lstm_forward.1} parent=1 // pred_check_branch
      %91 = sbr.rel (0) target = $region33
    $region32: #{cnn_lstm_forward.1} parent=1 // pred_region
      %s93 = ssub.s32 16, 16
      %94 = vsyncadd [#allocation12], %s93
      %s96 = sshll.u32 [#allocation13], 4
      %s97 = int_to_ptr.vmem [resolvable:$true] %s96
      %99 = dma.hbm_to_vmem [thread:$0]  %s7, 16, %s97, [#allocation12]
    $region33: #{cnn_lstm_forward.1} parent=1 // pred_fallthru
      _
    // Predicated region
    $region34: #{cnn_lstm_forward.1} parent=1 // pred_check
      _
    $region35: #{cnn_lstm_forward.1} parent=1 // pred_check_branch
      %101 = sbr.rel (0) target = $region37
    $region36: #{cnn_lstm_forward.1} parent=1 // pred_region
      _
    $region37: #{cnn_lstm_forward.1} parent=1 // pred_fallthru
      _
    // Predicated region
    $region38: #{cnn_lstm_forward.1} parent=1 // pred_check
      _
    $region39: #{cnn_lstm_forward.1} parent=1 // pred_check_branch
      %103 = sbr.rel (0) target = $region41
    $region40: #{cnn_lstm_forward.1} parent=1 // pred_region
      %s105 = ssub.s32 512, 512
      %106 = vsyncadd [#allocation15], %s105
      %s107 = sshll.u32 [#allocation14], 4
      %s108 = int_to_ptr.vmem [resolvable:$true] %s107
      %113 = dma.hbm_to_vmem [thread:$0]  %s9, 512, %s108, [#allocation15], 128, 128, 8
    $region41: #{cnn_lstm_forward.1} parent=1 // pred_fallthru
      _
    // Predicated region
    $region42: #{cnn_lstm_forward.1} parent=1 // pred_check
      _
    $region43: #{cnn_lstm_forward.1} parent=1 // pred_check_branch
      %115 = sbr.rel (0) target = $region45
    $region44: #{cnn_lstm_forward.1} parent=1 // pred_region
      _
    $region45: #{cnn_lstm_forward.1} parent=1 // pred_fallthru
      _
    // Predicated region
    $region46: #{cnn_lstm_forward.1} parent=1 // pred_check
      _
    $region47: #{cnn_lstm_forward.1} parent=1 // pred_check_branch
      %117 = sbr.rel (0) target = $region49
    $region48: #{cnn_lstm_forward.1} parent=1 // pred_region
      _
    $region49: #{cnn_lstm_forward.1} parent=1 // pred_fallthru
      _
    // Predicated region
    $region50: #{cnn_lstm_forward.1} parent=1 // pred_check
      _
    $region51: #{cnn_lstm_forward.1} parent=1 // pred_check_branch
      %119 = sbr.rel (0) target = $region53
    $region52: #{cnn_lstm_forward.1} parent=1 // pred_region
      %s121 = ssub.s32 16, 16
      %122 = vsyncadd [#allocation15], %s121
      %s124 = sshll.u32 [#allocation16], 4
      %s125 = int_to_ptr.vmem [resolvable:$true] %s124
      %127 = dma.hbm_to_vmem [thread:$0]  %s12, 16, %s125, [#allocation15]
    $region53: #{cnn_lstm_forward.1} parent=1 // pred_fallthru
      _
    // Predicated region
    $region54: #{cnn_lstm_forward.1} parent=1 // pred_check
      _
    $region55: #{cnn_lstm_forward.1} parent=1 // pred_check_branch
      %129 = sbr.rel (0) target = $region57
    $region56: #{cnn_lstm_forward.1} parent=1 // pred_region
      %130 = dma.done [#allocation4], 64
    $region57: #{cnn_lstm_forward.1} parent=1 // pred_fallthru
      _
    // Predicated region
    $region58: #{cnn_lstm_forward.1} parent=1 // pred_check
      _
    $region59: #{cnn_lstm_forward.1} parent=1 // pred_check_branch
      %132 = sbr.rel (0) target = $region61
    $region60: #{cnn_lstm_forward.1} parent=1 // pred_region
      %133 = dma.done [#allocation6], 16
    $region61: #{cnn_lstm_forward.1} parent=1 // pred_fallthru
      _
    // Predicated region
    $region62: #{cnn_lstm_forward.1} parent=1 // pred_check
      _
    $region63: #{cnn_lstm_forward.1} parent=1 // pred_check_branch
      %135 = sbr.rel (0) target = $region65
    $region64: #{cnn_lstm_forward.1} parent=1 // pred_region
      %136 = dma.done [#allocation6], 64
    $region65: #{cnn_lstm_forward.1} parent=1 // pred_fallthru
      _
    // Predicated region
    $region66: #{cnn_lstm_forward.1} parent=1 // pred_check
      _
    $region67: #{cnn_lstm_forward.1} parent=1 // pred_check_branch
      %138 = sbr.rel (0) target = $region69
    $region68: #{cnn_lstm_forward.1} parent=1 // pred_region
      %139 = dma.done [#allocation9], 16
    $region69: #{cnn_lstm_forward.1} parent=1 // pred_fallthru
      _
    // Predicated region
    $region70: #{cnn_lstm_forward.1} parent=1 // pred_check
      _
    $region71: #{cnn_lstm_forward.1} parent=1 // pred_check_branch
      %141 = sbr.rel (0) target = $region73
    $region72: #{cnn_lstm_forward.1} parent=1 // pred_region
      %142 = dma.done [#allocation3], 256
    $region73: #{cnn_lstm_forward.1} parent=1 // pred_fallthru
      _
    // Predicated region
    $region74: #{cnn_lstm_forward.1} parent=1 // pred_check
      _
    $region75: #{cnn_lstm_forward.1} parent=1 // pred_check_branch
      %144 = sbr.rel (0) target = $region77
    $region76: #{cnn_lstm_forward.1} parent=1 // pred_region
      %145 = dma.done [#allocation12], 512
    $region77: #{cnn_lstm_forward.1} parent=1 // pred_fallthru
      _
    // Predicated region
    $region78: #{cnn_lstm_forward.1} parent=1 // pred_check
      _
    $region79: #{cnn_lstm_forward.1} parent=1 // pred_check_branch
      %147 = sbr.rel (0) target = $region81
    $region80: #{cnn_lstm_forward.1} parent=1 // pred_region
      %148 = dma.done [#allocation12], 16
    $region81: #{cnn_lstm_forward.1} parent=1 // pred_fallthru
      _
    // Predicated region
    $region82: #{cnn_lstm_forward.1} parent=1 // pred_check
      _
    $region83: #{cnn_lstm_forward.1} parent=1 // pred_check_branch
      %150 = sbr.rel (0) target = $region85
    $region84: #{cnn_lstm_forward.1} parent=1 // pred_region
      %151 = dma.done [#allocation15], 512
    $region85: #{cnn_lstm_forward.1} parent=1 // pred_fallthru
      _
    // Predicated region
    $region86: #{cnn_lstm_forward.1} parent=1 // pred_check
      _
    $region87: #{cnn_lstm_forward.1} parent=1 // pred_check_branch
      %153 = sbr.rel (0) target = $region89
    $region88: #{cnn_lstm_forward.1} parent=1 // pred_region
      %154 = dma.done [#allocation15], 16
    $region89: #{cnn_lstm_forward.1} parent=1 // pred_fallthru
      _
    %155 = sfence
    %v156 = vld [vmem:[%s0] sm:$0xff]
    %v157 = vld [vmem:[%s0 + $0x8] sm:$0xff]
    %v158 = vld [vmem:[%s0 + $0x10] sm:$0xff]
    %v159 = vld [vmem:[%s0 + $0x18] sm:$0xff]
    %s160 = sld [smem:[#allocation2]]
    %v161 = vstv %s160
    %v162 = vmul.f32 %v156, %v161
    %v163 = vmul.f32 %v157, %v161
    %v164 = vmul.f32 %v158, %v161
    %v165 = vmul.f32 %v159, %v161
    %s166 = sld [smem:[#allocation2 + $0x1]]
    %v167 = vstv %s166
    %v168 = vmul.f32 %v156, %v167
    %v169 = vmul.f32 %v157, %v167
    %v170 = vmul.f32 %v158, %v167
    %v171 = vmul.f32 %v159, %v167
    %176 = vrot.lane.b32.xlu0 %v168, 127
    %v177 = vpop.permute.xlu0 %176
    %178 = vrot.lane.b32.xlu0 %v169, 127
    %v179 = vpop.permute.xlu0 %178
    %180 = vrot.lane.b32.xlu0 %v170, 127
    %v181 = vpop.permute.xlu0 %180
    %182 = vrot.lane.b32.xlu0 %v171, 127
    %v183 = vpop.permute.xlu0 %182
    %v188 = vadd.f32 %v162, %v177
    %v189 = vadd.f32 %v163, %v179
    %v190 = vadd.f32 %v164, %v181
    %v191 = vadd.f32 %v165, %v183
    %s192 = sld [smem:[#allocation2 + $0x2]]
    %v193 = vstv %s192
    %v194 = vmul.f32 %v156, %v193
    %v195 = vmul.f32 %v157, %v193
    %v196 = vmul.f32 %v158, %v193
    %v197 = vmul.f32 %v159, %v193
    %vm202 = vcmask 1046528
    %v203 = vrot.slane %v194, 1
    %v204 = vrot.slane %v195, 1
    %v205 = vsel %vm202, %v203, %v204
    %v206 = vrot.slane %v196, 1
    %v207 = vrot.slane %v197, 1
    %v208 = vsel %vm202, %v206, %v207
    %v213 = vadd.f32 %v188, %v205
    %v214 = vadd.f32 %v189, %v204
    %v215 = vadd.f32 %v190, %v208
    %v216 = vadd.f32 %v191, %v207
    %s217 = sld [smem:[#allocation2 + $0x3]]
    %v218 = vstv %s217
    %v219 = vmul.f32 %v156, %v218
    %v220 = vmul.f32 %v157, %v218
    %v221 = vmul.f32 %v158, %v218
    %v222 = vmul.f32 %v159, %v218
    %v227 = vrot.slane %v219, 1
    %v228 = vrot.slane %v220, 1
    %v229 = vsel %vm202, %v227, %v228
    %v230 = vrot.slane %v221, 1
    %v231 = vrot.slane %v222, 1
    %v232 = vsel %vm202, %v230, %v231
    %233 = vrot.lane.b32.xlu0 %v229, 127
    %v234 = vpop.permute.xlu0 %233
    %235 = vrot.lane.b32.xlu0 %v228, 127
    %v236 = vpop.permute.xlu0 %235
    %237 = vrot.lane.b32.xlu0 %v232, 127
    %v238 = vpop.permute.xlu0 %237
    %239 = vrot.lane.b32.xlu0 %v231, 127
    %v240 = vpop.permute.xlu0 %239
    %v245 = vadd.f32 %v213, %v234
    %v246 = vadd.f32 %v214, %v236
    %v247 = vadd.f32 %v215, %v238
    %v248 = vadd.f32 %v216, %v240
    %s249 = sld [smem:[#allocation5]]
    %v250 = vstv %s249
    %v251 = vadd.f32 %v245, %v250
    %v252 = vadd.f32 %v246, %v250
    %v253 = vadd.f32 %v247, %v250
    %v254 = vadd.f32 %v248, %v250
    %v255 = vmax.f32 %v251, 0.0
    %v256 = vmax.f32 %v252, 0.0
    %v257 = vmax.f32 %v253, 0.0
    %v258 = vmax.f32 %v254, 0.0
    %s259 = sld [smem:[#allocation2 + $0x80]]
    %v260 = vstv %s259
    %v261 = vmul.f32 %v156, %v260
    %v262 = vmul.f32 %v157, %v260
    %v263 = vmul.f32 %v158, %v260
    %v264 = vmul.f32 %v159, %v260
    %s265 = sld [smem:[#allocation2 + $0x81]]
    %v266 = vstv %s265
    %v267 = vmul.f32 %v156, %v266
    %v268 = vmul.f32 %v157, %v266
    %v269 = vmul.f32 %v158, %v266
    %v270 = vmul.f32 %v159, %v266
    %275 = vrot.lane.b32.xlu0 %v267, 127
    %v276 = vpop.permute.xlu0 %275
    %277 = vrot.lane.b32.xlu0 %v268, 127
    %v278 = vpop.permute.xlu0 %277
    %279 = vrot.lane.b32.xlu0 %v269, 127
    %v280 = vpop.permute.xlu0 %279
    %281 = vrot.lane.b32.xlu0 %v270, 127
    %v282 = vpop.permute.xlu0 %281
    %v287 = vadd.f32 %v261, %v276
    %v288 = vadd.f32 %v262, %v278
    %v289 = vadd.f32 %v263, %v280
    %v290 = vadd.f32 %v264, %v282
    %s291 = sld [smem:[#allocation2 + $0x82]]
    %v292 = vstv %s291
    %v293 = vmul.f32 %v156, %v292
    %v294 = vmul.f32 %v157, %v292
    %v295 = vmul.f32 %v158, %v292
    %v296 = vmul.f32 %v159, %v292
    %v301 = vrot.slane %v293, 1
    %v302 = vrot.slane %v294, 1
    %v303 = vsel %vm202, %v301, %v302
    %v304 = vrot.slane %v295, 1
    %v305 = vrot.slane %v296, 1
    %v306 = vsel %vm202, %v304, %v305
    %v311 = vadd.f32 %v287, %v303
    %v312 = vadd.f32 %v288, %v302
    %v313 = vadd.f32 %v289, %v306
    %v314 = vadd.f32 %v290, %v305
    %s315 = sld [smem:[#allocation2 + $0x83]]
    %v316 = vstv %s315
    %v317 = vmul.f32 %v156, %v316
    %v318 = vmul.f32 %v157, %v316
    %v319 = vmul.f32 %v158, %v316
    %v320 = vmul.f32 %v159, %v316
    %v325 = vrot.slane %v317, 1
    %v326 = vrot.slane %v318, 1
    %v327 = vsel %vm202, %v325, %v326
    %v328 = vrot.slane %v319, 1
    %v329 = vrot.slane %v320, 1
    %v330 = vsel %vm202, %v328, %v329
    %331 = vrot.lane.b32.xlu0 %v327, 127
    %v332 = vpop.permute.xlu0 %331
    %333 = vrot.lane.b32.xlu0 %v326, 127
    %v334 = vpop.permute.xlu0 %333
    %335 = vrot.lane.b32.xlu0 %v330, 127
    %v336 = vpop.permute.xlu0 %335
    %337 = vrot.lane.b32.xlu0 %v329, 127
    %v338 = vpop.permute.xlu0 %337
    %v343 = vadd.f32 %v311, %v332
    %v344 = vadd.f32 %v312, %v334
    %v345 = vadd.f32 %v313, %v336
    %v346 = vadd.f32 %v314, %v338
    %s347 = sld [smem:[#allocation5 + $0x1]]
    %v348 = vstv %s347
    %v349 = vadd.f32 %v343, %v348
    %v350 = vadd.f32 %v344, %v348
    %v351 = vadd.f32 %v345, %v348
    %v352 = vadd.f32 %v346, %v348
    %v353 = vmax.f32 %v349, 0.0
    %v354 = vmax.f32 %v350, 0.0
    %v355 = vmax.f32 %v351, 0.0
    %v356 = vmax.f32 %v352, 0.0
    %s357 = sld [smem:[#allocation2 + $0x100]]
    %v358 = vstv %s357
    %v359 = vmul.f32 %v156, %v358
    %v360 = vmul.f32 %v157, %v358
    %v361 = vmul.f32 %v158, %v358
    %v362 = vmul.f32 %v159, %v358
    %s363 = sld [smem:[#allocation2 + $0x101]]
    %v364 = vstv %s363
    %v365 = vmul.f32 %v156, %v364
    %v366 = vmul.f32 %v157, %v364
    %v367 = vmul.f32 %v158, %v364
    %v368 = vmul.f32 %v159, %v364
    %373 = vrot.lane.b32.xlu0 %v365, 127
    %v374 = vpop.permute.xlu0 %373
    %375 = vrot.lane.b32.xlu0 %v366, 127
    %v376 = vpop.permute.xlu0 %375
    %377 = vrot.lane.b32.xlu0 %v367, 127
    %v378 = vpop.permute.xlu0 %377
    %379 = vrot.lane.b32.xlu0 %v368, 127
    %v380 = vpop.permute.xlu0 %379
    %v385 = vadd.f32 %v359, %v374
    %v386 = vadd.f32 %v360, %v376
    %v387 = vadd.f32 %v361, %v378
    %v388 = vadd.f32 %v362, %v380
    %s389 = sld [smem:[#allocation2 + $0x102]]
    %v390 = vstv %s389
    %v391 = vmul.f32 %v156, %v390
    %v392 = vmul.f32 %v157, %v390
    %v393 = vmul.f32 %v158, %v390
    %v394 = vmul.f32 %v159, %v390
    %v399 = vrot.slane %v391, 1
    %v400 = vrot.slane %v392, 1
    %v401 = vsel %vm202, %v399, %v400
    %v402 = vrot.slane %v393, 1
    %v403 = vrot.slane %v394, 1
    %v404 = vsel %vm202, %v402, %v403
    %v409 = vadd.f32 %v385, %v401
    %v410 = vadd.f32 %v386, %v400
    %v411 = vadd.f32 %v387, %v404
    %v412 = vadd.f32 %v388, %v403
    %s413 = sld [smem:[#allocation2 + $0x103]]
    %v414 = vstv %s413
    %v415 = vmul.f32 %v156, %v414
    %v416 = vmul.f32 %v157, %v414
    %v417 = vmul.f32 %v158, %v414
    %v418 = vmul.f32 %v159, %v414
    %v423 = vrot.slane %v415, 1
    %v424 = vrot.slane %v416, 1
    %v425 = vsel %vm202, %v423, %v424
    %v426 = vrot.slane %v417, 1
    %v427 = vrot.slane %v418, 1
    %v428 = vsel %vm202, %v426, %v427
    %429 = vrot.lane.b32.xlu0 %v425, 127
    %v430 = vpop.permute.xlu0 %429
    %431 = vrot.lane.b32.xlu0 %v424, 127
    %v432 = vpop.permute.xlu0 %431
    %433 = vrot.lane.b32.xlu0 %v428, 127
    %v434 = vpop.permute.xlu0 %433
    %435 = vrot.lane.b32.xlu0 %v427, 127
    %v436 = vpop.permute.xlu0 %435
    %v441 = vadd.f32 %v409, %v430
    %v442 = vadd.f32 %v410, %v432
    %v443 = vadd.f32 %v411, %v434
    %v444 = vadd.f32 %v412, %v436
    %s445 = sld [smem:[#allocation5 + $0x2]]
    %v446 = vstv %s445
    %v447 = vadd.f32 %v441, %v446
    %v448 = vadd.f32 %v442, %v446
    %v449 = vadd.f32 %v443, %v446
    %v450 = vadd.f32 %v444, %v446
    %v451 = vmax.f32 %v447, 0.0
    %v452 = vmax.f32 %v448, 0.0
    %v453 = vmax.f32 %v449, 0.0
    %v454 = vmax.f32 %v450, 0.0
    %s455 = sld [smem:[#allocation2 + $0x180]]
    %v456 = vstv %s455
    %v457 = vmul.f32 %v156, %v456
    %v458 = vmul.f32 %v157, %v456
    %v459 = vmul.f32 %v158, %v456
    %v460 = vmul.f32 %v159, %v456
    %s461 = sld [smem:[#allocation2 + $0x181]]
    %v462 = vstv %s461
    %v463 = vmul.f32 %v156, %v462
    %v464 = vmul.f32 %v157, %v462
    %v465 = vmul.f32 %v158, %v462
    %v466 = vmul.f32 %v159, %v462
    %471 = vrot.lane.b32.xlu0 %v463, 127
    %v472 = vpop.permute.xlu0 %471
    %473 = vrot.lane.b32.xlu0 %v464, 127
    %v474 = vpop.permute.xlu0 %473
    %475 = vrot.lane.b32.xlu0 %v465, 127
    %v476 = vpop.permute.xlu0 %475
    %477 = vrot.lane.b32.xlu0 %v466, 127
    %v478 = vpop.permute.xlu0 %477
    %v483 = vadd.f32 %v457, %v472
    %v484 = vadd.f32 %v458, %v474
    %v485 = vadd.f32 %v459, %v476
    %v486 = vadd.f32 %v460, %v478
    %s487 = sld [smem:[#allocation2 + $0x182]]
    %v488 = vstv %s487
    %v489 = vmul.f32 %v156, %v488
    %v490 = vmul.f32 %v157, %v488
    %v491 = vmul.f32 %v158, %v488
    %v492 = vmul.f32 %v159, %v488
    %v497 = vrot.slane %v489, 1
    %v498 = vrot.slane %v490, 1
    %v499 = vsel %vm202, %v497, %v498
    %v500 = vrot.slane %v491, 1
    %v501 = vrot.slane %v492, 1
    %v502 = vsel %vm202, %v500, %v501
    %v507 = vadd.f32 %v483, %v499
    %v508 = vadd.f32 %v484, %v498
    %v509 = vadd.f32 %v485, %v502
    %v510 = vadd.f32 %v486, %v501
    %s511 = sld [smem:[#allocation2 + $0x183]]
    %v512 = vstv %s511
    %v513 = vmul.f32 %v156, %v512
    %v514 = vmul.f32 %v157, %v512
    %v515 = vmul.f32 %v158, %v512
    %v516 = vmul.f32 %v159, %v512
    %v521 = vrot.slane %v513, 1
    %v522 = vrot.slane %v514, 1
    %v523 = vsel %vm202, %v521, %v522
    %v524 = vrot.slane %v515, 1
    %v525 = vrot.slane %v516, 1
    %v526 = vsel %vm202, %v524, %v525
    %527 = vrot.lane.b32.xlu0 %v523, 127
    %v528 = vpop.permute.xlu0 %527
    %529 = vrot.lane.b32.xlu0 %v522, 127
    %v530 = vpop.permute.xlu0 %529
    %531 = vrot.lane.b32.xlu0 %v526, 127
    %v532 = vpop.permute.xlu0 %531
    %533 = vrot.lane.b32.xlu0 %v525, 127
    %v534 = vpop.permute.xlu0 %533
    %v539 = vadd.f32 %v507, %v528
    %v540 = vadd.f32 %v508, %v530
    %v541 = vadd.f32 %v509, %v532
    %v542 = vadd.f32 %v510, %v534
    %s543 = sld [smem:[#allocation5 + $0x3]]
    %v544 = vstv %s543
    %v545 = vadd.f32 %v539, %v544
    %v546 = vadd.f32 %v540, %v544
    %v547 = vadd.f32 %v541, %v544
    %v548 = vadd.f32 %v542, %v544
    %v549 = vmax.f32 %v545, 0.0
    %v550 = vmax.f32 %v546, 0.0
    %v551 = vmax.f32 %v547, 0.0
    %v552 = vmax.f32 %v548, 0.0
    %s553 = sld [smem:[#allocation7]]
    %v554 = vstv %s553
    %v555 = vmul.f32 %v255, %v554
    %v556 = vmul.f32 %v256, %v554
    %v557 = vmul.f32 %v257, %v554
    %v558 = vmul.f32 %v258, %v554
    %s559 = sld [smem:[#allocation7 + $0x1]]
    %v560 = vstv %s559
    %v561 = vmul.f32 %v255, %v560
    %v562 = vmul.f32 %v256, %v560
    %v563 = vmul.f32 %v257, %v560
    %v564 = vmul.f32 %v258, %v560
    %569 = vrot.lane.b32.xlu0 %v561, 127
    %v570 = vpop.permute.xlu0 %569
    %571 = vrot.lane.b32.xlu0 %v562, 127
    %v572 = vpop.permute.xlu0 %571
    %573 = vrot.lane.b32.xlu0 %v563, 127
    %v574 = vpop.permute.xlu0 %573
    %575 = vrot.lane.b32.xlu0 %v564, 127
    %v576 = vpop.permute.xlu0 %575
    %v581 = vadd.f32 %v555, %v570
    %v582 = vadd.f32 %v556, %v572
    %v583 = vadd.f32 %v557, %v574
    %v584 = vadd.f32 %v558, %v576
    %s585 = sld [smem:[#allocation7 + $0x2]]
    %v586 = vstv %s585
    %v587 = vmul.f32 %v255, %v586
    %v588 = vmul.f32 %v256, %v586
    %v589 = vmul.f32 %v257, %v586
    %v590 = vmul.f32 %v258, %v586
    %v595 = vrot.slane %v587, 1
    %v596 = vrot.slane %v588, 1
    %v597 = vsel %vm202, %v595, %v596
    %v598 = vrot.slane %v589, 1
    %v599 = vrot.slane %v590, 1
    %v600 = vsel %vm202, %v598, %v599
    %v605 = vadd.f32 %v581, %v597
    %v606 = vadd.f32 %v582, %v596
    %v607 = vadd.f32 %v583, %v600
    %v608 = vadd.f32 %v584, %v599
    %s609 = sld [smem:[#allocation7 + $0x3]]
    %v610 = vstv %s609
    %v611 = vmul.f32 %v255, %v610
    %v612 = vmul.f32 %v256, %v610
    %v613 = vmul.f32 %v257, %v610
    %v614 = vmul.f32 %v258, %v610
    %v619 = vrot.slane %v611, 1
    %v620 = vrot.slane %v612, 1
    %v621 = vsel %vm202, %v619, %v620
    %v622 = vrot.slane %v613, 1
    %v623 = vrot.slane %v614, 1
    %v624 = vsel %vm202, %v622, %v623
    %625 = vrot.lane.b32.xlu0 %v621, 127
    %v626 = vpop.permute.xlu0 %625
    %627 = vrot.lane.b32.xlu0 %v620, 127
    %v628 = vpop.permute.xlu0 %627
    %629 = vrot.lane.b32.xlu0 %v624, 127
    %v630 = vpop.permute.xlu0 %629
    %631 = vrot.lane.b32.xlu0 %v623, 127
    %v632 = vpop.permute.xlu0 %631
    %v637 = vadd.f32 %v605, %v626
    %v638 = vadd.f32 %v606, %v628
    %v639 = vadd.f32 %v607, %v630
    %v640 = vadd.f32 %v608, %v632
    %s641 = sld [smem:[#allocation7 + $0x4]]
    %v642 = vstv %s641
    %v643 = vmul.f32 %v353, %v642
    %v644 = vmul.f32 %v354, %v642
    %v645 = vmul.f32 %v355, %v642
    %v646 = vmul.f32 %v356, %v642
    %v647 = vadd.f32 %v637, %v643
    %v648 = vadd.f32 %v638, %v644
    %v649 = vadd.f32 %v639, %v645
    %v650 = vadd.f32 %v640, %v646
    %s651 = sld [smem:[#allocation7 + $0x5]]
    %v652 = vstv %s651
    %v653 = vmul.f32 %v353, %v652
    %v654 = vmul.f32 %v354, %v652
    %v655 = vmul.f32 %v355, %v652
    %v656 = vmul.f32 %v356, %v652
    %661 = vrot.lane.b32.xlu0 %v653, 127
    %v662 = vpop.permute.xlu0 %661
    %663 = vrot.lane.b32.xlu0 %v654, 127
    %v664 = vpop.permute.xlu0 %663
    %665 = vrot.lane.b32.xlu0 %v655, 127
    %v666 = vpop.permute.xlu0 %665
    %667 = vrot.lane.b32.xlu0 %v656, 127
    %v668 = vpop.permute.xlu0 %667
    %v673 = vadd.f32 %v647, %v662
    %v674 = vadd.f32 %v648, %v664
    %v675 = vadd.f32 %v649, %v666
    %v676 = vadd.f32 %v650, %v668
    %s677 = sld [smem:[#allocation7 + $0x6]]
    %v678 = vstv %s677
    %v679 = vmul.f32 %v353, %v678
    %v680 = vmul.f32 %v354, %v678
    %v681 = vmul.f32 %v355, %v678
    %v682 = vmul.f32 %v356, %v678
    %v687 = vrot.slane %v679, 1
    %v688 = vrot.slane %v680, 1
    %v689 = vsel %vm202, %v687, %v688
    %v690 = vrot.slane %v681, 1
    %v691 = vrot.slane %v682, 1
    %v692 = vsel %vm202, %v690, %v691
    %v697 = vadd.f32 %v673, %v689
    %v698 = vadd.f32 %v674, %v688
    %v699 = vadd.f32 %v675, %v692
    %v700 = vadd.f32 %v676, %v691
    %s701 = sld [smem:[#allocation7 + $0x7]]
    %v702 = vstv %s701
    %v703 = vmul.f32 %v353, %v702
    %v704 = vmul.f32 %v354, %v702
    %v705 = vmul.f32 %v355, %v702
    %v706 = vmul.f32 %v356, %v702
    %v711 = vrot.slane %v703, 1
    %v712 = vrot.slane %v704, 1
    %v713 = vsel %vm202, %v711, %v712
    %v714 = vrot.slane %v705, 1
    %v715 = vrot.slane %v706, 1
    %v716 = vsel %vm202, %v714, %v715
    %717 = vrot.lane.b32.xlu0 %v713, 127
    %v718 = vpop.permute.xlu0 %717
    %719 = vrot.lane.b32.xlu0 %v712, 127
    %v720 = vpop.permute.xlu0 %719
    %721 = vrot.lane.b32.xlu0 %v716, 127
    %v722 = vpop.permute.xlu0 %721
    %723 = vrot.lane.b32.xlu0 %v715, 127
    %v724 = vpop.permute.xlu0 %723
    %v729 = vadd.f32 %v697, %v718
    %v730 = vadd.f32 %v698, %v720
    %v731 = vadd.f32 %v699, %v722
    %v732 = vadd.f32 %v700, %v724
    %s733 = sld [smem:[#allocation7 + $0x8]]
    %v734 = vstv %s733
    %v735 = vmul.f32 %v451, %v734
    %v736 = vmul.f32 %v452, %v734
    %v737 = vmul.f32 %v453, %v734
    %v738 = vmul.f32 %v454, %v734
    %v739 = vadd.f32 %v729, %v735
    %v740 = vadd.f32 %v730, %v736
    %v741 = vadd.f32 %v731, %v737
    %v742 = vadd.f32 %v732, %v738
    %s743 = sld [smem:[#allocation7 + $0x9]]
    %v744 = vstv %s743
    %v745 = vmul.f32 %v451, %v744
    %v746 = vmul.f32 %v452, %v744
    %v747 = vmul.f32 %v453, %v744
    %v748 = vmul.f32 %v454, %v744
    %753 = vrot.lane.b32.xlu0 %v745, 127
    %v754 = vpop.permute.xlu0 %753
    %755 = vrot.lane.b32.xlu0 %v746, 127
    %v756 = vpop.permute.xlu0 %755
    %757 = vrot.lane.b32.xlu0 %v747, 127
    %v758 = vpop.permute.xlu0 %757
    %759 = vrot.lane.b32.xlu0 %v748, 127
    %v760 = vpop.permute.xlu0 %759
    %v765 = vadd.f32 %v739, %v754
    %v766 = vadd.f32 %v740, %v756
    %v767 = vadd.f32 %v741, %v758
    %v768 = vadd.f32 %v742, %v760
    %s769 = sld [smem:[#allocation7 + $0xa]]
    %v770 = vstv %s769
    %v771 = vmul.f32 %v451, %v770
    %v772 = vmul.f32 %v452, %v770
    %v773 = vmul.f32 %v453, %v770
    %v774 = vmul.f32 %v454, %v770
    %v779 = vrot.slane %v771, 1
    %v780 = vrot.slane %v772, 1
    %v781 = vsel %vm202, %v779, %v780
    %v782 = vrot.slane %v773, 1
    %v783 = vrot.slane %v774, 1
    %v784 = vsel %vm202, %v782, %v783
    %v789 = vadd.f32 %v765, %v781
    %v790 = vadd.f32 %v766, %v780
    %v791 = vadd.f32 %v767, %v784
    %v792 = vadd.f32 %v768, %v783
    %s793 = sld [smem:[#allocation7 + $0xb]]
    %v794 = vstv %s793
    %v795 = vmul.f32 %v451, %v794
    %v796 = vmul.f32 %v452, %v794
    %v797 = vmul.f32 %v453, %v794
    %v798 = vmul.f32 %v454, %v794
    %v803 = vrot.slane %v795, 1
    %v804 = vrot.slane %v796, 1
    %v805 = vsel %vm202, %v803, %v804
    %v806 = vrot.slane %v797, 1
    %v807 = vrot.slane %v798, 1
    %v808 = vsel %vm202, %v806, %v807
    %809 = vrot.lane.b32.xlu0 %v805, 127
    %v810 = vpop.permute.xlu0 %809
    %811 = vrot.lane.b32.xlu0 %v804, 127
    %v812 = vpop.permute.xlu0 %811
    %813 = vrot.lane.b32.xlu0 %v808, 127
    %v814 = vpop.permute.xlu0 %813
    %815 = vrot.lane.b32.xlu0 %v807, 127
    %v816 = vpop.permute.xlu0 %815
    %v821 = vadd.f32 %v789, %v810
    %v822 = vadd.f32 %v790, %v812
    %v823 = vadd.f32 %v791, %v814
    %v824 = vadd.f32 %v792, %v816
    %s825 = sld [smem:[#allocation7 + $0xc]]
    %v826 = vstv %s825
    %v827 = vmul.f32 %v549, %v826
    %v828 = vmul.f32 %v550, %v826
    %v829 = vmul.f32 %v551, %v826
    %v830 = vmul.f32 %v552, %v826
    %v831 = vadd.f32 %v821, %v827
    %v832 = vadd.f32 %v822, %v828
    %v833 = vadd.f32 %v823, %v829
    %v834 = vadd.f32 %v824, %v830
    %s835 = sld [smem:[#allocation7 + $0xd]]
    %v836 = vstv %s835
    %v837 = vmul.f32 %v549, %v836
    %v838 = vmul.f32 %v550, %v836
    %v839 = vmul.f32 %v551, %v836
    %v840 = vmul.f32 %v552, %v836
    %845 = vrot.lane.b32.xlu0 %v837, 127
    %v846 = vpop.permute.xlu0 %845
    %847 = vrot.lane.b32.xlu0 %v838, 127
    %v848 = vpop.permute.xlu0 %847
    %849 = vrot.lane.b32.xlu0 %v839, 127
    %v850 = vpop.permute.xlu0 %849
    %851 = vrot.lane.b32.xlu0 %v840, 127
    %v852 = vpop.permute.xlu0 %851
    %v857 = vadd.f32 %v831, %v846
    %v858 = vadd.f32 %v832, %v848
    %v859 = vadd.f32 %v833, %v850
    %v860 = vadd.f32 %v834, %v852
    %s861 = sld [smem:[#allocation7 + $0xe]]
    %v862 = vstv %s861
    %v863 = vmul.f32 %v549, %v862
    %v864 = vmul.f32 %v550, %v862
    %v865 = vmul.f32 %v551, %v862
    %v866 = vmul.f32 %v552, %v862
    %v871 = vrot.slane %v863, 1
    %v872 = vrot.slane %v864, 1
    %v873 = vsel %vm202, %v871, %v872
    %v874 = vrot.slane %v865, 1
    %v875 = vrot.slane %v866, 1
    %v876 = vsel %vm202, %v874, %v875
    %v881 = vadd.f32 %v857, %v873
    %v882 = vadd.f32 %v858, %v872
    %v883 = vadd.f32 %v859, %v876
    %v884 = vadd.f32 %v860, %v875
    %s885 = sld [smem:[#allocation7 + $0xf]]
    %v886 = vstv %s885
    %v887 = vmul.f32 %v549, %v886
    %v888 = vmul.f32 %v550, %v886
    %v889 = vmul.f32 %v551, %v886
    %v890 = vmul.f32 %v552, %v886
    %v895 = vrot.slane %v887, 1
    %v896 = vrot.slane %v888, 1
    %v897 = vsel %vm202, %v895, %v896
    %v898 = vrot.slane %v889, 1
    %v899 = vrot.slane %v890, 1
    %v900 = vsel %vm202, %v898, %v899
    %901 = vrot.lane.b32.xlu0 %v897, 127
    %v902 = vpop.permute.xlu0 %901
    %903 = vrot.lane.b32.xlu0 %v896, 127
    %v904 = vpop.permute.xlu0 %903
    %905 = vrot.lane.b32.xlu0 %v900, 127
    %v906 = vpop.permute.xlu0 %905
    %907 = vrot.lane.b32.xlu0 %v899, 127
    %v908 = vpop.permute.xlu0 %907
    %v913 = vadd.f32 %v881, %v902
    %v914 = vadd.f32 %v882, %v904
    %v915 = vadd.f32 %v883, %v906
    %v916 = vadd.f32 %v884, %v908
    %s917 = sld [smem:[#allocation8]]
    %v918 = vstv %s917
    %v919 = vadd.f32 %v913, %v918
    %v920 = vadd.f32 %v914, %v918
    %v921 = vadd.f32 %v915, %v918
    %v922 = vadd.f32 %v916, %v918
    %v923 = vmax.f32 %v919, 0.0
    %v924 = vmax.f32 %v920, 0.0
    %v925 = vmax.f32 %v921, 0.0
    %v926 = vmax.f32 %v922, 0.0
    %s927 = sld [smem:[#allocation7 + $0x80]]
    %v928 = vstv %s927
    %v929 = vmul.f32 %v255, %v928
    %v930 = vmul.f32 %v256, %v928
    %v931 = vmul.f32 %v257, %v928
    %v932 = vmul.f32 %v258, %v928
    %s933 = sld [smem:[#allocation7 + $0x81]]
    %v934 = vstv %s933
    %v935 = vmul.f32 %v255, %v934
    %v936 = vmul.f32 %v256, %v934
    %v937 = vmul.f32 %v257, %v934
    %v938 = vmul.f32 %v258, %v934
    %943 = vrot.lane.b32.xlu0 %v935, 127
    %v944 = vpop.permute.xlu0 %943
    %945 = vrot.lane.b32.xlu0 %v936, 127
    %v946 = vpop.permute.xlu0 %945
    %947 = vrot.lane.b32.xlu0 %v937, 127
    %v948 = vpop.permute.xlu0 %947
    %949 = vrot.lane.b32.xlu0 %v938, 127
    %v950 = vpop.permute.xlu0 %949
    %v955 = vadd.f32 %v929, %v944
    %v956 = vadd.f32 %v930, %v946
    %v957 = vadd.f32 %v931, %v948
    %v958 = vadd.f32 %v932, %v950
    %s959 = sld [smem:[#allocation7 + $0x82]]
    %v960 = vstv %s959
    %v961 = vmul.f32 %v255, %v960
    %v962 = vmul.f32 %v256, %v960
    %v963 = vmul.f32 %v257, %v960
    %v964 = vmul.f32 %v258, %v960
    %v969 = vrot.slane %v961, 1
    %v970 = vrot.slane %v962, 1
    %v971 = vsel %vm202, %v969, %v970
    %v972 = vrot.slane %v963, 1
    %v973 = vrot.slane %v964, 1
    %v974 = vsel %vm202, %v972, %v973
    %v979 = vadd.f32 %v955, %v971
    %v980 = vadd.f32 %v956, %v970
    %v981 = vadd.f32 %v957, %v974
    %v982 = vadd.f32 %v958, %v973
    %s983 = sld [smem:[#allocation7 + $0x83]]
    %v984 = vstv %s983
    %v985 = vmul.f32 %v255, %v984
    %v986 = vmul.f32 %v256, %v984
    %v987 = vmul.f32 %v257, %v984
    %v988 = vmul.f32 %v258, %v984
    %v993 = vrot.slane %v985, 1
    %v994 = vrot.slane %v986, 1
    %v995 = vsel %vm202, %v993, %v994
    %v996 = vrot.slane %v987, 1
    %v997 = vrot.slane %v988, 1
    %v998 = vsel %vm202, %v996, %v997
    %999 = vrot.lane.b32.xlu0 %v995, 127
    %v1000 = vpop.permute.xlu0 %999
    %1001 = vrot.lane.b32.xlu0 %v994, 127
    %v1002 = vpop.permute.xlu0 %1001
    %1003 = vrot.lane.b32.xlu0 %v998, 127
    %v1004 = vpop.permute.xlu0 %1003
    %1005 = vrot.lane.b32.xlu0 %v997, 127
    %v1006 = vpop.permute.xlu0 %1005
    %v1011 = vadd.f32 %v979, %v1000
    %v1012 = vadd.f32 %v980, %v1002
    %v1013 = vadd.f32 %v981, %v1004
    %v1014 = vadd.f32 %v982, %v1006
    %s1015 = sld [smem:[#allocation7 + $0x84]]
    %v1016 = vstv %s1015
    %v1017 = vmul.f32 %v353, %v1016
    %v1018 = vmul.f32 %v354, %v1016
    %v1019 = vmul.f32 %v355, %v1016
    %v1020 = vmul.f32 %v356, %v1016
    %v1021 = vadd.f32 %v1011, %v1017
    %v1022 = vadd.f32 %v1012, %v1018
    %v1023 = vadd.f32 %v1013, %v1019
    %v1024 = vadd.f32 %v1014, %v1020
    %s1025 = sld [smem:[#allocation7 + $0x85]]
    %v1026 = vstv %s1025
    %v1027 = vmul.f32 %v353, %v1026
    %v1028 = vmul.f32 %v354, %v1026
    %v1029 = vmul.f32 %v355, %v1026
    %v1030 = vmul.f32 %v356, %v1026
    %1035 = vrot.lane.b32.xlu0 %v1027, 127
    %v1036 = vpop.permute.xlu0 %1035
    %1037 = vrot.lane.b32.xlu0 %v1028, 127
    %v1038 = vpop.permute.xlu0 %1037
    %1039 = vrot.lane.b32.xlu0 %v1029, 127
    %v1040 = vpop.permute.xlu0 %1039
    %1041 = vrot.lane.b32.xlu0 %v1030, 127
    %v1042 = vpop.permute.xlu0 %1041
    %v1047 = vadd.f32 %v1021, %v1036
    %v1048 = vadd.f32 %v1022, %v1038
    %v1049 = vadd.f32 %v1023, %v1040
    %v1050 = vadd.f32 %v1024, %v1042
    %s1051 = sld [smem:[#allocation7 + $0x86]]
    %v1052 = vstv %s1051
    %v1053 = vmul.f32 %v353, %v1052
    %v1054 = vmul.f32 %v354, %v1052
    %v1055 = vmul.f32 %v355, %v1052
    %v1056 = vmul.f32 %v356, %v1052
    %v1061 = vrot.slane %v1053, 1
    %v1062 = vrot.slane %v1054, 1
    %v1063 = vsel %vm202, %v1061, %v1062
    %v1064 = vrot.slane %v1055, 1
    %v1065 = vrot.slane %v1056, 1
    %v1066 = vsel %vm202, %v1064, %v1065
    %v1071 = vadd.f32 %v1047, %v1063
    %v1072 = vadd.f32 %v1048, %v1062
    %v1073 = vadd.f32 %v1049, %v1066
    %v1074 = vadd.f32 %v1050, %v1065
    %s1075 = sld [smem:[#allocation7 + $0x87]]
    %v1076 = vstv %s1075
    %v1077 = vmul.f32 %v353, %v1076
    %v1078 = vmul.f32 %v354, %v1076
    %v1079 = vmul.f32 %v355, %v1076
    %v1080 = vmul.f32 %v356, %v1076
    %v1085 = vrot.slane %v1077, 1
    %v1086 = vrot.slane %v1078, 1
    %v1087 = vsel %vm202, %v1085, %v1086
    %v1088 = vrot.slane %v1079, 1
    %v1089 = vrot.slane %v1080, 1
    %v1090 = vsel %vm202, %v1088, %v1089
    %1091 = vrot.lane.b32.xlu0 %v1087, 127
    %v1092 = vpop.permute.xlu0 %1091
    %1093 = vrot.lane.b32.xlu0 %v1086, 127
    %v1094 = vpop.permute.xlu0 %1093
    %1095 = vrot.lane.b32.xlu0 %v1090, 127
    %v1096 = vpop.permute.xlu0 %1095
    %1097 = vrot.lane.b32.xlu0 %v1089, 127
    %v1098 = vpop.permute.xlu0 %1097
    %v1103 = vadd.f32 %v1071, %v1092
    %v1104 = vadd.f32 %v1072, %v1094
    %v1105 = vadd.f32 %v1073, %v1096
    %v1106 = vadd.f32 %v1074, %v1098
    %s1107 = sld [smem:[#allocation7 + $0x88]]
    %v1108 = vstv %s1107
    %v1109 = vmul.f32 %v451, %v1108
    %v1110 = vmul.f32 %v452, %v1108
    %v1111 = vmul.f32 %v453, %v1108
    %v1112 = vmul.f32 %v454, %v1108
    %v1113 = vadd.f32 %v1103, %v1109
    %v1114 = vadd.f32 %v1104, %v1110
    %v1115 = vadd.f32 %v1105, %v1111
    %v1116 = vadd.f32 %v1106, %v1112
    %s1117 = sld [smem:[#allocation7 + $0x89]]
    %v1118 = vstv %s1117
    %v1119 = vmul.f32 %v451, %v1118
    %v1120 = vmul.f32 %v452, %v1118
    %v1121 = vmul.f32 %v453, %v1118
    %v1122 = vmul.f32 %v454, %v1118
    %1127 = vrot.lane.b32.xlu0 %v1119, 127
    %v1128 = vpop.permute.xlu0 %1127
    %1129 = vrot.lane.b32.xlu0 %v1120, 127
    %v1130 = vpop.permute.xlu0 %1129
    %1131 = vrot.lane.b32.xlu0 %v1121, 127
    %v1132 = vpop.permute.xlu0 %1131
    %1133 = vrot.lane.b32.xlu0 %v1122, 127
    %v1134 = vpop.permute.xlu0 %1133
    %v1139 = vadd.f32 %v1113, %v1128
    %v1140 = vadd.f32 %v1114, %v1130
    %v1141 = vadd.f32 %v1115, %v1132
    %v1142 = vadd.f32 %v1116, %v1134
    %s1143 = sld [smem:[#allocation7 + $0x8a]]
    %v1144 = vstv %s1143
    %v1145 = vmul.f32 %v451, %v1144
    %v1146 = vmul.f32 %v452, %v1144
    %v1147 = vmul.f32 %v453, %v1144
    %v1148 = vmul.f32 %v454, %v1144
    %v1153 = vrot.slane %v1145, 1
    %v1154 = vrot.slane %v1146, 1
    %v1155 = vsel %vm202, %v1153, %v1154
    %v1156 = vrot.slane %v1147, 1
    %v1157 = vrot.slane %v1148, 1
    %v1158 = vsel %vm202, %v1156, %v1157
    %v1163 = vadd.f32 %v1139, %v1155
    %v1164 = vadd.f32 %v1140, %v1154
    %v1165 = vadd.f32 %v1141, %v1158
    %v1166 = vadd.f32 %v1142, %v1157
    %s1167 = sld [smem:[#allocation7 + $0x8b]]
    %v1168 = vstv %s1167
    %v1169 = vmul.f32 %v451, %v1168
    %v1170 = vmul.f32 %v452, %v1168
    %v1171 = vmul.f32 %v453, %v1168
    %v1172 = vmul.f32 %v454, %v1168
    %v1177 = vrot.slane %v1169, 1
    %v1178 = vrot.slane %v1170, 1
    %v1179 = vsel %vm202, %v1177, %v1178
    %v1180 = vrot.slane %v1171, 1
    %v1181 = vrot.slane %v1172, 1
    %v1182 = vsel %vm202, %v1180, %v1181
    %1183 = vrot.lane.b32.xlu0 %v1179, 127
    %v1184 = vpop.permute.xlu0 %1183
    %1185 = vrot.lane.b32.xlu0 %v1178, 127
    %v1186 = vpop.permute.xlu0 %1185
    %1187 = vrot.lane.b32.xlu0 %v1182, 127
    %v1188 = vpop.permute.xlu0 %1187
    %1189 = vrot.lane.b32.xlu0 %v1181, 127
    %v1190 = vpop.permute.xlu0 %1189
    %v1195 = vadd.f32 %v1163, %v1184
    %v1196 = vadd.f32 %v1164, %v1186
    %v1197 = vadd.f32 %v1165, %v1188
    %v1198 = vadd.f32 %v1166, %v1190
    %s1199 = sld [smem:[#allocation7 + $0x8c]]
    %v1200 = vstv %s1199
    %v1201 = vmul.f32 %v549, %v1200
    %v1202 = vmul.f32 %v550, %v1200
    %v1203 = vmul.f32 %v551, %v1200
    %v1204 = vmul.f32 %v552, %v1200
    %v1205 = vadd.f32 %v1195, %v1201
    %v1206 = vadd.f32 %v1196, %v1202
    %v1207 = vadd.f32 %v1197, %v1203
    %v1208 = vadd.f32 %v1198, %v1204
    %s1209 = sld [smem:[#allocation7 + $0x8d]]
    %v1210 = vstv %s1209
    %v1211 = vmul.f32 %v549, %v1210
    %v1212 = vmul.f32 %v550, %v1210
    %v1213 = vmul.f32 %v551, %v1210
    %v1214 = vmul.f32 %v552, %v1210
    %1219 = vrot.lane.b32.xlu0 %v1211, 127
    %v1220 = vpop.permute.xlu0 %1219
    %1221 = vrot.lane.b32.xlu0 %v1212, 127
    %v1222 = vpop.permute.xlu0 %1221
    %1223 = vrot.lane.b32.xlu0 %v1213, 127
    %v1224 = vpop.permute.xlu0 %1223
    %1225 = vrot.lane.b32.xlu0 %v1214, 127
    %v1226 = vpop.permute.xlu0 %1225
    %v1231 = vadd.f32 %v1205, %v1220
    %v1232 = vadd.f32 %v1206, %v1222
    %v1233 = vadd.f32 %v1207, %v1224
    %v1234 = vadd.f32 %v1208, %v1226
    %s1235 = sld [smem:[#allocation7 + $0x8e]]
    %v1236 = vstv %s1235
    %v1237 = vmul.f32 %v549, %v1236
    %v1238 = vmul.f32 %v550, %v1236
    %v1239 = vmul.f32 %v551, %v1236
    %v1240 = vmul.f32 %v552, %v1236
    %v1245 = vrot.slane %v1237, 1
    %v1246 = vrot.slane %v1238, 1
    %v1247 = vsel %vm202, %v1245, %v1246
    %v1248 = vrot.slane %v1239, 1
    %v1249 = vrot.slane %v1240, 1
    %v1250 = vsel %vm202, %v1248, %v1249
    %v1255 = vadd.f32 %v1231, %v1247
    %v1256 = vadd.f32 %v1232, %v1246
    %v1257 = vadd.f32 %v1233, %v1250
    %v1258 = vadd.f32 %v1234, %v1249
    %s1259 = sld [smem:[#allocation7 + $0x8f]]
    %v1260 = vstv %s1259
    %v1261 = vmul.f32 %v549, %v1260
    %v1262 = vmul.f32 %v550, %v1260
    %v1263 = vmul.f32 %v551, %v1260
    %v1264 = vmul.f32 %v552, %v1260
    %v1269 = vrot.slane %v1261, 1
    %v1270 = vrot.slane %v1262, 1
    %v1271 = vsel %vm202, %v1269, %v1270
    %v1272 = vrot.slane %v1263, 1
    %v1273 = vrot.slane %v1264, 1
    %v1274 = vsel %vm202, %v1272, %v1273
    %1275 = vrot.lane.b32.xlu0 %v1271, 127
    %v1276 = vpop.permute.xlu0 %1275
    %1277 = vrot.lane.b32.xlu0 %v1270, 127
    %v1278 = vpop.permute.xlu0 %1277
    %1279 = vrot.lane.b32.xlu0 %v1274, 127
    %v1280 = vpop.permute.xlu0 %1279
    %1281 = vrot.lane.b32.xlu0 %v1273, 127
    %v1282 = vpop.permute.xlu0 %1281
    %v1287 = vadd.f32 %v1255, %v1276
    %v1288 = vadd.f32 %v1256, %v1278
    %v1289 = vadd.f32 %v1257, %v1280
    %v1290 = vadd.f32 %v1258, %v1282
    %s1291 = sld [smem:[#allocation8 + $0x1]]
    %v1292 = vstv %s1291
    %v1293 = vadd.f32 %v1287, %v1292
    %v1294 = vadd.f32 %v1288, %v1292
    %v1295 = vadd.f32 %v1289, %v1292
    %v1296 = vadd.f32 %v1290, %v1292
    %v1297 = vmax.f32 %v1293, 0.0
    %v1298 = vmax.f32 %v1294, 0.0
    %v1299 = vmax.f32 %v1295, 0.0
    %v1300 = vmax.f32 %v1296, 0.0
    %s1301 = sld [smem:[#allocation7 + $0x100]]
    %v1302 = vstv %s1301
    %v1303 = vmul.f32 %v255, %v1302
    %v1304 = vmul.f32 %v256, %v1302
    %v1305 = vmul.f32 %v257, %v1302
    %v1306 = vmul.f32 %v258, %v1302
    %s1307 = sld [smem:[#allocation7 + $0x101]]
    %v1308 = vstv %s1307
    %v1309 = vmul.f32 %v255, %v1308
    %v1310 = vmul.f32 %v256, %v1308
    %v1311 = vmul.f32 %v257, %v1308
    %v1312 = vmul.f32 %v258, %v1308
    %1317 = vrot.lane.b32.xlu0 %v1309, 127
    %v1318 = vpop.permute.xlu0 %1317
    %1319 = vrot.lane.b32.xlu0 %v1310, 127
    %v1320 = vpop.permute.xlu0 %1319
    %1321 = vrot.lane.b32.xlu0 %v1311, 127
    %v1322 = vpop.permute.xlu0 %1321
    %1323 = vrot.lane.b32.xlu0 %v1312, 127
    %v1324 = vpop.permute.xlu0 %1323
    %v1329 = vadd.f32 %v1303, %v1318
    %v1330 = vadd.f32 %v1304, %v1320
    %v1331 = vadd.f32 %v1305, %v1322
    %v1332 = vadd.f32 %v1306, %v1324
    %s1333 = sld [smem:[#allocation7 + $0x102]]
    %v1334 = vstv %s1333
    %v1335 = vmul.f32 %v255, %v1334
    %v1336 = vmul.f32 %v256, %v1334
    %v1337 = vmul.f32 %v257, %v1334
    %v1338 = vmul.f32 %v258, %v1334
    %v1343 = vrot.slane %v1335, 1
    %v1344 = vrot.slane %v1336, 1
    %v1345 = vsel %vm202, %v1343, %v1344
    %v1346 = vrot.slane %v1337, 1
    %v1347 = vrot.slane %v1338, 1
    %v1348 = vsel %vm202, %v1346, %v1347
    %v1353 = vadd.f32 %v1329, %v1345
    %v1354 = vadd.f32 %v1330, %v1344
    %v1355 = vadd.f32 %v1331, %v1348
    %v1356 = vadd.f32 %v1332, %v1347
    %s1357 = sld [smem:[#allocation7 + $0x103]]
    %v1358 = vstv %s1357
    %v1359 = vmul.f32 %v255, %v1358
    %v1360 = vmul.f32 %v256, %v1358
    %v1361 = vmul.f32 %v257, %v1358
    %v1362 = vmul.f32 %v258, %v1358
    %v1367 = vrot.slane %v1359, 1
    %v1368 = vrot.slane %v1360, 1
    %v1369 = vsel %vm202, %v1367, %v1368
    %v1370 = vrot.slane %v1361, 1
    %v1371 = vrot.slane %v1362, 1
    %v1372 = vsel %vm202, %v1370, %v1371
    %1373 = vrot.lane.b32.xlu0 %v1369, 127
    %v1374 = vpop.permute.xlu0 %1373
    %1375 = vrot.lane.b32.xlu0 %v1368, 127
    %v1376 = vpop.permute.xlu0 %1375
    %1377 = vrot.lane.b32.xlu0 %v1372, 127
    %v1378 = vpop.permute.xlu0 %1377
    %1379 = vrot.lane.b32.xlu0 %v1371, 127
    %v1380 = vpop.permute.xlu0 %1379
    %v1385 = vadd.f32 %v1353, %v1374
    %v1386 = vadd.f32 %v1354, %v1376
    %v1387 = vadd.f32 %v1355, %v1378
    %v1388 = vadd.f32 %v1356, %v1380
    %s1389 = sld [smem:[#allocation7 + $0x104]]
    %v1390 = vstv %s1389
    %v1391 = vmul.f32 %v353, %v1390
    %v1392 = vmul.f32 %v354, %v1390
    %v1393 = vmul.f32 %v355, %v1390
    %v1394 = vmul.f32 %v356, %v1390
    %v1395 = vadd.f32 %v1385, %v1391
    %v1396 = vadd.f32 %v1386, %v1392
    %v1397 = vadd.f32 %v1387, %v1393
    %v1398 = vadd.f32 %v1388, %v1394
    %s1399 = sld [smem:[#allocation7 + $0x105]]
    %v1400 = vstv %s1399
    %v1401 = vmul.f32 %v353, %v1400
    %v1402 = vmul.f32 %v354, %v1400
    %v1403 = vmul.f32 %v355, %v1400
    %v1404 = vmul.f32 %v356, %v1400
    %1409 = vrot.lane.b32.xlu0 %v1401, 127
    %v1410 = vpop.permute.xlu0 %1409
    %1411 = vrot.lane.b32.xlu0 %v1402, 127
    %v1412 = vpop.permute.xlu0 %1411
    %1413 = vrot.lane.b32.xlu0 %v1403, 127
    %v1414 = vpop.permute.xlu0 %1413
    %1415 = vrot.lane.b32.xlu0 %v1404, 127
    %v1416 = vpop.permute.xlu0 %1415
    %v1421 = vadd.f32 %v1395, %v1410
    %v1422 = vadd.f32 %v1396, %v1412
    %v1423 = vadd.f32 %v1397, %v1414
    %v1424 = vadd.f32 %v1398, %v1416
    %s1425 = sld [smem:[#allocation7 + $0x106]]
    %v1426 = vstv %s1425
    %v1427 = vmul.f32 %v353, %v1426
    %v1428 = vmul.f32 %v354, %v1426
    %v1429 = vmul.f32 %v355, %v1426
    %v1430 = vmul.f32 %v356, %v1426
    %v1435 = vrot.slane %v1427, 1
    %v1436 = vrot.slane %v1428, 1
    %v1437 = vsel %vm202, %v1435, %v1436
    %v1438 = vrot.slane %v1429, 1
    %v1439 = vrot.slane %v1430, 1
    %v1440 = vsel %vm202, %v1438, %v1439
    %v1445 = vadd.f32 %v1421, %v1437
    %v1446 = vadd.f32 %v1422, %v1436
    %v1447 = vadd.f32 %v1423, %v1440
    %v1448 = vadd.f32 %v1424, %v1439
    %s1449 = sld [smem:[#allocation7 + $0x107]]
    %v1450 = vstv %s1449
    %v1451 = vmul.f32 %v353, %v1450
    %v1452 = vmul.f32 %v354, %v1450
    %v1453 = vmul.f32 %v355, %v1450
    %v1454 = vmul.f32 %v356, %v1450
    %v1459 = vrot.slane %v1451, 1
    %v1460 = vrot.slane %v1452, 1
    %v1461 = vsel %vm202, %v1459, %v1460
    %v1462 = vrot.slane %v1453, 1
    %v1463 = vrot.slane %v1454, 1
    %v1464 = vsel %vm202, %v1462, %v1463
    %1465 = vrot.lane.b32.xlu0 %v1461, 127
    %v1466 = vpop.permute.xlu0 %1465
    %1467 = vrot.lane.b32.xlu0 %v1460, 127
    %v1468 = vpop.permute.xlu0 %1467
    %1469 = vrot.lane.b32.xlu0 %v1464, 127
    %v1470 = vpop.permute.xlu0 %1469
    %1471 = vrot.lane.b32.xlu0 %v1463, 127
    %v1472 = vpop.permute.xlu0 %1471
    %v1477 = vadd.f32 %v1445, %v1466
    %v1478 = vadd.f32 %v1446, %v1468
    %v1479 = vadd.f32 %v1447, %v1470
    %v1480 = vadd.f32 %v1448, %v1472
    %s1481 = sld [smem:[#allocation7 + $0x108]]
    %v1482 = vstv %s1481
    %v1483 = vmul.f32 %v451, %v1482
    %v1484 = vmul.f32 %v452, %v1482
    %v1485 = vmul.f32 %v453, %v1482
    %v1486 = vmul.f32 %v454, %v1482
    %v1487 = vadd.f32 %v1477, %v1483
    %v1488 = vadd.f32 %v1478, %v1484
    %v1489 = vadd.f32 %v1479, %v1485
    %v1490 = vadd.f32 %v1480, %v1486
    %s1491 = sld [smem:[#allocation7 + $0x109]]
    %v1492 = vstv %s1491
    %v1493 = vmul.f32 %v451, %v1492
    %v1494 = vmul.f32 %v452, %v1492
    %v1495 = vmul.f32 %v453, %v1492
    %v1496 = vmul.f32 %v454, %v1492
    %1501 = vrot.lane.b32.xlu0 %v1493, 127
    %v1502 = vpop.permute.xlu0 %1501
    %1503 = vrot.lane.b32.xlu0 %v1494, 127
    %v1504 = vpop.permute.xlu0 %1503
    %1505 = vrot.lane.b32.xlu0 %v1495, 127
    %v1506 = vpop.permute.xlu0 %1505
    %1507 = vrot.lane.b32.xlu0 %v1496, 127
    %v1508 = vpop.permute.xlu0 %1507
    %v1513 = vadd.f32 %v1487, %v1502
    %v1514 = vadd.f32 %v1488, %v1504
    %v1515 = vadd.f32 %v1489, %v1506
    %v1516 = vadd.f32 %v1490, %v1508
    %s1517 = sld [smem:[#allocation7 + $0x10a]]
    %v1518 = vstv %s1517
    %v1519 = vmul.f32 %v451, %v1518
    %v1520 = vmul.f32 %v452, %v1518
    %v1521 = vmul.f32 %v453, %v1518
    %v1522 = vmul.f32 %v454, %v1518
    %v1527 = vrot.slane %v1519, 1
    %v1528 = vrot.slane %v1520, 1
    %v1529 = vsel %vm202, %v1527, %v1528
    %v1530 = vrot.slane %v1521, 1
    %v1531 = vrot.slane %v1522, 1
    %v1532 = vsel %vm202, %v1530, %v1531
    %v1537 = vadd.f32 %v1513, %v1529
    %v1538 = vadd.f32 %v1514, %v1528
    %v1539 = vadd.f32 %v1515, %v1532
    %v1540 = vadd.f32 %v1516, %v1531
    %s1541 = sld [smem:[#allocation7 + $0x10b]]
    %v1542 = vstv %s1541
    %v1543 = vmul.f32 %v451, %v1542
    %v1544 = vmul.f32 %v452, %v1542
    %v1545 = vmul.f32 %v453, %v1542
    %v1546 = vmul.f32 %v454, %v1542
    %v1551 = vrot.slane %v1543, 1
    %v1552 = vrot.slane %v1544, 1
    %v1553 = vsel %vm202, %v1551, %v1552
    %v1554 = vrot.slane %v1545, 1
    %v1555 = vrot.slane %v1546, 1
    %v1556 = vsel %vm202, %v1554, %v1555
    %1557 = vrot.lane.b32.xlu0 %v1553, 127
    %v1558 = vpop.permute.xlu0 %1557
    %1559 = vrot.lane.b32.xlu0 %v1552, 127
    %v1560 = vpop.permute.xlu0 %1559
    %1561 = vrot.lane.b32.xlu0 %v1556, 127
    %v1562 = vpop.permute.xlu0 %1561
    %1563 = vrot.lane.b32.xlu0 %v1555, 127
    %v1564 = vpop.permute.xlu0 %1563
    %v1569 = vadd.f32 %v1537, %v1558
    %v1570 = vadd.f32 %v1538, %v1560
    %v1571 = vadd.f32 %v1539, %v1562
    %v1572 = vadd.f32 %v1540, %v1564
    %s1573 = sld [smem:[#allocation7 + $0x10c]]
    %v1574 = vstv %s1573
    %v1575 = vmul.f32 %v549, %v1574
    %v1576 = vmul.f32 %v550, %v1574
    %v1577 = vmul.f32 %v551, %v1574
    %v1578 = vmul.f32 %v552, %v1574
    %v1579 = vadd.f32 %v1569, %v1575
    %v1580 = vadd.f32 %v1570, %v1576
    %v1581 = vadd.f32 %v1571, %v1577
    %v1582 = vadd.f32 %v1572, %v1578
    %s1583 = sld [smem:[#allocation7 + $0x10d]]
    %v1584 = vstv %s1583
    %v1585 = vmul.f32 %v549, %v1584
    %v1586 = vmul.f32 %v550, %v1584
    %v1587 = vmul.f32 %v551, %v1584
    %v1588 = vmul.f32 %v552, %v1584
    %1593 = vrot.lane.b32.xlu0 %v1585, 127
    %v1594 = vpop.permute.xlu0 %1593
    %1595 = vrot.lane.b32.xlu0 %v1586, 127
    %v1596 = vpop.permute.xlu0 %1595
    %1597 = vrot.lane.b32.xlu0 %v1587, 127
    %v1598 = vpop.permute.xlu0 %1597
    %1599 = vrot.lane.b32.xlu0 %v1588, 127
    %v1600 = vpop.permute.xlu0 %1599
    %v1605 = vadd.f32 %v1579, %v1594
    %v1606 = vadd.f32 %v1580, %v1596
    %v1607 = vadd.f32 %v1581, %v1598
    %v1608 = vadd.f32 %v1582, %v1600
    %s1609 = sld [smem:[#allocation7 + $0x10e]]
    %v1610 = vstv %s1609
    %v1611 = vmul.f32 %v549, %v1610
    %v1612 = vmul.f32 %v550, %v1610
    %v1613 = vmul.f32 %v551, %v1610
    %v1614 = vmul.f32 %v552, %v1610
    %v1619 = vrot.slane %v1611, 1
    %v1620 = vrot.slane %v1612, 1
    %v1621 = vsel %vm202, %v1619, %v1620
    %v1622 = vrot.slane %v1613, 1
    %v1623 = vrot.slane %v1614, 1
    %v1624 = vsel %vm202, %v1622, %v1623
    %v1629 = vadd.f32 %v1605, %v1621
    %v1630 = vadd.f32 %v1606, %v1620
    %v1631 = vadd.f32 %v1607, %v1624
    %v1632 = vadd.f32 %v1608, %v1623
    %s1633 = sld [smem:[#allocation7 + $0x10f]]
    %v1634 = vstv %s1633
    %v1635 = vmul.f32 %v549, %v1634
    %v1636 = vmul.f32 %v550, %v1634
    %v1637 = vmul.f32 %v551, %v1634
    %v1638 = vmul.f32 %v552, %v1634
    %v1643 = vrot.slane %v1635, 1
    %v1644 = vrot.slane %v1636, 1
    %v1645 = vsel %vm202, %v1643, %v1644
    %v1646 = vrot.slane %v1637, 1
    %v1647 = vrot.slane %v1638, 1
    %v1648 = vsel %vm202, %v1646, %v1647
    %1649 = vrot.lane.b32.xlu0 %v1645, 127
    %v1650 = vpop.permute.xlu0 %1649
    %1651 = vrot.lane.b32.xlu0 %v1644, 127
    %v1652 = vpop.permute.xlu0 %1651
    %1653 = vrot.lane.b32.xlu0 %v1648, 127
    %v1654 = vpop.permute.xlu0 %1653
    %1655 = vrot.lane.b32.xlu0 %v1647, 127
    %v1656 = vpop.permute.xlu0 %1655
    %v1661 = vadd.f32 %v1629, %v1650
    %v1662 = vadd.f32 %v1630, %v1652
    %v1663 = vadd.f32 %v1631, %v1654
    %v1664 = vadd.f32 %v1632, %v1656
    %s1665 = sld [smem:[#allocation8 + $0x2]]
    %v1666 = vstv %s1665
    %v1667 = vadd.f32 %v1661, %v1666
    %v1668 = vadd.f32 %v1662, %v1666
    %v1669 = vadd.f32 %v1663, %v1666
    %v1670 = vadd.f32 %v1664, %v1666
    %v1671 = vmax.f32 %v1667, 0.0
    %v1672 = vmax.f32 %v1668, 0.0
    %v1673 = vmax.f32 %v1669, 0.0
    %v1674 = vmax.f32 %v1670, 0.0
    %s1675 = sld [smem:[#allocation7 + $0x180]]
    %v1676 = vstv %s1675
    %v1677 = vmul.f32 %v255, %v1676
    %v1678 = vmul.f32 %v256, %v1676
    %v1679 = vmul.f32 %v257, %v1676
    %v1680 = vmul.f32 %v258, %v1676
    %s1681 = sld [smem:[#allocation7 + $0x181]]
    %v1682 = vstv %s1681
    %v1683 = vmul.f32 %v255, %v1682
    %v1684 = vmul.f32 %v256, %v1682
    %v1685 = vmul.f32 %v257, %v1682
    %v1686 = vmul.f32 %v258, %v1682
    %1691 = vrot.lane.b32.xlu0 %v1683, 127
    %v1692 = vpop.permute.xlu0 %1691
    %1693 = vrot.lane.b32.xlu0 %v1684, 127
    %v1694 = vpop.permute.xlu0 %1693
    %1695 = vrot.lane.b32.xlu0 %v1685, 127
    %v1696 = vpop.permute.xlu0 %1695
    %1697 = vrot.lane.b32.xlu0 %v1686, 127
    %v1698 = vpop.permute.xlu0 %1697
    %v1703 = vadd.f32 %v1677, %v1692
    %v1704 = vadd.f32 %v1678, %v1694
    %v1705 = vadd.f32 %v1679, %v1696
    %v1706 = vadd.f32 %v1680, %v1698
    %s1707 = sld [smem:[#allocation7 + $0x182]]
    %v1708 = vstv %s1707
    %v1709 = vmul.f32 %v255, %v1708
    %v1710 = vmul.f32 %v256, %v1708
    %v1711 = vmul.f32 %v257, %v1708
    %v1712 = vmul.f32 %v258, %v1708
    %v1717 = vrot.slane %v1709, 1
    %v1718 = vrot.slane %v1710, 1
    %v1719 = vsel %vm202, %v1717, %v1718
    %v1720 = vrot.slane %v1711, 1
    %v1721 = vrot.slane %v1712, 1
    %v1722 = vsel %vm202, %v1720, %v1721
    %v1727 = vadd.f32 %v1703, %v1719
    %v1728 = vadd.f32 %v1704, %v1718
    %v1729 = vadd.f32 %v1705, %v1722
    %v1730 = vadd.f32 %v1706, %v1721
    %s1731 = sld [smem:[#allocation7 + $0x183]]
    %v1732 = vstv %s1731
    %v1733 = vmul.f32 %v255, %v1732
    %v1734 = vmul.f32 %v256, %v1732
    %v1735 = vmul.f32 %v257, %v1732
    %v1736 = vmul.f32 %v258, %v1732
    %v1741 = vrot.slane %v1733, 1
    %v1742 = vrot.slane %v1734, 1
    %v1743 = vsel %vm202, %v1741, %v1742
    %v1744 = vrot.slane %v1735, 1
    %v1745 = vrot.slane %v1736, 1
    %v1746 = vsel %vm202, %v1744, %v1745
    %1747 = vrot.lane.b32.xlu0 %v1743, 127
    %v1748 = vpop.permute.xlu0 %1747
    %1749 = vrot.lane.b32.xlu0 %v1742, 127
    %v1750 = vpop.permute.xlu0 %1749
    %1751 = vrot.lane.b32.xlu0 %v1746, 127
    %v1752 = vpop.permute.xlu0 %1751
    %1753 = vrot.lane.b32.xlu0 %v1745, 127
    %v1754 = vpop.permute.xlu0 %1753
    %v1759 = vadd.f32 %v1727, %v1748
    %v1760 = vadd.f32 %v1728, %v1750
    %v1761 = vadd.f32 %v1729, %v1752
    %v1762 = vadd.f32 %v1730, %v1754
    %s1763 = sld [smem:[#allocation7 + $0x184]]
    %v1764 = vstv %s1763
    %v1765 = vmul.f32 %v353, %v1764
    %v1766 = vmul.f32 %v354, %v1764
    %v1767 = vmul.f32 %v355, %v1764
    %v1768 = vmul.f32 %v356, %v1764
    %v1769 = vadd.f32 %v1759, %v1765
    %v1770 = vadd.f32 %v1760, %v1766
    %v1771 = vadd.f32 %v1761, %v1767
    %v1772 = vadd.f32 %v1762, %v1768
    %s1773 = sld [smem:[#allocation7 + $0x185]]
    %v1774 = vstv %s1773
    %v1775 = vmul.f32 %v353, %v1774
    %v1776 = vmul.f32 %v354, %v1774
    %v1777 = vmul.f32 %v355, %v1774
    %v1778 = vmul.f32 %v356, %v1774
    %1783 = vrot.lane.b32.xlu0 %v1775, 127
    %v1784 = vpop.permute.xlu0 %1783
    %1785 = vrot.lane.b32.xlu0 %v1776, 127
    %v1786 = vpop.permute.xlu0 %1785
    %1787 = vrot.lane.b32.xlu0 %v1777, 127
    %v1788 = vpop.permute.xlu0 %1787
    %1789 = vrot.lane.b32.xlu0 %v1778, 127
    %v1790 = vpop.permute.xlu0 %1789
    %v1795 = vadd.f32 %v1769, %v1784
    %v1796 = vadd.f32 %v1770, %v1786
    %v1797 = vadd.f32 %v1771, %v1788
    %v1798 = vadd.f32 %v1772, %v1790
    %s1799 = sld [smem:[#allocation7 + $0x186]]
    %v1800 = vstv %s1799
    %v1801 = vmul.f32 %v353, %v1800
    %v1802 = vmul.f32 %v354, %v1800
    %v1803 = vmul.f32 %v355, %v1800
    %v1804 = vmul.f32 %v356, %v1800
    %v1809 = vrot.slane %v1801, 1
    %v1810 = vrot.slane %v1802, 1
    %v1811 = vsel %vm202, %v1809, %v1810
    %v1812 = vrot.slane %v1803, 1
    %v1813 = vrot.slane %v1804, 1
    %v1814 = vsel %vm202, %v1812, %v1813
    %v1819 = vadd.f32 %v1795, %v1811
    %v1820 = vadd.f32 %v1796, %v1810
    %v1821 = vadd.f32 %v1797, %v1814
    %v1822 = vadd.f32 %v1798, %v1813
    %s1823 = sld [smem:[#allocation7 + $0x187]]
    %v1824 = vstv %s1823
    %v1825 = vmul.f32 %v353, %v1824
    %v1826 = vmul.f32 %v354, %v1824
    %v1827 = vmul.f32 %v355, %v1824
    %v1828 = vmul.f32 %v356, %v1824
    %v1833 = vrot.slane %v1825, 1
    %v1834 = vrot.slane %v1826, 1
    %v1835 = vsel %vm202, %v1833, %v1834
    %v1836 = vrot.slane %v1827, 1
    %v1837 = vrot.slane %v1828, 1
    %v1838 = vsel %vm202, %v1836, %v1837
    %1839 = vrot.lane.b32.xlu0 %v1835, 127
    %v1840 = vpop.permute.xlu0 %1839
    %1841 = vrot.lane.b32.xlu0 %v1834, 127
    %v1842 = vpop.permute.xlu0 %1841
    %1843 = vrot.lane.b32.xlu0 %v1838, 127
    %v1844 = vpop.permute.xlu0 %1843
    %1845 = vrot.lane.b32.xlu0 %v1837, 127
    %v1846 = vpop.permute.xlu0 %1845
    %v1851 = vadd.f32 %v1819, %v1840
    %v1852 = vadd.f32 %v1820, %v1842
    %v1853 = vadd.f32 %v1821, %v1844
    %v1854 = vadd.f32 %v1822, %v1846
    %s1855 = sld [smem:[#allocation7 + $0x188]]
    %v1856 = vstv %s1855
    %v1857 = vmul.f32 %v451, %v1856
    %v1858 = vmul.f32 %v452, %v1856
    %v1859 = vmul.f32 %v453, %v1856
    %v1860 = vmul.f32 %v454, %v1856
    %v1861 = vadd.f32 %v1851, %v1857
    %v1862 = vadd.f32 %v1852, %v1858
    %v1863 = vadd.f32 %v1853, %v1859
    %v1864 = vadd.f32 %v1854, %v1860
    %s1865 = sld [smem:[#allocation7 + $0x189]]
    %v1866 = vstv %s1865
    %v1867 = vmul.f32 %v451, %v1866
    %v1868 = vmul.f32 %v452, %v1866
    %v1869 = vmul.f32 %v453, %v1866
    %v1870 = vmul.f32 %v454, %v1866
    %1875 = vrot.lane.b32.xlu0 %v1867, 127
    %v1876 = vpop.permute.xlu0 %1875
    %1877 = vrot.lane.b32.xlu0 %v1868, 127
    %v1878 = vpop.permute.xlu0 %1877
    %1879 = vrot.lane.b32.xlu0 %v1869, 127
    %v1880 = vpop.permute.xlu0 %1879
    %1881 = vrot.lane.b32.xlu0 %v1870, 127
    %v1882 = vpop.permute.xlu0 %1881
    %v1887 = vadd.f32 %v1861, %v1876
    %v1888 = vadd.f32 %v1862, %v1878
    %v1889 = vadd.f32 %v1863, %v1880
    %v1890 = vadd.f32 %v1864, %v1882
    %s1891 = sld [smem:[#allocation7 + $0x18a]]
    %v1892 = vstv %s1891
    %v1893 = vmul.f32 %v451, %v1892
    %v1894 = vmul.f32 %v452, %v1892
    %v1895 = vmul.f32 %v453, %v1892
    %v1896 = vmul.f32 %v454, %v1892
    %v1901 = vrot.slane %v1893, 1
    %v1902 = vrot.slane %v1894, 1
    %v1903 = vsel %vm202, %v1901, %v1902
    %v1904 = vrot.slane %v1895, 1
    %v1905 = vrot.slane %v1896, 1
    %v1906 = vsel %vm202, %v1904, %v1905
    %v1911 = vadd.f32 %v1887, %v1903
    %v1912 = vadd.f32 %v1888, %v1902
    %v1913 = vadd.f32 %v1889, %v1906
    %v1914 = vadd.f32 %v1890, %v1905
    %s1915 = sld [smem:[#allocation7 + $0x18b]]
    %v1916 = vstv %s1915
    %v1917 = vmul.f32 %v451, %v1916
    %v1918 = vmul.f32 %v452, %v1916
    %v1919 = vmul.f32 %v453, %v1916
    %v1920 = vmul.f32 %v454, %v1916
    %v1925 = vrot.slane %v1917, 1
    %v1926 = vrot.slane %v1918, 1
    %v1927 = vsel %vm202, %v1925, %v1926
    %v1928 = vrot.slane %v1919, 1
    %v1929 = vrot.slane %v1920, 1
    %v1930 = vsel %vm202, %v1928, %v1929
    %1931 = vrot.lane.b32.xlu0 %v1927, 127
    %v1932 = vpop.permute.xlu0 %1931
    %1933 = vrot.lane.b32.xlu0 %v1926, 127
    %v1934 = vpop.permute.xlu0 %1933
    %1935 = vrot.lane.b32.xlu0 %v1930, 127
    %v1936 = vpop.permute.xlu0 %1935
    %1937 = vrot.lane.b32.xlu0 %v1929, 127
    %v1938 = vpop.permute.xlu0 %1937
    %v1943 = vadd.f32 %v1911, %v1932
    %v1944 = vadd.f32 %v1912, %v1934
    %v1945 = vadd.f32 %v1913, %v1936
    %v1946 = vadd.f32 %v1914, %v1938
    %s1947 = sld [smem:[#allocation7 + $0x18c]]
    %v1948 = vstv %s1947
    %v1949 = vmul.f32 %v549, %v1948
    %v1950 = vmul.f32 %v550, %v1948
    %v1951 = vmul.f32 %v551, %v1948
    %v1952 = vmul.f32 %v552, %v1948
    %v1953 = vadd.f32 %v1943, %v1949
    %v1954 = vadd.f32 %v1944, %v1950
    %v1955 = vadd.f32 %v1945, %v1951
    %v1956 = vadd.f32 %v1946, %v1952
    %s1957 = sld [smem:[#allocation7 + $0x18d]]
    %v1958 = vstv %s1957
    %v1959 = vmul.f32 %v549, %v1958
    %v1960 = vmul.f32 %v550, %v1958
    %v1961 = vmul.f32 %v551, %v1958
    %v1962 = vmul.f32 %v552, %v1958
    %1967 = vrot.lane.b32.xlu0 %v1959, 127
    %v1968 = vpop.permute.xlu0 %1967
    %1969 = vrot.lane.b32.xlu0 %v1960, 127
    %v1970 = vpop.permute.xlu0 %1969
    %1971 = vrot.lane.b32.xlu0 %v1961, 127
    %v1972 = vpop.permute.xlu0 %1971
    %1973 = vrot.lane.b32.xlu0 %v1962, 127
    %v1974 = vpop.permute.xlu0 %1973
    %v1979 = vadd.f32 %v1953, %v1968
    %v1980 = vadd.f32 %v1954, %v1970
    %v1981 = vadd.f32 %v1955, %v1972
    %v1982 = vadd.f32 %v1956, %v1974
    %s1983 = sld [smem:[#allocation7 + $0x18e]]
    %v1984 = vstv %s1983
    %v1985 = vmul.f32 %v549, %v1984
    %v1986 = vmul.f32 %v550, %v1984
    %v1987 = vmul.f32 %v551, %v1984
    %v1988 = vmul.f32 %v552, %v1984
    %v1993 = vrot.slane %v1985, 1
    %v1994 = vrot.slane %v1986, 1
    %v1995 = vsel %vm202, %v1993, %v1994
    %v1996 = vrot.slane %v1987, 1
    %v1997 = vrot.slane %v1988, 1
    %v1998 = vsel %vm202, %v1996, %v1997
    %v2003 = vadd.f32 %v1979, %v1995
    %v2004 = vadd.f32 %v1980, %v1994
    %v2005 = vadd.f32 %v1981, %v1998
    %v2006 = vadd.f32 %v1982, %v1997
    %s2007 = sld [smem:[#allocation7 + $0x18f]]
    %v2008 = vstv %s2007
    %v2009 = vmul.f32 %v549, %v2008
    %v2010 = vmul.f32 %v550, %v2008
    %v2011 = vmul.f32 %v551, %v2008
    %v2012 = vmul.f32 %v552, %v2008
    %v2017 = vrot.slane %v2009, 1
    %v2018 = vrot.slane %v2010, 1
    %v2019 = vsel %vm202, %v2017, %v2018
    %v2020 = vrot.slane %v2011, 1
    %v2021 = vrot.slane %v2012, 1
    %v2022 = vsel %vm202, %v2020, %v2021
    %2023 = vrot.lane.b32.xlu0 %v2019, 127
    %v2024 = vpop.permute.xlu0 %2023
    %2025 = vrot.lane.b32.xlu0 %v2018, 127
    %v2026 = vpop.permute.xlu0 %2025
    %2027 = vrot.lane.b32.xlu0 %v2022, 127
    %v2028 = vpop.permute.xlu0 %2027
    %2029 = vrot.lane.b32.xlu0 %v2021, 127
    %v2030 = vpop.permute.xlu0 %2029
    %v2035 = vadd.f32 %v2003, %v2024
    %v2036 = vadd.f32 %v2004, %v2026
    %v2037 = vadd.f32 %v2005, %v2028
    %v2038 = vadd.f32 %v2006, %v2030
    %s2039 = sld [smem:[#allocation8 + $0x3]]
    %v2040 = vstv %s2039
    %v2041 = vadd.f32 %v2035, %v2040
    %v2042 = vadd.f32 %v2036, %v2040
    %v2043 = vadd.f32 %v2037, %v2040
    %v2044 = vadd.f32 %v2038, %v2040
    %v2045 = vmax.f32 %v2041, 0.0
    %v2046 = vmax.f32 %v2042, 0.0
    %v2047 = vmax.f32 %v2043, 0.0
    %v2048 = vmax.f32 %v2044, 0.0
    %vm2049 = vcmask 109568
    %v2050 = vsel %vm2049, %v923, -inf
    %v2051 = vrot.slane %v2050, 4
    %v2052 = vmax.f32 %v2050, %v2051
    %v2053 = vrot.slane %v2052, 2
    %v2054 = vmax.f32 %v2052, %v2053
    %v2055 = vrot.slane %v2054, 1
    %v2056 = vmax.f32 %v2054, %v2055
    %v2057 = vsel %vm2049, %v925, -inf
    %v2058 = vrot.slane %v2057, 4
    %v2059 = vmax.f32 %v2057, %v2058
    %v2060 = vrot.slane %v2059, 2
    %v2061 = vmax.f32 %v2059, %v2060
    %v2062 = vrot.slane %v2061, 1
    %v2063 = vmax.f32 %v2061, %v2062
    %vm2066 = vcmask 1041409
    %v2067 = vsel %vm2066, %v2063, %v2056
    %vm2069 = vcmask 25600
    %v2070 = vsel %vm2069, %v2067, -inf
    %2071 = vmax.xlane.f32.xlu0 %v2070
    %v2072 = vpop.xlane.xlu0 %2071
    %vm2073 = vcmask 50200
    %v2074 = vsel %vm2073, %v2067, -inf
    %2075 = vmax.xlane.f32.xlu0 %v2074
    %v2076 = vpop.xlane.xlu0 %2075
    %vm2077 = vcmask 83000
    %v2078 = vsel %vm2077, %v2067, -inf
    %2079 = vmax.xlane.f32.xlu0 %v2078
    %v2080 = vpop.xlane.xlu0 %2079
    %vm2081 = vcmask 107600
    %v2082 = vsel %vm2081, %v2067, -inf
    %2083 = vmax.xlane.f32.xlu0 %v2082
    %v2084 = vpop.xlane.xlu0 %2083
    %vm2085 = vcmask 7168
    %v2086 = vsel %vm2085, %v2072, %v2076
    %vm2087 = vcmask 15360
    %v2088 = vsel %vm2087, %v2086, %v2080
    %vm2089 = vcmask 23552
    %v2090 = vsel %vm2089, %v2088, %v2084
    %vm2091 = vcmask 112643
    %v2092 = vsel %vm2091, %v923, -inf
    %v2093 = vrot.slane %v2092, 4
    %v2094 = vmax.f32 %v2092, %v2093
    %v2095 = vrot.slane %v2094, 2
    %v2096 = vmax.f32 %v2094, %v2095
    %v2097 = vrot.slane %v2096, 1
    %v2098 = vmax.f32 %v2096, %v2097
    %v2099 = vsel %vm2091, %v925, -inf
    %v2100 = vrot.slane %v2099, 4
    %v2101 = vmax.f32 %v2099, %v2100
    %v2102 = vrot.slane %v2101, 2
    %v2103 = vmax.f32 %v2101, %v2102
    %v2104 = vrot.slane %v2103, 1
    %v2105 = vmax.f32 %v2103, %v2104
    %v2108 = vsel %vm2066, %v2105, %v2098
    %v2110 = vsel %vm2069, %v2108, -inf
    %2111 = vmax.xlane.f32.xlu0 %v2110
    %v2112 = vpop.xlane.xlu0 %2111
    %v2113 = vsel %vm2073, %v2108, -inf
    %2114 = vmax.xlane.f32.xlu0 %v2113
    %v2115 = vpop.xlane.xlu0 %2114
    %v2116 = vsel %vm2077, %v2108, -inf
    %2117 = vmax.xlane.f32.xlu0 %v2116
    %v2118 = vpop.xlane.xlu0 %2117
    %v2119 = vsel %vm2081, %v2108, -inf
    %2120 = vmax.xlane.f32.xlu0 %v2119
    %v2121 = vpop.xlane.xlu0 %2120
    %v2122 = vsel %vm2085, %v2112, %v2115
    %v2123 = vsel %vm2087, %v2122, %v2118
    %v2124 = vsel %vm2089, %v2123, %v2121
    %vm2125 = vcmask 113671
    %v2126 = vsel %vm2125, %v923, -inf
    %vm2127 = vcmask 108544
    %v2128 = vsel %vm2127, %v924, -inf
    %v2129 = vmax.f32 %v2126, %v2128
    %v2130 = vrot.slane %v2129, 4
    %v2131 = vmax.f32 %v2129, %v2130
    %v2132 = vrot.slane %v2131, 2
    %v2133 = vmax.f32 %v2131, %v2132
    %v2134 = vrot.slane %v2133, 1
    %v2135 = vmax.f32 %v2133, %v2134
    %v2136 = vsel %vm2125, %v925, -inf
    %v2137 = vsel %vm2127, %v926, -inf
    %v2138 = vmax.f32 %v2136, %v2137
    %v2139 = vrot.slane %v2138, 4
    %v2140 = vmax.f32 %v2138, %v2139
    %v2141 = vrot.slane %v2140, 2
    %v2142 = vmax.f32 %v2140, %v2141
    %v2143 = vrot.slane %v2142, 1
    %v2144 = vmax.f32 %v2142, %v2143
    %v2147 = vsel %vm2066, %v2144, %v2135
    %v2149 = vsel %vm2069, %v2147, -inf
    %2150 = vmax.xlane.f32.xlu0 %v2149
    %v2151 = vpop.xlane.xlu0 %2150
    %v2152 = vsel %vm2073, %v2147, -inf
    %2153 = vmax.xlane.f32.xlu0 %v2152
    %v2154 = vpop.xlane.xlu0 %2153
    %v2155 = vsel %vm2077, %v2147, -inf
    %2156 = vmax.xlane.f32.xlu0 %v2155
    %v2157 = vpop.xlane.xlu0 %2156
    %v2158 = vsel %vm2081, %v2147, -inf
    %2159 = vmax.xlane.f32.xlu0 %v2158
    %v2160 = vpop.xlane.xlu0 %2159
    %v2161 = vsel %vm2085, %v2151, %v2154
    %v2162 = vsel %vm2087, %v2161, %v2157
    %v2163 = vsel %vm2089, %v2162, %v2160
    %vm2164 = vcmask 111618
    %v2165 = vsel %vm2164, %v924, -inf
    %v2166 = vrot.slane %v2165, 4
    %v2167 = vmax.f32 %v2165, %v2166
    %v2168 = vrot.slane %v2167, 2
    %v2169 = vmax.f32 %v2167, %v2168
    %v2170 = vrot.slane %v2169, 1
    %v2171 = vmax.f32 %v2169, %v2170
    %v2172 = vsel %vm2164, %v926, -inf
    %v2173 = vrot.slane %v2172, 4
    %v2174 = vmax.f32 %v2172, %v2173
    %v2175 = vrot.slane %v2174, 2
    %v2176 = vmax.f32 %v2174, %v2175
    %v2177 = vrot.slane %v2176, 1
    %v2178 = vmax.f32 %v2176, %v2177
    %v2181 = vsel %vm2066, %v2178, %v2171
    %v2183 = vsel %vm2069, %v2181, -inf
    %2184 = vmax.xlane.f32.xlu0 %v2183
    %v2185 = vpop.xlane.xlu0 %2184
    %v2186 = vsel %vm2073, %v2181, -inf
    %2187 = vmax.xlane.f32.xlu0 %v2186
    %v2188 = vpop.xlane.xlu0 %2187
    %v2189 = vsel %vm2077, %v2181, -inf
    %2190 = vmax.xlane.f32.xlu0 %v2189
    %v2191 = vpop.xlane.xlu0 %2190
    %v2192 = vsel %vm2081, %v2181, -inf
    %2193 = vmax.xlane.f32.xlu0 %v2192
    %v2194 = vpop.xlane.xlu0 %2193
    %v2195 = vsel %vm2085, %v2185, %v2188
    %v2196 = vsel %vm2087, %v2195, %v2191
    %v2197 = vsel %vm2089, %v2196, %v2194
    %v2198 = vsel %vm2049, %v1297, -inf
    %v2199 = vrot.slane %v2198, 4
    %v2200 = vmax.f32 %v2198, %v2199
    %v2201 = vrot.slane %v2200, 2
    %v2202 = vmax.f32 %v2200, %v2201
    %v2203 = vrot.slane %v2202, 1
    %v2204 = vmax.f32 %v2202, %v2203
    %v2205 = vsel %vm2049, %v1299, -inf
    %v2206 = vrot.slane %v2205, 4
    %v2207 = vmax.f32 %v2205, %v2206
    %v2208 = vrot.slane %v2207, 2
    %v2209 = vmax.f32 %v2207, %v2208
    %v2210 = vrot.slane %v2209, 1
    %v2211 = vmax.f32 %v2209, %v2210
    %v2214 = vsel %vm2066, %v2211, %v2204
    %v2216 = vsel %vm2069, %v2214, -inf
    %2217 = vmax.xlane.f32.xlu0 %v2216
    %v2218 = vpop.xlane.xlu0 %2217
    %v2219 = vsel %vm2073, %v2214, -inf
    %2220 = vmax.xlane.f32.xlu0 %v2219
    %v2221 = vpop.xlane.xlu0 %2220
    %v2222 = vsel %vm2077, %v2214, -inf
    %2223 = vmax.xlane.f32.xlu0 %v2222
    %v2224 = vpop.xlane.xlu0 %2223
    %v2225 = vsel %vm2081, %v2214, -inf
    %2226 = vmax.xlane.f32.xlu0 %v2225
    %v2227 = vpop.xlane.xlu0 %2226
    %v2228 = vsel %vm2085, %v2218, %v2221
    %v2229 = vsel %vm2087, %v2228, %v2224
    %v2230 = vsel %vm2089, %v2229, %v2227
    %v2231 = vsel %vm2091, %v1297, -inf
    %v2232 = vrot.slane %v2231, 4
    %v2233 = vmax.f32 %v2231, %v2232
    %v2234 = vrot.slane %v2233, 2
    %v2235 = vmax.f32 %v2233, %v2234
    %v2236 = vrot.slane %v2235, 1
    %v2237 = vmax.f32 %v2235, %v2236
    %v2238 = vsel %vm2091, %v1299, -inf
    %v2239 = vrot.slane %v2238, 4
    %v2240 = vmax.f32 %v2238, %v2239
    %v2241 = vrot.slane %v2240, 2
    %v2242 = vmax.f32 %v2240, %v2241
    %v2243 = vrot.slane %v2242, 1
    %v2244 = vmax.f32 %v2242, %v2243
    %v2247 = vsel %vm2066, %v2244, %v2237
    %v2249 = vsel %vm2069, %v2247, -inf
    %2250 = vmax.xlane.f32.xlu0 %v2249
    %v2251 = vpop.xlane.xlu0 %2250
    %v2252 = vsel %vm2073, %v2247, -inf
    %2253 = vmax.xlane.f32.xlu0 %v2252
    %v2254 = vpop.xlane.xlu0 %2253
    %v2255 = vsel %vm2077, %v2247, -inf
    %2256 = vmax.xlane.f32.xlu0 %v2255
    %v2257 = vpop.xlane.xlu0 %2256
    %v2258 = vsel %vm2081, %v2247, -inf
    %2259 = vmax.xlane.f32.xlu0 %v2258
    %v2260 = vpop.xlane.xlu0 %2259
    %v2261 = vsel %vm2085, %v2251, %v2254
    %v2262 = vsel %vm2087, %v2261, %v2257
    %v2263 = vsel %vm2089, %v2262, %v2260
    %v2264 = vsel %vm2125, %v1297, -inf
    %v2265 = vsel %vm2127, %v1298, -inf
    %v2266 = vmax.f32 %v2264, %v2265
    %v2267 = vrot.slane %v2266, 4
    %v2268 = vmax.f32 %v2266, %v2267
    %v2269 = vrot.slane %v2268, 2
    %v2270 = vmax.f32 %v2268, %v2269
    %v2271 = vrot.slane %v2270, 1
    %v2272 = vmax.f32 %v2270, %v2271
    %v2273 = vsel %vm2125, %v1299, -inf
    %v2274 = vsel %vm2127, %v1300, -inf
    %v2275 = vmax.f32 %v2273, %v2274
    %v2276 = vrot.slane %v2275, 4
    %v2277 = vmax.f32 %v2275, %v2276
    %v2278 = vrot.slane %v2277, 2
    %v2279 = vmax.f32 %v2277, %v2278
    %v2280 = vrot.slane %v2279, 1
    %v2281 = vmax.f32 %v2279, %v2280
    %v2284 = vsel %vm2066, %v2281, %v2272
    %v2286 = vsel %vm2069, %v2284, -inf
    %2287 = vmax.xlane.f32.xlu0 %v2286
    %v2288 = vpop.xlane.xlu0 %2287
    %v2289 = vsel %vm2073, %v2284, -inf
    %2290 = vmax.xlane.f32.xlu0 %v2289
    %v2291 = vpop.xlane.xlu0 %2290
    %v2292 = vsel %vm2077, %v2284, -inf
    %2293 = vmax.xlane.f32.xlu0 %v2292
    %v2294 = vpop.xlane.xlu0 %2293
    %v2295 = vsel %vm2081, %v2284, -inf
    %2296 = vmax.xlane.f32.xlu0 %v2295
    %v2297 = vpop.xlane.xlu0 %2296
    %v2298 = vsel %vm2085, %v2288, %v2291
    %v2299 = vsel %vm2087, %v2298, %v2294
    %v2300 = vsel %vm2089, %v2299, %v2297
    %v2301 = vsel %vm2164, %v1298, -inf
    %v2302 = vrot.slane %v2301, 4
    %v2303 = vmax.f32 %v2301, %v2302
    %v2304 = vrot.slane %v2303, 2
    %v2305 = vmax.f32 %v2303, %v2304
    %v2306 = vrot.slane %v2305, 1
    %v2307 = vmax.f32 %v2305, %v2306
    %v2308 = vsel %vm2164, %v1300, -inf
    %v2309 = vrot.slane %v2308, 4
    %v2310 = vmax.f32 %v2308, %v2309
    %v2311 = vrot.slane %v2310, 2
    %v2312 = vmax.f32 %v2310, %v2311
    %v2313 = vrot.slane %v2312, 1
    %v2314 = vmax.f32 %v2312, %v2313
    %v2317 = vsel %vm2066, %v2314, %v2307
    %v2319 = vsel %vm2069, %v2317, -inf
    %2320 = vmax.xlane.f32.xlu0 %v2319
    %v2321 = vpop.xlane.xlu0 %2320
    %v2322 = vsel %vm2073, %v2317, -inf
    %2323 = vmax.xlane.f32.xlu0 %v2322
    %v2324 = vpop.xlane.xlu0 %2323
    %v2325 = vsel %vm2077, %v2317, -inf
    %2326 = vmax.xlane.f32.xlu0 %v2325
    %v2327 = vpop.xlane.xlu0 %2326
    %v2328 = vsel %vm2081, %v2317, -inf
    %2329 = vmax.xlane.f32.xlu0 %v2328
    %v2330 = vpop.xlane.xlu0 %2329
    %v2331 = vsel %vm2085, %v2321, %v2324
    %v2332 = vsel %vm2087, %v2331, %v2327
    %v2333 = vsel %vm2089, %v2332, %v2330
    %v2334 = vsel %vm2049, %v1671, -inf
    %v2335 = vrot.slane %v2334, 4
    %v2336 = vmax.f32 %v2334, %v2335
    %v2337 = vrot.slane %v2336, 2
    %v2338 = vmax.f32 %v2336, %v2337
    %v2339 = vrot.slane %v2338, 1
    %v2340 = vmax.f32 %v2338, %v2339
    %v2341 = vsel %vm2049, %v1673, -inf
    %v2342 = vrot.slane %v2341, 4
    %v2343 = vmax.f32 %v2341, %v2342
    %v2344 = vrot.slane %v2343, 2
    %v2345 = vmax.f32 %v2343, %v2344
    %v2346 = vrot.slane %v2345, 1
    %v2347 = vmax.f32 %v2345, %v2346
    %v2350 = vsel %vm2066, %v2347, %v2340
    %v2352 = vsel %vm2069, %v2350, -inf
    %2353 = vmax.xlane.f32.xlu0 %v2352
    %v2354 = vpop.xlane.xlu0 %2353
    %v2355 = vsel %vm2073, %v2350, -inf
    %2356 = vmax.xlane.f32.xlu0 %v2355
    %v2357 = vpop.xlane.xlu0 %2356
    %v2358 = vsel %vm2077, %v2350, -inf
    %2359 = vmax.xlane.f32.xlu0 %v2358
    %v2360 = vpop.xlane.xlu0 %2359
    %v2361 = vsel %vm2081, %v2350, -inf
    %2362 = vmax.xlane.f32.xlu0 %v2361
    %v2363 = vpop.xlane.xlu0 %2362
    %v2364 = vsel %vm2085, %v2354, %v2357
    %v2365 = vsel %vm2087, %v2364, %v2360
    %v2366 = vsel %vm2089, %v2365, %v2363
    %v2367 = vsel %vm2091, %v1671, -inf
    %v2368 = vrot.slane %v2367, 4
    %v2369 = vmax.f32 %v2367, %v2368
    %v2370 = vrot.slane %v2369, 2
    %v2371 = vmax.f32 %v2369, %v2370
    %v2372 = vrot.slane %v2371, 1
    %v2373 = vmax.f32 %v2371, %v2372
    %v2374 = vsel %vm2091, %v1673, -inf
    %v2375 = vrot.slane %v2374, 4
    %v2376 = vmax.f32 %v2374, %v2375
    %v2377 = vrot.slane %v2376, 2
    %v2378 = vmax.f32 %v2376, %v2377
    %v2379 = vrot.slane %v2378, 1
    %v2380 = vmax.f32 %v2378, %v2379
    %v2383 = vsel %vm2066, %v2380, %v2373
    %v2385 = vsel %vm2069, %v2383, -inf
    %2386 = vmax.xlane.f32.xlu0 %v2385
    %v2387 = vpop.xlane.xlu0 %2386
    %v2388 = vsel %vm2073, %v2383, -inf
    %2389 = vmax.xlane.f32.xlu0 %v2388
    %v2390 = vpop.xlane.xlu0 %2389
    %v2391 = vsel %vm2077, %v2383, -inf
    %2392 = vmax.xlane.f32.xlu0 %v2391
    %v2393 = vpop.xlane.xlu0 %2392
    %v2394 = vsel %vm2081, %v2383, -inf
    %2395 = vmax.xlane.f32.xlu0 %v2394
    %v2396 = vpop.xlane.xlu0 %2395
    %v2397 = vsel %vm2085, %v2387, %v2390
    %v2398 = vsel %vm2087, %v2397, %v2393
    %v2399 = vsel %vm2089, %v2398, %v2396
    %v2400 = vsel %vm2125, %v1671, -inf
    %v2401 = vsel %vm2127, %v1672, -inf
    %v2402 = vmax.f32 %v2400, %v2401
    %v2403 = vrot.slane %v2402, 4
    %v2404 = vmax.f32 %v2402, %v2403
    %v2405 = vrot.slane %v2404, 2
    %v2406 = vmax.f32 %v2404, %v2405
    %v2407 = vrot.slane %v2406, 1
    %v2408 = vmax.f32 %v2406, %v2407
    %v2409 = vsel %vm2125, %v1673, -inf
    %v2410 = vsel %vm2127, %v1674, -inf
    %v2411 = vmax.f32 %v2409, %v2410
    %v2412 = vrot.slane %v2411, 4
    %v2413 = vmax.f32 %v2411, %v2412
    %v2414 = vrot.slane %v2413, 2
    %v2415 = vmax.f32 %v2413, %v2414
    %v2416 = vrot.slane %v2415, 1
    %v2417 = vmax.f32 %v2415, %v2416
    %v2420 = vsel %vm2066, %v2417, %v2408
    %v2422 = vsel %vm2069, %v2420, -inf
    %2423 = vmax.xlane.f32.xlu0 %v2422
    %v2424 = vpop.xlane.xlu0 %2423
    %v2425 = vsel %vm2073, %v2420, -inf
    %2426 = vmax.xlane.f32.xlu0 %v2425
    %v2427 = vpop.xlane.xlu0 %2426
    %v2428 = vsel %vm2077, %v2420, -inf
    %2429 = vmax.xlane.f32.xlu0 %v2428
    %v2430 = vpop.xlane.xlu0 %2429
    %v2431 = vsel %vm2081, %v2420, -inf
    %2432 = vmax.xlane.f32.xlu0 %v2431
    %v2433 = vpop.xlane.xlu0 %2432
    %v2434 = vsel %vm2085, %v2424, %v2427
    %v2435 = vsel %vm2087, %v2434, %v2430
    %v2436 = vsel %vm2089, %v2435, %v2433
    %v2437 = vsel %vm2164, %v1672, -inf
    %v2438 = vrot.slane %v2437, 4
    %v2439 = vmax.f32 %v2437, %v2438
    %v2440 = vrot.slane %v2439, 2
    %v2441 = vmax.f32 %v2439, %v2440
    %v2442 = vrot.slane %v2441, 1
    %v2443 = vmax.f32 %v2441, %v2442
    %v2444 = vsel %vm2164, %v1674, -inf
    %v2445 = vrot.slane %v2444, 4
    %v2446 = vmax.f32 %v2444, %v2445
    %v2447 = vrot.slane %v2446, 2
    %v2448 = vmax.f32 %v2446, %v2447
    %v2449 = vrot.slane %v2448, 1
    %v2450 = vmax.f32 %v2448, %v2449
    %v2453 = vsel %vm2066, %v2450, %v2443
    %v2455 = vsel %vm2069, %v2453, -inf
    %2456 = vmax.xlane.f32.xlu0 %v2455
    %v2457 = vpop.xlane.xlu0 %2456
    %v2458 = vsel %vm2073, %v2453, -inf
    %2459 = vmax.xlane.f32.xlu0 %v2458
    %v2460 = vpop.xlane.xlu0 %2459
    %v2461 = vsel %vm2077, %v2453, -inf
    %2462 = vmax.xlane.f32.xlu0 %v2461
    %v2463 = vpop.xlane.xlu0 %2462
    %v2464 = vsel %vm2081, %v2453, -inf
    %2465 = vmax.xlane.f32.xlu0 %v2464
    %v2466 = vpop.xlane.xlu0 %2465
    %v2467 = vsel %vm2085, %v2457, %v2460
    %v2468 = vsel %vm2087, %v2467, %v2463
    %v2469 = vsel %vm2089, %v2468, %v2466
    %v2470 = vsel %vm2049, %v2045, -inf
    %v2471 = vrot.slane %v2470, 4
    %v2472 = vmax.f32 %v2470, %v2471
    %v2473 = vrot.slane %v2472, 2
    %v2474 = vmax.f32 %v2472, %v2473
    %v2475 = vrot.slane %v2474, 1
    %v2476 = vmax.f32 %v2474, %v2475
    %v2477 = vsel %vm2049, %v2047, -inf
    %v2478 = vrot.slane %v2477, 4
    %v2479 = vmax.f32 %v2477, %v2478
    %v2480 = vrot.slane %v2479, 2
    %v2481 = vmax.f32 %v2479, %v2480
    %v2482 = vrot.slane %v2481, 1
    %v2483 = vmax.f32 %v2481, %v2482
    %v2486 = vsel %vm2066, %v2483, %v2476
    %v2488 = vsel %vm2069, %v2486, -inf
    %2489 = vmax.xlane.f32.xlu0 %v2488
    %v2490 = vpop.xlane.xlu0 %2489
    %v2491 = vsel %vm2073, %v2486, -inf
    %2492 = vmax.xlane.f32.xlu0 %v2491
    %v2493 = vpop.xlane.xlu0 %2492
    %v2494 = vsel %vm2077, %v2486, -inf
    %2495 = vmax.xlane.f32.xlu0 %v2494
    %v2496 = vpop.xlane.xlu0 %2495
    %v2497 = vsel %vm2081, %v2486, -inf
    %2498 = vmax.xlane.f32.xlu0 %v2497
    %v2499 = vpop.xlane.xlu0 %2498
    %v2500 = vsel %vm2085, %v2490, %v2493
    %v2501 = vsel %vm2087, %v2500, %v2496
    %v2502 = vsel %vm2089, %v2501, %v2499
    %v2503 = vsel %vm2091, %v2045, -inf
    %v2504 = vrot.slane %v2503, 4
    %v2505 = vmax.f32 %v2503, %v2504
    %v2506 = vrot.slane %v2505, 2
    %v2507 = vmax.f32 %v2505, %v2506
    %v2508 = vrot.slane %v2507, 1
    %v2509 = vmax.f32 %v2507, %v2508
    %v2510 = vsel %vm2091, %v2047, -inf
    %v2511 = vrot.slane %v2510, 4
    %v2512 = vmax.f32 %v2510, %v2511
    %v2513 = vrot.slane %v2512, 2
    %v2514 = vmax.f32 %v2512, %v2513
    %v2515 = vrot.slane %v2514, 1
    %v2516 = vmax.f32 %v2514, %v2515
    %v2519 = vsel %vm2066, %v2516, %v2509
    %v2521 = vsel %vm2069, %v2519, -inf
    %2522 = vmax.xlane.f32.xlu0 %v2521
    %v2523 = vpop.xlane.xlu0 %2522
    %v2524 = vsel %vm2073, %v2519, -inf
    %2525 = vmax.xlane.f32.xlu0 %v2524
    %v2526 = vpop.xlane.xlu0 %2525
    %v2527 = vsel %vm2077, %v2519, -inf
    %2528 = vmax.xlane.f32.xlu0 %v2527
    %v2529 = vpop.xlane.xlu0 %2528
    %v2530 = vsel %vm2081, %v2519, -inf
    %2531 = vmax.xlane.f32.xlu0 %v2530
    %v2532 = vpop.xlane.xlu0 %2531
    %v2533 = vsel %vm2085, %v2523, %v2526
    %v2534 = vsel %vm2087, %v2533, %v2529
    %v2535 = vsel %vm2089, %v2534, %v2532
    %v2536 = vsel %vm2125, %v2045, -inf
    %v2537 = vsel %vm2127, %v2046, -inf
    %v2538 = vmax.f32 %v2536, %v2537
    %v2539 = vrot.slane %v2538, 4
    %v2540 = vmax.f32 %v2538, %v2539
    %v2541 = vrot.slane %v2540, 2
    %v2542 = vmax.f32 %v2540, %v2541
    %v2543 = vrot.slane %v2542, 1
    %v2544 = vmax.f32 %v2542, %v2543
    %v2545 = vsel %vm2125, %v2047, -inf
    %v2546 = vsel %vm2127, %v2048, -inf
    %v2547 = vmax.f32 %v2545, %v2546
    %v2548 = vrot.slane %v2547, 4
    %v2549 = vmax.f32 %v2547, %v2548
    %v2550 = vrot.slane %v2549, 2
    %v2551 = vmax.f32 %v2549, %v2550
    %v2552 = vrot.slane %v2551, 1
    %v2553 = vmax.f32 %v2551, %v2552
    %v2556 = vsel %vm2066, %v2553, %v2544
    %v2558 = vsel %vm2069, %v2556, -inf
    %2559 = vmax.xlane.f32.xlu0 %v2558
    %v2560 = vpop.xlane.xlu0 %2559
    %v2561 = vsel %vm2073, %v2556, -inf
    %2562 = vmax.xlane.f32.xlu0 %v2561
    %v2563 = vpop.xlane.xlu0 %2562
    %v2564 = vsel %vm2077, %v2556, -inf
    %2565 = vmax.xlane.f32.xlu0 %v2564
    %v2566 = vpop.xlane.xlu0 %2565
    %v2567 = vsel %vm2081, %v2556, -inf
    %2568 = vmax.xlane.f32.xlu0 %v2567
    %v2569 = vpop.xlane.xlu0 %2568
    %v2570 = vsel %vm2085, %v2560, %v2563
    %v2571 = vsel %vm2087, %v2570, %v2566
    %v2572 = vsel %vm2089, %v2571, %v2569
    %v2573 = vsel %vm2164, %v2046, -inf
    %v2574 = vrot.slane %v2573, 4
    %v2575 = vmax.f32 %v2573, %v2574
    %v2576 = vrot.slane %v2575, 2
    %v2577 = vmax.f32 %v2575, %v2576
    %v2578 = vrot.slane %v2577, 1
    %v2579 = vmax.f32 %v2577, %v2578
    %v2580 = vsel %vm2164, %v2048, -inf
    %v2581 = vrot.slane %v2580, 4
    %v2582 = vmax.f32 %v2580, %v2581
    %v2583 = vrot.slane %v2582, 2
    %v2584 = vmax.f32 %v2582, %v2583
    %v2585 = vrot.slane %v2584, 1
    %v2586 = vmax.f32 %v2584, %v2585
    %v2589 = vsel %vm2066, %v2586, %v2579
    %v2591 = vsel %vm2069, %v2589, -inf
    %2592 = vmax.xlane.f32.xlu0 %v2591
    %v2593 = vpop.xlane.xlu0 %2592
    %v2594 = vsel %vm2073, %v2589, -inf
    %2595 = vmax.xlane.f32.xlu0 %v2594
    %v2596 = vpop.xlane.xlu0 %2595
    %v2597 = vsel %vm2077, %v2589, -inf
    %2598 = vmax.xlane.f32.xlu0 %v2597
    %v2599 = vpop.xlane.xlu0 %2598
    %v2600 = vsel %vm2081, %v2589, -inf
    %2601 = vmax.xlane.f32.xlu0 %v2600
    %v2602 = vpop.xlane.xlu0 %2601
    %v2603 = vsel %vm2085, %v2593, %v2596
    %v2604 = vsel %vm2087, %v2603, %v2599
    %v2605 = vsel %vm2089, %v2604, %v2602
    %2607 = vrot.lane.b32.xlu0 %v2124, 4
    %v2608 = vpop.permute.xlu0 %2607
    %2611 = vrot.lane.b32.xlu0 %v2163, 8
    %v2612 = vpop.permute.xlu0 %2611
    %2615 = vrot.lane.b32.xlu0 %v2197, 12
    %v2616 = vpop.permute.xlu0 %2615
    %vm2618 = vcmask 31744
    %v2619 = vsel %vm2618, %v2090, %v2608
    %vm2620 = vcmask 64512
    %v2621 = vsel %vm2620, %v2619, %v2612
    %vm2622 = vcmask 97280
    %v2623 = vsel %vm2622, %v2621, %v2616
    %2625 = vrot.lane.b32.xlu0 %v2263, 4
    %v2626 = vpop.permute.xlu0 %2625
    %2629 = vrot.lane.b32.xlu0 %v2300, 8
    %v2630 = vpop.permute.xlu0 %2629
    %2633 = vrot.lane.b32.xlu0 %v2333, 12
    %v2634 = vpop.permute.xlu0 %2633
    %v2636 = vsel %vm2618, %v2230, %v2626
    %v2637 = vsel %vm2620, %v2636, %v2630
    %v2638 = vsel %vm2622, %v2637, %v2634
    %2640 = vrot.lane.b32.xlu0 %v2399, 4
    %v2641 = vpop.permute.xlu0 %2640
    %2644 = vrot.lane.b32.xlu0 %v2436, 8
    %v2645 = vpop.permute.xlu0 %2644
    %2648 = vrot.lane.b32.xlu0 %v2469, 12
    %v2649 = vpop.permute.xlu0 %2648
    %v2651 = vsel %vm2618, %v2366, %v2641
    %v2652 = vsel %vm2620, %v2651, %v2645
    %v2653 = vsel %vm2622, %v2652, %v2649
    %2655 = vrot.lane.b32.xlu0 %v2535, 4
    %v2656 = vpop.permute.xlu0 %2655
    %2659 = vrot.lane.b32.xlu0 %v2572, 8
    %v2660 = vpop.permute.xlu0 %2659
    %2663 = vrot.lane.b32.xlu0 %v2605, 12
    %v2664 = vpop.permute.xlu0 %2663
    %v2666 = vsel %vm2618, %v2502, %v2656
    %v2667 = vsel %vm2620, %v2666, %v2660
    %v2668 = vsel %vm2622, %v2667, %v2664
    %v2669 = vld [vmem:[#allocation10] sm:$0xff]
    %v2670 = vld [vmem:[#allocation10 + $0x8] sm:$0xff]
    %v2671 = vld [vmem:[#allocation11] sm:$0xff]
    %v2672 = vld [vmem:[#allocation11 + $0x8] sm:$0xff]
    %v2673 = vld [vmem:[#allocation11 + $0x10] sm:$0xff]
    %v2674 = vld [vmem:[#allocation11 + $0x18] sm:$0xff]
    %v2675 = vld [vmem:[#allocation13] sm:$0x1]
    %v2677 = vrot.slane %v2638, 6
    %v2680 = vrot.slane %v2653, 4
    %v2683 = vrot.slane %v2668, 2
    %vm2685 = vcmask 1041408
    %v2686 = vsel %vm2685, %v2623, %v2677
    %vm2687 = vcmask 1043456
    %v2688 = vsel %vm2687, %v2686, %v2680
    %vm2689 = vcmask 1045504
    %v2690 = vsel %vm2689, %v2688, %v2683
    %v2692 = vlaneseq
    %v2693 = vshrl.u32 %v2692, 7
    %v2694 = vsub.s32 0, %v2693
    %v2695 = vrot.slane %v2675, %v2694
    %vm2697 = vcmask 130048
    %v2699 = vsel %vm2697, %v2690, 0
    %2701 = vmatprep.subr.mxu0 0.0
    %2702 = vmatpush1.msra.mxu0 %v2669
    %2703 = vmatprep.subr.mxu0 0.0
    %2704 = vmatpush1.msra.mxu0 %v2670
    %2705 = vmatprep.subr.mxu0 0.0
    %2706 = vmatpush1.msra.mxu0 0.0
    %2707 = vmatprep.subr.mxu0 0.0
    %2708 = vmatpush1.msra.mxu0 0.0
    %2709 = vmatprep.subr.mxu0 0.0
    %2710 = vmatpush1.msra.mxu0 0.0
    %2711 = vmatprep.subr.mxu0 0.0
    %2712 = vmatpush1.msra.mxu0 0.0
    %2713 = vmatprep.subr.mxu0 0.0
    %2714 = vmatpush1.msra.mxu0 0.0
    %2715 = vmatprep.subr.mxu0 0.0
    %2716 = vmatpush1.msra.mxu0 0.0
    %2717 = vmatprep.subr.mxu0 0.0
    %2718 = vmatpush1.msra.mxu0 0.0
    %2719 = vmatprep.subr.mxu0 0.0
    %2720 = vmatpush1.msra.mxu0 0.0
    %2721 = vmatprep.subr.mxu0 0.0
    %2722 = vmatpush1.msra.mxu0 0.0
    %2723 = vmatprep.subr.mxu0 0.0
    %2724 = vmatpush1.msra.mxu0 0.0
    %2725 = vmatprep.subr.mxu0 0.0
    %2726 = vmatpush1.msra.mxu0 0.0
    %2727 = vmatprep.subr.mxu0 0.0
    %2728 = vmatpush1.msra.mxu0 0.0
    %2729 = vmatprep.subr.mxu0 0.0
    %2730 = vmatpush1.msra.mxu0 0.0
    %2731 = vmatprep.subr.mxu0 0.0
    %2732 = vmatpush1.msra.mxu0 0.0
    %2733 = vmatprep.subr.mxu0 0.0
    %2734 = vmatpush1.msra.mxu0 0.0
    %2735 = vmatprep.subr.mxu0 0.0
    %2736 = vmatpush1.msra.mxu0 0.0
    %2737 = vmatprep.subr.mxu0 0.0
    %2738 = vmatpush1.msra.mxu0 0.0
    %2739 = vmatprep.subr.mxu0 0.0
    %2740 = vmatpush1.msra.mxu0 0.0
    %2741 = vmatprep.subr.mxu0 0.0
    %2742 = vmatpush1.msra.mxu0 0.0
    %2743 = vmatprep.subr.mxu0 0.0
    %2744 = vmatpush1.msra.mxu0 0.0
    %2745 = vmatprep.subr.mxu0 0.0
    %2746 = vmatpush1.msra.mxu0 0.0
    %2747 = vmatprep.subr.mxu0 0.0
    %2748 = vmatpush1.msra.mxu0 0.0
    %2749 = vmatprep.subr.mxu0 0.0
    %2750 = vmatpush1.msra.mxu0 0.0
    %2751 = vmatprep.subr.mxu0 0.0
    %2752 = vmatpush1.msra.mxu0 0.0
    %2753 = vmatprep.subr.mxu0 0.0
    %2754 = vmatpush1.msra.mxu0 0.0
    %2755 = vmatprep.subr.mxu0 0.0
    %2756 = vmatpush1.msra.mxu0 0.0
    %2757 = vmatprep.subr.mxu0 0.0
    %2758 = vmatpush1.msra.mxu0 0.0
    %2759 = vmatprep.subr.mxu0 0.0
    %2760 = vmatpush1.msra.mxu0 0.0
    %2761 = vmatprep.subr.mxu0 0.0
    %2762 = vmatpush1.msra.mxu0 0.0
    %2763 = vmatprep.subr.mxu0 0.0
    %2764 = vmatpush1.msra.mxu0 0.0
    %2765 = vmatprep.mubr.f32.mxu0 0.0
    %2766 = vmatmul.mubr.f32.gmra.mrb[0].mxu0 %v2699
    %v2767 = vpop.f32.mrb[0].mxu0
    %v2768 = vadd.f32 %v2695, %v2767
    %v2769 = vpop.f32.mrb[0].mxu0
    %2770 = vdwg.mxu0
    %v2771 = vmul.f32 %v2768, 0.5
    %v2772 = vtanh.pop %v2771
    %v2773 = vadd.f32 %v2772, 1.0
    %v2774 = vmul.f32 %v2773, 0.5
    %v2775 = vtanh.pop %v2768
    %2777 = vrot.lane.b32.xlu0 %v2775, 64
    %v2778 = vpop.permute.xlu0 %2777
    %v2780 = vmul.f32 %v2774, %v2778
    %v2781 = vtanh.pop %v2780
    %2783 = vrot.lane.b32.xlu0 %v2781, 96
    %v2784 = vpop.permute.xlu0 %2783
    %v2786 = vmul.f32 %v2774, %v2784
    %2788 = vrot.lane.b32.xlu0 %v2786, 32
    %v2789 = vpop.permute.xlu0 %2788
    %vm2790 = vcmask 261120
    %v2791 = vsel %vm2790, %v2789, 0
    %2793 = vmatprep.subr.mxu0 0.0
    %2794 = vmatpush1.msra.mxu0 %v2671
    %2795 = vmatprep.subr.mxu0 0.0
    %2796 = vmatpush1.msra.mxu0 %v2672
    %2797 = vmatprep.subr.mxu0 0.0
    %2798 = vmatpush1.msra.mxu0 %v2673
    %2799 = vmatprep.subr.mxu0 0.0
    %2800 = vmatpush1.msra.mxu0 %v2674
    %2801 = vmatprep.subr.mxu0 0.0
    %2802 = vmatpush1.msra.mxu0 0.0
    %2803 = vmatprep.subr.mxu0 0.0
    %2804 = vmatpush1.msra.mxu0 0.0
    %2805 = vmatprep.subr.mxu0 0.0
    %2806 = vmatpush1.msra.mxu0 0.0
    %2807 = vmatprep.subr.mxu0 0.0
    %2808 = vmatpush1.msra.mxu0 0.0
    %2809 = vmatprep.subr.mxu0 0.0
    %2810 = vmatpush1.msra.mxu0 0.0
    %2811 = vmatprep.subr.mxu0 0.0
    %2812 = vmatpush1.msra.mxu0 0.0
    %2813 = vmatprep.subr.mxu0 0.0
    %2814 = vmatpush1.msra.mxu0 0.0
    %2815 = vmatprep.subr.mxu0 0.0
    %2816 = vmatpush1.msra.mxu0 0.0
    %2817 = vmatprep.subr.mxu0 0.0
    %2818 = vmatpush1.msra.mxu0 0.0
    %2819 = vmatprep.subr.mxu0 0.0
    %2820 = vmatpush1.msra.mxu0 0.0
    %2821 = vmatprep.subr.mxu0 0.0
    %2822 = vmatpush1.msra.mxu0 0.0
    %2823 = vmatprep.subr.mxu0 0.0
    %2824 = vmatpush1.msra.mxu0 0.0
    %2825 = vmatprep.subr.mxu0 0.0
    %2826 = vmatpush1.msra.mxu0 0.0
    %2827 = vmatprep.subr.mxu0 0.0
    %2828 = vmatpush1.msra.mxu0 0.0
    %2829 = vmatprep.subr.mxu0 0.0
    %2830 = vmatpush1.msra.mxu0 0.0
    %2831 = vmatprep.subr.mxu0 0.0
    %2832 = vmatpush1.msra.mxu0 0.0
    %2833 = vmatprep.subr.mxu0 0.0
    %2834 = vmatpush1.msra.mxu0 0.0
    %2835 = vmatprep.subr.mxu0 0.0
    %2836 = vmatpush1.msra.mxu0 0.0
    %2837 = vmatprep.subr.mxu0 0.0
    %2838 = vmatpush1.msra.mxu0 0.0
    %2839 = vmatprep.subr.mxu0 0.0
    %2840 = vmatpush1.msra.mxu0 0.0
    %2841 = vmatprep.subr.mxu0 0.0
    %2842 = vmatpush1.msra.mxu0 0.0
    %2843 = vmatprep.subr.mxu0 0.0
    %2844 = vmatpush1.msra.mxu0 0.0
    %2845 = vmatprep.subr.mxu0 0.0
    %2846 = vmatpush1.msra.mxu0 0.0
    %2847 = vmatprep.subr.mxu0 0.0
    %2848 = vmatpush1.msra.mxu0 0.0
    %2849 = vmatprep.subr.mxu0 0.0
    %2850 = vmatpush1.msra.mxu0 0.0
    %2851 = vmatprep.subr.mxu0 0.0
    %2852 = vmatpush1.msra.mxu0 0.0
    %2853 = vmatprep.subr.mxu0 0.0
    %2854 = vmatpush1.msra.mxu0 0.0
    %2855 = vmatprep.subr.mxu0 0.0
    %2856 = vmatpush1.msra.mxu0 0.0
    %2857 = vmatprep.mubr.f32.mxu0 0.0
    %2858 = vmatmul.mubr.f32.gmra.mrb[0].mxu0 %v2791
    %v2859 = vpop.f32.mrb[0].mxu0
    %v2860 = vadd.f32 0.0, %v2859
    %v2861 = vpop.f32.mrb[0].mxu0
    %2862 = vdwg.mxu0
    %v2864 = vrot.slane %v2860, 6
    %v2866 = vadd.f32 %v2768, %v2864
    %v2867 = vmul.f32 %v2866, 0.5
    %v2868 = vtanh.pop %v2867
    %v2869 = vadd.f32 %v2868, 1.0
    %v2870 = vmul.f32 %v2869, 0.5
    %v2871 = vtanh.pop %v2866
    %v2873 = vrot.slane %v2780, 6
    %2874 = vrot.lane.b32.xlu0 %v2873, 32
    %v2875 = vpop.permute.xlu0 %2874
    %v2877 = vmul.f32 %v2870, %v2875
    %2879 = vrot.lane.b32.xlu0 %v2871, 64
    %v2880 = vpop.permute.xlu0 %2879
    %v2882 = vmul.f32 %v2870, %v2880
    %2884 = vrot.lane.b32.xlu0 %v2882, 32
    %v2885 = vpop.permute.xlu0 %2884
    %v2887 = vadd.f32 %v2877, %v2885
    %v2888 = vtanh.pop %v2887
    %2890 = vrot.lane.b32.xlu0 %v2888, 64
    %v2891 = vpop.permute.xlu0 %2890
    %v2893 = vmul.f32 %v2870, %v2891
    %v2895 = vrot.slane %v2893, 2
    %2896 = vrot.lane.b32.xlu0 %v2895, 32
    %v2897 = vpop.permute.xlu0 %2896
    %v2898 = vsel %vm2790, %v2897, 0
    %2900 = vmatprep.subr.mxu0 0.0
    %2901 = vmatpush1.msra.mxu0 %v2671
    %2902 = vmatprep.subr.mxu0 0.0
    %2903 = vmatpush1.msra.mxu0 %v2672
    %2904 = vmatprep.subr.mxu0 0.0
    %2905 = vmatpush1.msra.mxu0 %v2673
    %2906 = vmatprep.subr.mxu0 0.0
    %2907 = vmatpush1.msra.mxu0 %v2674
    %2908 = vmatprep.subr.mxu0 0.0
    %2909 = vmatpush1.msra.mxu0 0.0
    %2910 = vmatprep.subr.mxu0 0.0
    %2911 = vmatpush1.msra.mxu0 0.0
    %2912 = vmatprep.subr.mxu0 0.0
    %2913 = vmatpush1.msra.mxu0 0.0
    %2914 = vmatprep.subr.mxu0 0.0
    %2915 = vmatpush1.msra.mxu0 0.0
    %2916 = vmatprep.subr.mxu0 0.0
    %2917 = vmatpush1.msra.mxu0 0.0
    %2918 = vmatprep.subr.mxu0 0.0
    %2919 = vmatpush1.msra.mxu0 0.0
    %2920 = vmatprep.subr.mxu0 0.0
    %2921 = vmatpush1.msra.mxu0 0.0
    %2922 = vmatprep.subr.mxu0 0.0
    %2923 = vmatpush1.msra.mxu0 0.0
    %2924 = vmatprep.subr.mxu0 0.0
    %2925 = vmatpush1.msra.mxu0 0.0
    %2926 = vmatprep.subr.mxu0 0.0
    %2927 = vmatpush1.msra.mxu0 0.0
    %2928 = vmatprep.subr.mxu0 0.0
    %2929 = vmatpush1.msra.mxu0 0.0
    %2930 = vmatprep.subr.mxu0 0.0
    %2931 = vmatpush1.msra.mxu0 0.0
    %2932 = vmatprep.subr.mxu0 0.0
    %2933 = vmatpush1.msra.mxu0 0.0
    %2934 = vmatprep.subr.mxu0 0.0
    %2935 = vmatpush1.msra.mxu0 0.0
    %2936 = vmatprep.subr.mxu0 0.0
    %2937 = vmatpush1.msra.mxu0 0.0
    %2938 = vmatprep.subr.mxu0 0.0
    %2939 = vmatpush1.msra.mxu0 0.0
    %2940 = vmatprep.subr.mxu0 0.0
    %2941 = vmatpush1.msra.mxu0 0.0
    %2942 = vmatprep.subr.mxu0 0.0
    %2943 = vmatpush1.msra.mxu0 0.0
    %2944 = vmatprep.subr.mxu0 0.0
    %2945 = vmatpush1.msra.mxu0 0.0
    %2946 = vmatprep.subr.mxu0 0.0
    %2947 = vmatpush1.msra.mxu0 0.0
    %2948 = vmatprep.subr.mxu0 0.0
    %2949 = vmatpush1.msra.mxu0 0.0
    %2950 = vmatprep.subr.mxu0 0.0
    %2951 = vmatpush1.msra.mxu0 0.0
    %2952 = vmatprep.subr.mxu0 0.0
    %2953 = vmatpush1.msra.mxu0 0.0
    %2954 = vmatprep.subr.mxu0 0.0
    %2955 = vmatpush1.msra.mxu0 0.0
    %2956 = vmatprep.subr.mxu0 0.0
    %2957 = vmatpush1.msra.mxu0 0.0
    %2958 = vmatprep.subr.mxu0 0.0
    %2959 = vmatpush1.msra.mxu0 0.0
    %2960 = vmatprep.subr.mxu0 0.0
    %2961 = vmatpush1.msra.mxu0 0.0
    %2962 = vmatprep.subr.mxu0 0.0
    %2963 = vmatpush1.msra.mxu0 0.0
    %2964 = vmatprep.mubr.f32.mxu0 0.0
    %2965 = vmatmul.mubr.f32.gmra.mrb[0].mxu0 %v2898
    %v2966 = vpop.f32.mrb[0].mxu0
    %v2967 = vadd.f32 0.0, %v2966
    %v2968 = vpop.f32.mrb[0].mxu0
    %2969 = vdwg.mxu0
    %v2971 = vrot.slane %v2967, 4
    %v2973 = vadd.f32 %v2768, %v2971
    %v2974 = vmul.f32 %v2973, 0.5
    %v2975 = vtanh.pop %v2974
    %v2976 = vadd.f32 %v2975, 1.0
    %v2977 = vmul.f32 %v2976, 0.5
    %v2978 = vtanh.pop %v2973
    %v2980 = vrot.slane %v2887, 6
    %v2982 = vmul.f32 %v2977, %v2980
    %2984 = vrot.lane.b32.xlu0 %v2978, 64
    %v2985 = vpop.permute.xlu0 %2984
    %v2987 = vmul.f32 %v2977, %v2985
    %2989 = vrot.lane.b32.xlu0 %v2987, 32
    %v2990 = vpop.permute.xlu0 %2989
    %v2992 = vadd.f32 %v2982, %v2990
    %v2993 = vtanh.pop %v2992
    %2995 = vrot.lane.b32.xlu0 %v2993, 64
    %v2996 = vpop.permute.xlu0 %2995
    %v2998 = vmul.f32 %v2977, %v2996
    %v3000 = vrot.slane %v2998, 4
    %3001 = vrot.lane.b32.xlu0 %v3000, 32
    %v3002 = vpop.permute.xlu0 %3001
    %v3003 = vsel %vm2790, %v3002, 0
    %3005 = vmatprep.subr.mxu0 0.0
    %3006 = vmatpush1.msra.mxu0 %v2671
    %3007 = vmatprep.subr.mxu0 0.0
    %3008 = vmatpush1.msra.mxu0 %v2672
    %3009 = vmatprep.subr.mxu0 0.0
    %3010 = vmatpush1.msra.mxu0 %v2673
    %3011 = vmatprep.subr.mxu0 0.0
    %3012 = vmatpush1.msra.mxu0 %v2674
    %3013 = vmatprep.subr.mxu0 0.0
    %3014 = vmatpush1.msra.mxu0 0.0
    %3015 = vmatprep.subr.mxu0 0.0
    %3016 = vmatpush1.msra.mxu0 0.0
    %3017 = vmatprep.subr.mxu0 0.0
    %3018 = vmatpush1.msra.mxu0 0.0
    %3019 = vmatprep.subr.mxu0 0.0
    %3020 = vmatpush1.msra.mxu0 0.0
    %3021 = vmatprep.subr.mxu0 0.0
    %3022 = vmatpush1.msra.mxu0 0.0
    %3023 = vmatprep.subr.mxu0 0.0
    %3024 = vmatpush1.msra.mxu0 0.0
    %3025 = vmatprep.subr.mxu0 0.0
    %3026 = vmatpush1.msra.mxu0 0.0
    %3027 = vmatprep.subr.mxu0 0.0
    %3028 = vmatpush1.msra.mxu0 0.0
    %3029 = vmatprep.subr.mxu0 0.0
    %3030 = vmatpush1.msra.mxu0 0.0
    %3031 = vmatprep.subr.mxu0 0.0
    %3032 = vmatpush1.msra.mxu0 0.0
    %3033 = vmatprep.subr.mxu0 0.0
    %3034 = vmatpush1.msra.mxu0 0.0
    %3035 = vmatprep.subr.mxu0 0.0
    %3036 = vmatpush1.msra.mxu0 0.0
    %3037 = vmatprep.subr.mxu0 0.0
    %3038 = vmatpush1.msra.mxu0 0.0
    %3039 = vmatprep.subr.mxu0 0.0
    %3040 = vmatpush1.msra.mxu0 0.0
    %3041 = vmatprep.subr.mxu0 0.0
    %3042 = vmatpush1.msra.mxu0 0.0
    %3043 = vmatprep.subr.mxu0 0.0
    %3044 = vmatpush1.msra.mxu0 0.0
    %3045 = vmatprep.subr.mxu0 0.0
    %3046 = vmatpush1.msra.mxu0 0.0
    %3047 = vmatprep.subr.mxu0 0.0
    %3048 = vmatpush1.msra.mxu0 0.0
    %3049 = vmatprep.subr.mxu0 0.0
    %3050 = vmatpush1.msra.mxu0 0.0
    %3051 = vmatprep.subr.mxu0 0.0
    %3052 = vmatpush1.msra.mxu0 0.0
    %3053 = vmatprep.subr.mxu0 0.0
    %3054 = vmatpush1.msra.mxu0 0.0
    %3055 = vmatprep.subr.mxu0 0.0
    %3056 = vmatpush1.msra.mxu0 0.0
    %3057 = vmatprep.subr.mxu0 0.0
    %3058 = vmatpush1.msra.mxu0 0.0
    %3059 = vmatprep.subr.mxu0 0.0
    %3060 = vmatpush1.msra.mxu0 0.0
    %3061 = vmatprep.subr.mxu0 0.0
    %3062 = vmatpush1.msra.mxu0 0.0
    %3063 = vmatprep.subr.mxu0 0.0
    %3064 = vmatpush1.msra.mxu0 0.0
    %3065 = vmatprep.subr.mxu0 0.0
    %3066 = vmatpush1.msra.mxu0 0.0
    %3067 = vmatprep.subr.mxu0 0.0
    %3068 = vmatpush1.msra.mxu0 0.0
    %3069 = vmatprep.mubr.f32.mxu0 0.0
    %3070 = vmatmul.mubr.f32.gmra.mrb[0].mxu0 %v3003
    %v3071 = vpop.f32.mrb[0].mxu0
    %v3072 = vadd.f32 0.0, %v3071
    %v3073 = vpop.f32.mrb[0].mxu0
    %3074 = vdwg.mxu0
    %v3076 = vrot.slane %v3072, 2
    %v3078 = vadd.f32 %v2768, %v3076
    %v3079 = vmul.f32 %v3078, 0.5
    %v3080 = vtanh.pop %v3079
    %v3081 = vadd.f32 %v3080, 1.0
    %v3082 = vmul.f32 %v3081, 0.5
    %v3083 = vtanh.pop %v3078
    %v3085 = vrot.slane %v2992, 6
    %v3087 = vmul.f32 %v3082, %v3085
    %3089 = vrot.lane.b32.xlu0 %v3083, 64
    %v3090 = vpop.permute.xlu0 %3089
    %v3092 = vmul.f32 %v3082, %v3090
    %3094 = vrot.lane.b32.xlu0 %v3092, 32
    %v3095 = vpop.permute.xlu0 %3094
    %v3097 = vadd.f32 %v3087, %v3095
    %v3098 = vtanh.pop %v3097
    %3100 = vrot.lane.b32.xlu0 %v3098, 64
    %v3101 = vpop.permute.xlu0 %3100
    %v3103 = vmul.f32 %v3082, %v3101
    %v3104 = vld [vmem:[%s8] sm:$0xff]
    %v3105 = vld [vmem:[%s8 + $0x8] sm:$0xff]
    %v3106 = vld [vmem:[%s8 + $0x10] sm:$0xff]
    %v3107 = vld [vmem:[%s8 + $0x18] sm:$0xff]
    %v3108 = vld [vmem:[#allocation14] sm:$0xff]
    %v3109 = vld [vmem:[#allocation14 + $0x8] sm:$0xff]
    %v3110 = vld [vmem:[#allocation14 + $0x10] sm:$0xff]
    %v3111 = vld [vmem:[#allocation14 + $0x18] sm:$0xff]
    %v3112 = vld [vmem:[%s10] sm:$0x1]
    %v3113 = vsel %vm2685, %v2786, %v2893
    %v3114 = vsel %vm2687, %v3113, %v2998
    %v3115 = vsel %vm2689, %v3114, %v3103
    %v3117 = vlaneseq
    %v3118 = vshrl.u32 %v3117, 7
    %v3119 = vsub.s32 0, %v3118
    %v3120 = vrot.slane %v3112, %v3119
    %3123 = vrot.lane.b32.xlu0 %v3115, 32
    %v3124 = vpop.permute.xlu0 %3123
    %v3125 = vsel %vm2790, %v3124, 0
    %3127 = vmatprep.subr.mxu0 0.0
    %3128 = vmatpush1.msra.mxu0 %v3104
    %3129 = vmatprep.subr.mxu0 0.0
    %3130 = vmatpush1.msra.mxu0 %v3105
    %3131 = vmatprep.subr.mxu0 0.0
    %3132 = vmatpush1.msra.mxu0 %v3106
    %3133 = vmatprep.subr.mxu0 0.0
    %3134 = vmatpush1.msra.mxu0 %v3107
    %3135 = vmatprep.subr.mxu0 0.0
    %3136 = vmatpush1.msra.mxu0 0.0
    %3137 = vmatprep.subr.mxu0 0.0
    %3138 = vmatpush1.msra.mxu0 0.0
    %3139 = vmatprep.subr.mxu0 0.0
    %3140 = vmatpush1.msra.mxu0 0.0
    %3141 = vmatprep.subr.mxu0 0.0
    %3142 = vmatpush1.msra.mxu0 0.0
    %3143 = vmatprep.subr.mxu0 0.0
    %3144 = vmatpush1.msra.mxu0 0.0
    %3145 = vmatprep.subr.mxu0 0.0
    %3146 = vmatpush1.msra.mxu0 0.0
    %3147 = vmatprep.subr.mxu0 0.0
    %3148 = vmatpush1.msra.mxu0 0.0
    %3149 = vmatprep.subr.mxu0 0.0
    %3150 = vmatpush1.msra.mxu0 0.0
    %3151 = vmatprep.subr.mxu0 0.0
    %3152 = vmatpush1.msra.mxu0 0.0
    %3153 = vmatprep.subr.mxu0 0.0
    %3154 = vmatpush1.msra.mxu0 0.0
    %3155 = vmatprep.subr.mxu0 0.0
    %3156 = vmatpush1.msra.mxu0 0.0
    %3157 = vmatprep.subr.mxu0 0.0
    %3158 = vmatpush1.msra.mxu0 0.0
    %3159 = vmatprep.subr.mxu0 0.0
    %3160 = vmatpush1.msra.mxu0 0.0
    %3161 = vmatprep.subr.mxu0 0.0
    %3162 = vmatpush1.msra.mxu0 0.0
    %3163 = vmatprep.subr.mxu0 0.0
    %3164 = vmatpush1.msra.mxu0 0.0
    %3165 = vmatprep.subr.mxu0 0.0
    %3166 = vmatpush1.msra.mxu0 0.0
    %3167 = vmatprep.subr.mxu0 0.0
    %3168 = vmatpush1.msra.mxu0 0.0
    %3169 = vmatprep.subr.mxu0 0.0
    %3170 = vmatpush1.msra.mxu0 0.0
    %3171 = vmatprep.subr.mxu0 0.0
    %3172 = vmatpush1.msra.mxu0 0.0
    %3173 = vmatprep.subr.mxu0 0.0
    %3174 = vmatpush1.msra.mxu0 0.0
    %3175 = vmatprep.subr.mxu0 0.0
    %3176 = vmatpush1.msra.mxu0 0.0
    %3177 = vmatprep.subr.mxu0 0.0
    %3178 = vmatpush1.msra.mxu0 0.0
    %3179 = vmatprep.subr.mxu0 0.0
    %3180 = vmatpush1.msra.mxu0 0.0
    %3181 = vmatprep.subr.mxu0 0.0
    %3182 = vmatpush1.msra.mxu0 0.0
    %3183 = vmatprep.subr.mxu0 0.0
    %3184 = vmatpush1.msra.mxu0 0.0
    %3185 = vmatprep.subr.mxu0 0.0
    %3186 = vmatpush1.msra.mxu0 0.0
    %3187 = vmatprep.subr.mxu0 0.0
    %3188 = vmatpush1.msra.mxu0 0.0
    %3189 = vmatprep.subr.mxu0 0.0
    %3190 = vmatpush1.msra.mxu0 0.0
    %3191 = vmatprep.mubr.f32.mxu0 0.0
    %3192 = vmatmul.mubr.f32.gmra.mrb[0].mxu0 %v3125
    %v3193 = vpop.f32.mrb[0].mxu0
    %v3194 = vadd.f32 %v3120, %v3193
    %v3195 = vpop.f32.mrb[0].mxu0
    %3196 = vdwg.mxu0
    %v3197 = vmul.f32 %v3194, 0.5
    %v3198 = vtanh.pop %v3197
    %v3199 = vadd.f32 %v3198, 1.0
    %v3200 = vmul.f32 %v3199, 0.5
    %v3201 = vtanh.pop %v3194
    %3203 = vrot.lane.b32.xlu0 %v3201, 64
    %v3204 = vpop.permute.xlu0 %3203
    %v3206 = vmul.f32 %v3200, %v3204
    %v3207 = vtanh.pop %v3206
    %3209 = vrot.lane.b32.xlu0 %v3207, 96
    %v3210 = vpop.permute.xlu0 %3209
    %v3212 = vmul.f32 %v3200, %v3210
    %3214 = vrot.lane.b32.xlu0 %v3212, 32
    %v3215 = vpop.permute.xlu0 %3214
    %v3216 = vsel %vm2790, %v3215, 0
    %3218 = vmatprep.subr.mxu0 0.0
    %3219 = vmatpush1.msra.mxu0 %v3108
    %3220 = vmatprep.subr.mxu0 0.0
    %3221 = vmatpush1.msra.mxu0 %v3109
    %3222 = vmatprep.subr.mxu0 0.0
    %3223 = vmatpush1.msra.mxu0 %v3110
    %3224 = vmatprep.subr.mxu0 0.0
    %3225 = vmatpush1.msra.mxu0 %v3111
    %3226 = vmatprep.subr.mxu0 0.0
    %3227 = vmatpush1.msra.mxu0 0.0
    %3228 = vmatprep.subr.mxu0 0.0
    %3229 = vmatpush1.msra.mxu0 0.0
    %3230 = vmatprep.subr.mxu0 0.0
    %3231 = vmatpush1.msra.mxu0 0.0
    %3232 = vmatprep.subr.mxu0 0.0
    %3233 = vmatpush1.msra.mxu0 0.0
    %3234 = vmatprep.subr.mxu0 0.0
    %3235 = vmatpush1.msra.mxu0 0.0
    %3236 = vmatprep.subr.mxu0 0.0
    %3237 = vmatpush1.msra.mxu0 0.0
    %3238 = vmatprep.subr.mxu0 0.0
    %3239 = vmatpush1.msra.mxu0 0.0
    %3240 = vmatprep.subr.mxu0 0.0
    %3241 = vmatpush1.msra.mxu0 0.0
    %3242 = vmatprep.subr.mxu0 0.0
    %3243 = vmatpush1.msra.mxu0 0.0
    %3244 = vmatprep.subr.mxu0 0.0
    %3245 = vmatpush1.msra.mxu0 0.0
    %3246 = vmatprep.subr.mxu0 0.0
    %3247 = vmatpush1.msra.mxu0 0.0
    %3248 = vmatprep.subr.mxu0 0.0
    %3249 = vmatpush1.msra.mxu0 0.0
    %3250 = vmatprep.subr.mxu0 0.0
    %3251 = vmatpush1.msra.mxu0 0.0
    %3252 = vmatprep.subr.mxu0 0.0
    %3253 = vmatpush1.msra.mxu0 0.0
    %3254 = vmatprep.subr.mxu0 0.0
    %3255 = vmatpush1.msra.mxu0 0.0
    %3256 = vmatprep.subr.mxu0 0.0
    %3257 = vmatpush1.msra.mxu0 0.0
    %3258 = vmatprep.subr.mxu0 0.0
    %3259 = vmatpush1.msra.mxu0 0.0
    %3260 = vmatprep.subr.mxu0 0.0
    %3261 = vmatpush1.msra.mxu0 0.0
    %3262 = vmatprep.subr.mxu0 0.0
    %3263 = vmatpush1.msra.mxu0 0.0
    %3264 = vmatprep.subr.mxu0 0.0
    %3265 = vmatpush1.msra.mxu0 0.0
    %3266 = vmatprep.subr.mxu0 0.0
    %3267 = vmatpush1.msra.mxu0 0.0
    %3268 = vmatprep.subr.mxu0 0.0
    %3269 = vmatpush1.msra.mxu0 0.0
    %3270 = vmatprep.subr.mxu0 0.0
    %3271 = vmatpush1.msra.mxu0 0.0
    %3272 = vmatprep.subr.mxu0 0.0
    %3273 = vmatpush1.msra.mxu0 0.0
    %3274 = vmatprep.subr.mxu0 0.0
    %3275 = vmatpush1.msra.mxu0 0.0
    %3276 = vmatprep.subr.mxu0 0.0
    %3277 = vmatpush1.msra.mxu0 0.0
    %3278 = vmatprep.subr.mxu0 0.0
    %3279 = vmatpush1.msra.mxu0 0.0
    %3280 = vmatprep.subr.mxu0 0.0
    %3281 = vmatpush1.msra.mxu0 0.0
    %3282 = vmatprep.mubr.f32.mxu0 0.0
    %3283 = vmatmul.mubr.f32.gmra.mrb[0].mxu0 %v3216
    %v3284 = vpop.f32.mrb[0].mxu0
    %v3285 = vadd.f32 0.0, %v3284
    %v3286 = vpop.f32.mrb[0].mxu0
    %3287 = vdwg.mxu0
    %v3289 = vrot.slane %v3285, 6
    %v3291 = vadd.f32 %v3194, %v3289
    %v3292 = vmul.f32 %v3291, 0.5
    %v3293 = vtanh.pop %v3292
    %v3294 = vadd.f32 %v3293, 1.0
    %v3295 = vmul.f32 %v3294, 0.5
    %v3296 = vtanh.pop %v3291
    %v3298 = vrot.slane %v3206, 6
    %3299 = vrot.lane.b32.xlu0 %v3298, 32
    %v3300 = vpop.permute.xlu0 %3299
    %v3302 = vmul.f32 %v3295, %v3300
    %3304 = vrot.lane.b32.xlu0 %v3296, 64
    %v3305 = vpop.permute.xlu0 %3304
    %v3307 = vmul.f32 %v3295, %v3305
    %3309 = vrot.lane.b32.xlu0 %v3307, 32
    %v3310 = vpop.permute.xlu0 %3309
    %v3312 = vadd.f32 %v3302, %v3310
    %v3313 = vtanh.pop %v3312
    %3315 = vrot.lane.b32.xlu0 %v3313, 64
    %v3316 = vpop.permute.xlu0 %3315
    %v3318 = vmul.f32 %v3295, %v3316
    %v3320 = vrot.slane %v3318, 2
    %3321 = vrot.lane.b32.xlu0 %v3320, 32
    %v3322 = vpop.permute.xlu0 %3321
    %v3323 = vsel %vm2790, %v3322, 0
    %3325 = vmatprep.subr.mxu0 0.0
    %3326 = vmatpush1.msra.mxu0 %v3108
    %3327 = vmatprep.subr.mxu0 0.0
    %3328 = vmatpush1.msra.mxu0 %v3109
    %3329 = vmatprep.subr.mxu0 0.0
    %3330 = vmatpush1.msra.mxu0 %v3110
    %3331 = vmatprep.subr.mxu0 0.0
    %3332 = vmatpush1.msra.mxu0 %v3111
    %3333 = vmatprep.subr.mxu0 0.0
    %3334 = vmatpush1.msra.mxu0 0.0
    %3335 = vmatprep.subr.mxu0 0.0
    %3336 = vmatpush1.msra.mxu0 0.0
    %3337 = vmatprep.subr.mxu0 0.0
    %3338 = vmatpush1.msra.mxu0 0.0
    %3339 = vmatprep.subr.mxu0 0.0
    %3340 = vmatpush1.msra.mxu0 0.0
    %3341 = vmatprep.subr.mxu0 0.0
    %3342 = vmatpush1.msra.mxu0 0.0
    %3343 = vmatprep.subr.mxu0 0.0
    %3344 = vmatpush1.msra.mxu0 0.0
    %3345 = vmatprep.subr.mxu0 0.0
    %3346 = vmatpush1.msra.mxu0 0.0
    %3347 = vmatprep.subr.mxu0 0.0
    %3348 = vmatpush1.msra.mxu0 0.0
    %3349 = vmatprep.subr.mxu0 0.0
    %3350 = vmatpush1.msra.mxu0 0.0
    %3351 = vmatprep.subr.mxu0 0.0
    %3352 = vmatpush1.msra.mxu0 0.0
    %3353 = vmatprep.subr.mxu0 0.0
    %3354 = vmatpush1.msra.mxu0 0.0
    %3355 = vmatprep.subr.mxu0 0.0
    %3356 = vmatpush1.msra.mxu0 0.0
    %3357 = vmatprep.subr.mxu0 0.0
    %3358 = vmatpush1.msra.mxu0 0.0
    %3359 = vmatprep.subr.mxu0 0.0
    %3360 = vmatpush1.msra.mxu0 0.0
    %3361 = vmatprep.subr.mxu0 0.0
    %3362 = vmatpush1.msra.mxu0 0.0
    %3363 = vmatprep.subr.mxu0 0.0
    %3364 = vmatpush1.msra.mxu0 0.0
    %3365 = vmatprep.subr.mxu0 0.0
    %3366 = vmatpush1.msra.mxu0 0.0
    %3367 = vmatprep.subr.mxu0 0.0
    %3368 = vmatpush1.msra.mxu0 0.0
    %3369 = vmatprep.subr.mxu0 0.0
    %3370 = vmatpush1.msra.mxu0 0.0
    %3371 = vmatprep.subr.mxu0 0.0
    %3372 = vmatpush1.msra.mxu0 0.0
    %3373 = vmatprep.subr.mxu0 0.0
    %3374 = vmatpush1.msra.mxu0 0.0
    %3375 = vmatprep.subr.mxu0 0.0
    %3376 = vmatpush1.msra.mxu0 0.0
    %3377 = vmatprep.subr.mxu0 0.0
    %3378 = vmatpush1.msra.mxu0 0.0
    %3379 = vmatprep.subr.mxu0 0.0
    %3380 = vmatpush1.msra.mxu0 0.0
    %3381 = vmatprep.subr.mxu0 0.0
    %3382 = vmatpush1.msra.mxu0 0.0
    %3383 = vmatprep.subr.mxu0 0.0
    %3384 = vmatpush1.msra.mxu0 0.0
    %3385 = vmatprep.subr.mxu0 0.0
    %3386 = vmatpush1.msra.mxu0 0.0
    %3387 = vmatprep.subr.mxu0 0.0
    %3388 = vmatpush1.msra.mxu0 0.0
    %3389 = vmatprep.mubr.f32.mxu0 0.0
    %3390 = vmatmul.mubr.f32.gmra.mrb[0].mxu0 %v3323
    %v3391 = vpop.f32.mrb[0].mxu0
    %v3392 = vadd.f32 0.0, %v3391
    %v3393 = vpop.f32.mrb[0].mxu0
    %3394 = vdwg.mxu0
    %v3396 = vrot.slane %v3392, 4
    %v3398 = vadd.f32 %v3194, %v3396
    %v3399 = vmul.f32 %v3398, 0.5
    %v3400 = vtanh.pop %v3399
    %v3401 = vadd.f32 %v3400, 1.0
    %v3402 = vmul.f32 %v3401, 0.5
    %v3403 = vtanh.pop %v3398
    %v3405 = vrot.slane %v3312, 6
    %v3407 = vmul.f32 %v3402, %v3405
    %3409 = vrot.lane.b32.xlu0 %v3403, 64
    %v3410 = vpop.permute.xlu0 %3409
    %v3412 = vmul.f32 %v3402, %v3410
    %3414 = vrot.lane.b32.xlu0 %v3412, 32
    %v3415 = vpop.permute.xlu0 %3414
    %v3417 = vadd.f32 %v3407, %v3415
    %v3418 = vtanh.pop %v3417
    %3420 = vrot.lane.b32.xlu0 %v3418, 64
    %v3421 = vpop.permute.xlu0 %3420
    %v3423 = vmul.f32 %v3402, %v3421
    %v3425 = vrot.slane %v3423, 4
    %3426 = vrot.lane.b32.xlu0 %v3425, 32
    %v3427 = vpop.permute.xlu0 %3426
    %v3428 = vsel %vm2790, %v3427, 0
    %3430 = vmatprep.subr.mxu0 0.0
    %3431 = vmatpush1.msra.mxu0 %v3108
    %3432 = vmatprep.subr.mxu0 0.0
    %3433 = vmatpush1.msra.mxu0 %v3109
    %3434 = vmatprep.subr.mxu0 0.0
    %3435 = vmatpush1.msra.mxu0 %v3110
    %3436 = vmatprep.subr.mxu0 0.0
    %3437 = vmatpush1.msra.mxu0 %v3111
    %3438 = vmatprep.subr.mxu0 0.0
    %3439 = vmatpush1.msra.mxu0 0.0
    %3440 = vmatprep.subr.mxu0 0.0
    %3441 = vmatpush1.msra.mxu0 0.0
    %3442 = vmatprep.subr.mxu0 0.0
    %3443 = vmatpush1.msra.mxu0 0.0
    %3444 = vmatprep.subr.mxu0 0.0
    %3445 = vmatpush1.msra.mxu0 0.0
    %3446 = vmatprep.subr.mxu0 0.0
    %3447 = vmatpush1.msra.mxu0 0.0
    %3448 = vmatprep.subr.mxu0 0.0
    %3449 = vmatpush1.msra.mxu0 0.0
    %3450 = vmatprep.subr.mxu0 0.0
    %3451 = vmatpush1.msra.mxu0 0.0
    %3452 = vmatprep.subr.mxu0 0.0
    %3453 = vmatpush1.msra.mxu0 0.0
    %3454 = vmatprep.subr.mxu0 0.0
    %3455 = vmatpush1.msra.mxu0 0.0
    %3456 = vmatprep.subr.mxu0 0.0
    %3457 = vmatpush1.msra.mxu0 0.0
    %3458 = vmatprep.subr.mxu0 0.0
    %3459 = vmatpush1.msra.mxu0 0.0
    %3460 = vmatprep.subr.mxu0 0.0
    %3461 = vmatpush1.msra.mxu0 0.0
    %3462 = vmatprep.subr.mxu0 0.0
    %3463 = vmatpush1.msra.mxu0 0.0
    %3464 = vmatprep.subr.mxu0 0.0
    %3465 = vmatpush1.msra.mxu0 0.0
    %3466 = vmatprep.subr.mxu0 0.0
    %3467 = vmatpush1.msra.mxu0 0.0
    %3468 = vmatprep.subr.mxu0 0.0
    %3469 = vmatpush1.msra.mxu0 0.0
    %3470 = vmatprep.subr.mxu0 0.0
    %3471 = vmatpush1.msra.mxu0 0.0
    %3472 = vmatprep.subr.mxu0 0.0
    %3473 = vmatpush1.msra.mxu0 0.0
    %3474 = vmatprep.subr.mxu0 0.0
    %3475 = vmatpush1.msra.mxu0 0.0
    %3476 = vmatprep.subr.mxu0 0.0
    %3477 = vmatpush1.msra.mxu0 0.0
    %3478 = vmatprep.subr.mxu0 0.0
    %3479 = vmatpush1.msra.mxu0 0.0
    %3480 = vmatprep.subr.mxu0 0.0
    %3481 = vmatpush1.msra.mxu0 0.0
    %3482 = vmatprep.subr.mxu0 0.0
    %3483 = vmatpush1.msra.mxu0 0.0
    %3484 = vmatprep.subr.mxu0 0.0
    %3485 = vmatpush1.msra.mxu0 0.0
    %3486 = vmatprep.subr.mxu0 0.0
    %3487 = vmatpush1.msra.mxu0 0.0
    %3488 = vmatprep.subr.mxu0 0.0
    %3489 = vmatpush1.msra.mxu0 0.0
    %3490 = vmatprep.subr.mxu0 0.0
    %3491 = vmatpush1.msra.mxu0 0.0
    %3492 = vmatprep.subr.mxu0 0.0
    %3493 = vmatpush1.msra.mxu0 0.0
    %3494 = vmatprep.mubr.f32.mxu0 0.0
    %3495 = vmatmul.mubr.f32.gmra.mrb[0].mxu0 %v3428
    %v3496 = vpop.f32.mrb[0].mxu0
    %v3497 = vadd.f32 0.0, %v3496
    %v3498 = vpop.f32.mrb[0].mxu0
    %3499 = vdwg.mxu0
    %v3501 = vrot.slane %v3497, 2
    %v3503 = vadd.f32 %v3194, %v3501
    %v3504 = vmul.f32 %v3503, 0.5
    %v3505 = vtanh.pop %v3504
    %v3506 = vadd.f32 %v3505, 1.0
    %v3507 = vmul.f32 %v3506, 0.5
    %v3508 = vtanh.pop %v3503
    %v3510 = vrot.slane %v3417, 6
    %v3512 = vmul.f32 %v3507, %v3510
    %3514 = vrot.lane.b32.xlu0 %v3508, 64
    %v3515 = vpop.permute.xlu0 %3514
    %v3517 = vmul.f32 %v3507, %v3515
    %3519 = vrot.lane.b32.xlu0 %v3517, 32
    %v3520 = vpop.permute.xlu0 %3519
    %v3522 = vadd.f32 %v3512, %v3520
    %v3523 = vtanh.pop %v3522
    %3525 = vrot.lane.b32.xlu0 %v3523, 64
    %v3526 = vpop.permute.xlu0 %3525
    %v3528 = vmul.f32 %v3507, %v3526
    %v3529 = vld [vmem:[%s11] sm:$0xff]
    %v3530 = vld [vmem:[%s11 + $0x8] sm:$0xff]
    %v3531 = vld [vmem:[%s11 + $0x10] sm:$0xff]
    %v3532 = vld [vmem:[%s11 + $0x18] sm:$0xff]
    %v3533 = vld [vmem:[#allocation16] sm:$0x1]
    %v3535 = vlaneseq
    %v3536 = vshrl.u32 %v3535, 7
    %v3537 = vsub.s32 0, %v3536
    %v3538 = vrot.slane %v3533, %v3537
    %3540 = vmatprep.subr.mxu0 0.0
    %3541 = vmatpush1.msra.mxu0 %v3529
    %3542 = vmatprep.subr.mxu0 0.0
    %3543 = vmatpush1.msra.mxu0 %v3530
    %3544 = vmatprep.subr.mxu0 0.0
    %3545 = vmatpush1.msra.mxu0 %v3531
    %3546 = vmatprep.subr.mxu0 0.0
    %3547 = vmatpush1.msra.mxu0 %v3532
    %3548 = vmatprep.subr.mxu0 0.0
    %3549 = vmatpush1.msra.mxu0 0.0
    %3550 = vmatprep.subr.mxu0 0.0
    %3551 = vmatpush1.msra.mxu0 0.0
    %3552 = vmatprep.subr.mxu0 0.0
    %3553 = vmatpush1.msra.mxu0 0.0
    %3554 = vmatprep.subr.mxu0 0.0
    %3555 = vmatpush1.msra.mxu0 0.0
    %3556 = vmatprep.subr.mxu0 0.0
    %3557 = vmatpush1.msra.mxu0 0.0
    %3558 = vmatprep.subr.mxu0 0.0
    %3559 = vmatpush1.msra.mxu0 0.0
    %3560 = vmatprep.subr.mxu0 0.0
    %3561 = vmatpush1.msra.mxu0 0.0
    %3562 = vmatprep.subr.mxu0 0.0
    %3563 = vmatpush1.msra.mxu0 0.0
    %3564 = vmatprep.subr.mxu0 0.0
    %3565 = vmatpush1.msra.mxu0 0.0
    %3566 = vmatprep.subr.mxu0 0.0
    %3567 = vmatpush1.msra.mxu0 0.0
    %3568 = vmatprep.subr.mxu0 0.0
    %3569 = vmatpush1.msra.mxu0 0.0
    %3570 = vmatprep.subr.mxu0 0.0
    %3571 = vmatpush1.msra.mxu0 0.0
    %3572 = vmatprep.subr.mxu0 0.0
    %3573 = vmatpush1.msra.mxu0 0.0
    %3574 = vmatprep.subr.mxu0 0.0
    %3575 = vmatpush1.msra.mxu0 0.0
    %3576 = vmatprep.subr.mxu0 0.0
    %3577 = vmatpush1.msra.mxu0 0.0
    %3578 = vmatprep.subr.mxu0 0.0
    %3579 = vmatpush1.msra.mxu0 0.0
    %3580 = vmatprep.subr.mxu0 0.0
    %3581 = vmatpush1.msra.mxu0 0.0
    %3582 = vmatprep.subr.mxu0 0.0
    %3583 = vmatpush1.msra.mxu0 0.0
    %3584 = vmatprep.subr.mxu0 0.0
    %3585 = vmatpush1.msra.mxu0 0.0
    %3586 = vmatprep.subr.mxu0 0.0
    %3587 = vmatpush1.msra.mxu0 0.0
    %3588 = vmatprep.subr.mxu0 0.0
    %3589 = vmatpush1.msra.mxu0 0.0
    %3590 = vmatprep.subr.mxu0 0.0
    %3591 = vmatpush1.msra.mxu0 0.0
    %3592 = vmatprep.subr.mxu0 0.0
    %3593 = vmatpush1.msra.mxu0 0.0
    %3594 = vmatprep.subr.mxu0 0.0
    %3595 = vmatpush1.msra.mxu0 0.0
    %3596 = vmatprep.subr.mxu0 0.0
    %3597 = vmatpush1.msra.mxu0 0.0
    %3598 = vmatprep.subr.mxu0 0.0
    %3599 = vmatpush1.msra.mxu0 0.0
    %3600 = vmatprep.subr.mxu0 0.0
    %3601 = vmatpush1.msra.mxu0 0.0
    %3602 = vmatprep.subr.mxu0 0.0
    %3603 = vmatpush1.msra.mxu0 0.0
    %3604 = vmatprep.mubr.f32.mxu0 0.0
    %3605 = vmatmul.mubr.f32.gmra.mrb[0].mxu0 %v3216
    %v3606 = vpop.f32.mrb[0].mxu0
    %v3607 = vadd.f32 %v3538, %v3606
    %v3608 = vpop.f32.mrb[0].mxu0
    %3609 = vdwg.mxu0
    %3610 = vmatprep.subr.mxu0 0.0
    %3611 = vmatpush1.msra.mxu0 %v3529
    %3612 = vmatprep.subr.mxu0 0.0
    %3613 = vmatpush1.msra.mxu0 %v3530
    %3614 = vmatprep.subr.mxu0 0.0
    %3615 = vmatpush1.msra.mxu0 %v3531
    %3616 = vmatprep.subr.mxu0 0.0
    %3617 = vmatpush1.msra.mxu0 %v3532
    %3618 = vmatprep.subr.mxu0 0.0
    %3619 = vmatpush1.msra.mxu0 0.0
    %3620 = vmatprep.subr.mxu0 0.0
    %3621 = vmatpush1.msra.mxu0 0.0
    %3622 = vmatprep.subr.mxu0 0.0
    %3623 = vmatpush1.msra.mxu0 0.0
    %3624 = vmatprep.subr.mxu0 0.0
    %3625 = vmatpush1.msra.mxu0 0.0
    %3626 = vmatprep.subr.mxu0 0.0
    %3627 = vmatpush1.msra.mxu0 0.0
    %3628 = vmatprep.subr.mxu0 0.0
    %3629 = vmatpush1.msra.mxu0 0.0
    %3630 = vmatprep.subr.mxu0 0.0
    %3631 = vmatpush1.msra.mxu0 0.0
    %3632 = vmatprep.subr.mxu0 0.0
    %3633 = vmatpush1.msra.mxu0 0.0
    %3634 = vmatprep.subr.mxu0 0.0
    %3635 = vmatpush1.msra.mxu0 0.0
    %3636 = vmatprep.subr.mxu0 0.0
    %3637 = vmatpush1.msra.mxu0 0.0
    %3638 = vmatprep.subr.mxu0 0.0
    %3639 = vmatpush1.msra.mxu0 0.0
    %3640 = vmatprep.subr.mxu0 0.0
    %3641 = vmatpush1.msra.mxu0 0.0
    %3642 = vmatprep.subr.mxu0 0.0
    %3643 = vmatpush1.msra.mxu0 0.0
    %3644 = vmatprep.subr.mxu0 0.0
    %3645 = vmatpush1.msra.mxu0 0.0
    %3646 = vmatprep.subr.mxu0 0.0
    %3647 = vmatpush1.msra.mxu0 0.0
    %3648 = vmatprep.subr.mxu0 0.0
    %3649 = vmatpush1.msra.mxu0 0.0
    %3650 = vmatprep.subr.mxu0 0.0
    %3651 = vmatpush1.msra.mxu0 0.0
    %3652 = vmatprep.subr.mxu0 0.0
    %3653 = vmatpush1.msra.mxu0 0.0
    %3654 = vmatprep.subr.mxu0 0.0
    %3655 = vmatpush1.msra.mxu0 0.0
    %3656 = vmatprep.subr.mxu0 0.0
    %3657 = vmatpush1.msra.mxu0 0.0
    %3658 = vmatprep.subr.mxu0 0.0
    %3659 = vmatpush1.msra.mxu0 0.0
    %3660 = vmatprep.subr.mxu0 0.0
    %3661 = vmatpush1.msra.mxu0 0.0
    %3662 = vmatprep.subr.mxu0 0.0
    %3663 = vmatpush1.msra.mxu0 0.0
    %3664 = vmatprep.subr.mxu0 0.0
    %3665 = vmatpush1.msra.mxu0 0.0
    %3666 = vmatprep.subr.mxu0 0.0
    %3667 = vmatpush1.msra.mxu0 0.0
    %3668 = vmatprep.subr.mxu0 0.0
    %3669 = vmatpush1.msra.mxu0 0.0
    %3670 = vmatprep.subr.mxu0 0.0
    %3671 = vmatpush1.msra.mxu0 0.0
    %3672 = vmatprep.subr.mxu0 0.0
    %3673 = vmatpush1.msra.mxu0 0.0
    %3674 = vmatprep.mubr.f32.mxu0 0.0
    %3675 = vmatmul.mubr.f32.gmra.mrb[0].mxu0 %v3323
    %v3676 = vpop.f32.mrb[0].mxu0
    %v3677 = vadd.f32 %v3538, %v3676
    %v3678 = vpop.f32.mrb[0].mxu0
    %3679 = vdwg.mxu0
    %3680 = vmatprep.subr.mxu0 0.0
    %3681 = vmatpush1.msra.mxu0 %v3529
    %3682 = vmatprep.subr.mxu0 0.0
    %3683 = vmatpush1.msra.mxu0 %v3530
    %3684 = vmatprep.subr.mxu0 0.0
    %3685 = vmatpush1.msra.mxu0 %v3531
    %3686 = vmatprep.subr.mxu0 0.0
    %3687 = vmatpush1.msra.mxu0 %v3532
    %3688 = vmatprep.subr.mxu0 0.0
    %3689 = vmatpush1.msra.mxu0 0.0
    %3690 = vmatprep.subr.mxu0 0.0
    %3691 = vmatpush1.msra.mxu0 0.0
    %3692 = vmatprep.subr.mxu0 0.0
    %3693 = vmatpush1.msra.mxu0 0.0
    %3694 = vmatprep.subr.mxu0 0.0
    %3695 = vmatpush1.msra.mxu0 0.0
    %3696 = vmatprep.subr.mxu0 0.0
    %3697 = vmatpush1.msra.mxu0 0.0
    %3698 = vmatprep.subr.mxu0 0.0
    %3699 = vmatpush1.msra.mxu0 0.0
    %3700 = vmatprep.subr.mxu0 0.0
    %3701 = vmatpush1.msra.mxu0 0.0
    %3702 = vmatprep.subr.mxu0 0.0
    %3703 = vmatpush1.msra.mxu0 0.0
    %3704 = vmatprep.subr.mxu0 0.0
    %3705 = vmatpush1.msra.mxu0 0.0
    %3706 = vmatprep.subr.mxu0 0.0
    %3707 = vmatpush1.msra.mxu0 0.0
    %3708 = vmatprep.subr.mxu0 0.0
    %3709 = vmatpush1.msra.mxu0 0.0
    %3710 = vmatprep.subr.mxu0 0.0
    %3711 = vmatpush1.msra.mxu0 0.0
    %3712 = vmatprep.subr.mxu0 0.0
    %3713 = vmatpush1.msra.mxu0 0.0
    %3714 = vmatprep.subr.mxu0 0.0
    %3715 = vmatpush1.msra.mxu0 0.0
    %3716 = vmatprep.subr.mxu0 0.0
    %3717 = vmatpush1.msra.mxu0 0.0
    %3718 = vmatprep.subr.mxu0 0.0
    %3719 = vmatpush1.msra.mxu0 0.0
    %3720 = vmatprep.subr.mxu0 0.0
    %3721 = vmatpush1.msra.mxu0 0.0
    %3722 = vmatprep.subr.mxu0 0.0
    %3723 = vmatpush1.msra.mxu0 0.0
    %3724 = vmatprep.subr.mxu0 0.0
    %3725 = vmatpush1.msra.mxu0 0.0
    %3726 = vmatprep.subr.mxu0 0.0
    %3727 = vmatpush1.msra.mxu0 0.0
    %3728 = vmatprep.subr.mxu0 0.0
    %3729 = vmatpush1.msra.mxu0 0.0
    %3730 = vmatprep.subr.mxu0 0.0
    %3731 = vmatpush1.msra.mxu0 0.0
    %3732 = vmatprep.subr.mxu0 0.0
    %3733 = vmatpush1.msra.mxu0 0.0
    %3734 = vmatprep.subr.mxu0 0.0
    %3735 = vmatpush1.msra.mxu0 0.0
    %3736 = vmatprep.subr.mxu0 0.0
    %3737 = vmatpush1.msra.mxu0 0.0
    %3738 = vmatprep.subr.mxu0 0.0
    %3739 = vmatpush1.msra.mxu0 0.0
    %3740 = vmatprep.subr.mxu0 0.0
    %3741 = vmatpush1.msra.mxu0 0.0
    %3742 = vmatprep.subr.mxu0 0.0
    %3743 = vmatpush1.msra.mxu0 0.0
    %3744 = vmatprep.mubr.f32.mxu0 0.0
    %3745 = vmatmul.mubr.f32.gmra.mrb[0].mxu0 %v3428
    %v3746 = vpop.f32.mrb[0].mxu0
    %v3747 = vadd.f32 %v3538, %v3746
    %v3748 = vpop.f32.mrb[0].mxu0
    %3749 = vdwg.mxu0
    %v3751 = vrot.slane %v3528, 6
    %3752 = vrot.lane.b32.xlu0 %v3751, 32
    %v3753 = vpop.permute.xlu0 %3752
    %v3754 = vsel %vm2790, %v3753, 0
    %3756 = vmatprep.subr.mxu0 0.0
    %3757 = vmatpush1.msra.mxu0 %v3529
    %3758 = vmatprep.subr.mxu0 0.0
    %3759 = vmatpush1.msra.mxu0 %v3530
    %3760 = vmatprep.subr.mxu0 0.0
    %3761 = vmatpush1.msra.mxu0 %v3531
    %3762 = vmatprep.subr.mxu0 0.0
    %3763 = vmatpush1.msra.mxu0 %v3532
    %3764 = vmatprep.subr.mxu0 0.0
    %3765 = vmatpush1.msra.mxu0 0.0
    %3766 = vmatprep.subr.mxu0 0.0
    %3767 = vmatpush1.msra.mxu0 0.0
    %3768 = vmatprep.subr.mxu0 0.0
    %3769 = vmatpush1.msra.mxu0 0.0
    %3770 = vmatprep.subr.mxu0 0.0
    %3771 = vmatpush1.msra.mxu0 0.0
    %3772 = vmatprep.subr.mxu0 0.0
    %3773 = vmatpush1.msra.mxu0 0.0
    %3774 = vmatprep.subr.mxu0 0.0
    %3775 = vmatpush1.msra.mxu0 0.0
    %3776 = vmatprep.subr.mxu0 0.0
    %3777 = vmatpush1.msra.mxu0 0.0
    %3778 = vmatprep.subr.mxu0 0.0
    %3779 = vmatpush1.msra.mxu0 0.0
    %3780 = vmatprep.subr.mxu0 0.0
    %3781 = vmatpush1.msra.mxu0 0.0
    %3782 = vmatprep.subr.mxu0 0.0
    %3783 = vmatpush1.msra.mxu0 0.0
    %3784 = vmatprep.subr.mxu0 0.0
    %3785 = vmatpush1.msra.mxu0 0.0
    %3786 = vmatprep.subr.mxu0 0.0
    %3787 = vmatpush1.msra.mxu0 0.0
    %3788 = vmatprep.subr.mxu0 0.0
    %3789 = vmatpush1.msra.mxu0 0.0
    %3790 = vmatprep.subr.mxu0 0.0
    %3791 = vmatpush1.msra.mxu0 0.0
    %3792 = vmatprep.subr.mxu0 0.0
    %3793 = vmatpush1.msra.mxu0 0.0
    %3794 = vmatprep.subr.mxu0 0.0
    %3795 = vmatpush1.msra.mxu0 0.0
    %3796 = vmatprep.subr.mxu0 0.0
    %3797 = vmatpush1.msra.mxu0 0.0
    %3798 = vmatprep.subr.mxu0 0.0
    %3799 = vmatpush1.msra.mxu0 0.0
    %3800 = vmatprep.subr.mxu0 0.0
    %3801 = vmatpush1.msra.mxu0 0.0
    %3802 = vmatprep.subr.mxu0 0.0
    %3803 = vmatpush1.msra.mxu0 0.0
    %3804 = vmatprep.subr.mxu0 0.0
    %3805 = vmatpush1.msra.mxu0 0.0
    %3806 = vmatprep.subr.mxu0 0.0
    %3807 = vmatpush1.msra.mxu0 0.0
    %3808 = vmatprep.subr.mxu0 0.0
    %3809 = vmatpush1.msra.mxu0 0.0
    %3810 = vmatprep.subr.mxu0 0.0
    %3811 = vmatpush1.msra.mxu0 0.0
    %3812 = vmatprep.subr.mxu0 0.0
    %3813 = vmatpush1.msra.mxu0 0.0
    %3814 = vmatprep.subr.mxu0 0.0
    %3815 = vmatpush1.msra.mxu0 0.0
    %3816 = vmatprep.subr.mxu0 0.0
    %3817 = vmatpush1.msra.mxu0 0.0
    %3818 = vmatprep.subr.mxu0 0.0
    %3819 = vmatpush1.msra.mxu0 0.0
    %3820 = vmatprep.mubr.f32.mxu0 0.0
    %3821 = vmatmul.mubr.f32.gmra.mrb[0].mxu0 %v3754
    %v3822 = vpop.f32.mrb[0].mxu0
    %v3823 = vadd.f32 %v3538, %v3822
    %v3824 = vpop.f32.mrb[0].mxu0
    %3825 = vdwg.mxu0
    %3827 = vrot.lane.b32.xlu0 %v3677, 8
    %v3828 = vpop.permute.xlu0 %3827
    %3831 = vrot.lane.b32.xlu0 %v3747, 16
    %v3832 = vpop.permute.xlu0 %3831
    %3835 = vrot.lane.b32.xlu0 %v3823, 24
    %v3836 = vpop.permute.xlu0 %3835
    %v3838 = vsel %vm2620, %v3607, %v3828
    %v3839 = vsel %vm2697, %v3838, %v3832
    %vm3840 = vcmask 195584
    %v3841 = vsel %vm3840, %v3839, %v3836
    %vm3842 = vcmask 254976
    %3843 = vst.msk [vmem:[%s13] sm:$0x3] %vm3842, %v3841
    // Predicated region
    $region90: #{cnn_lstm_forward.1} parent=1 // pred_check
      _
    $region91: #{cnn_lstm_forward.1} parent=1 // pred_check_branch
      %3845 = sbr.rel (0) target = $region93
    $region92: #{cnn_lstm_forward.1} parent=1 // pred_region
      _
    $region93: #{cnn_lstm_forward.1} parent=1 // pred_fallthru
      _
    // Predicated region
    $region94: #{cnn_lstm_forward.1} parent=1 // pred_check
      _
    $region95: #{cnn_lstm_forward.1} parent=1 // pred_check_branch
      %3847 = sbr.rel (0) target = $region97
    $region96: #{cnn_lstm_forward.1} parent=1 // pred_region
      _
    $region97: #{cnn_lstm_forward.1} parent=1 // pred_fallthru
      _
    %3848 = vsyncpa [#allocation3], 1
    %3849 = vsyncpa [#allocation12], 1
    %3850 = vsyncpa [#allocation15], 1
    %3851 = vsyncpa [#allocation4], 1
    %3852 = vsyncpa [#allocation6], 1
    %3853 = vsyncpa [#allocation9], 1

</llo_original>
